<compile_context>
chip_gen: v6e
topology: v6e:2x2x1
jax: 0.10.0
libtpu: 0.0.40
codegen_flags: <defaults>
</compile_context>

<pallas_src>
import functools
import math

import jax
import jax.numpy as jnp
from jax.experimental import pallas as pl
from jax.experimental.pallas import tpu as pltpu


# Explicit scoped-VMEM limit with headroom under v7x's 64 MiB physical (plenty on v5e/v6e).
_VMEM_LIMIT = 48 * 1024 * 1024


# ----------------------------------------------------------------------------- helpers
def _tile(dim, pref, align):
    """Largest `align`-aligned divisor of `dim` that is <= pref (dim itself when dim <= pref).

    Never silently falls back to a giant un-tiled block at production sizes: if no aligned
    divisor exists, raise so the caller pads the input instead.
    """
    if dim <= pref:
        return dim
    t = (pref // align) * align
    while t >= align:
        if dim % t == 0:
            return t
        t -= align
    raise ValueError(
        f"dim={dim} has no {align}-aligned tile <= {pref}; pad the input to a tileable size")


def _single_buffered(block_shape, index_map):
    """BlockSpec for a grid-invariant / reduction-invariant side input: 1 VMEM buffer."""
    return pl.BlockSpec(block_shape, index_map, pipeline_mode=pl.Buffered(1))


# ----------------------------------------------------------------------------- kernels
def emb_ln_qkv_kernel(x_ref, g_ref, b_ref, wq_ref, wk_ref, wv_ref,
                      bq_ref, bk_ref, bv_ref,
                      ln_ref, q_ref, k_ref, v_ref, *, eps):
    """Fused: LayerNorm(x) -> emit normalized x AND its Q/K/V projections.

    K (= hidden) is a single full tile so the LN reduction is valid in the prologue.
    sm_scale is already folded into wq/bq by the caller.
    """
    x = x_ref[...].astype(jnp.float32)
    mu = jnp.mean(x, axis=-1, keepdims=True)
    var = jnp.mean(jnp.square(x - mu), axis=-1, keepdims=True)
    xn = (x - mu) * jax.lax.rsqrt(var + eps)
    xn = xn * g_ref[...].astype(jnp.float32) + b_ref[...].astype(jnp.float32)
    xnb = xn.astype(ln_ref.dtype)
    ln_ref[...] = xnb
    q_ref[...] = (jnp.dot(xnb, wq_ref[...], preferred_element_type=jnp.float32)
                  + bq_ref[...].astype(jnp.float32)).astype(q_ref.dtype)
    k_ref[...] = (jnp.dot(xnb, wk_ref[...], preferred_element_type=jnp.float32)
                  + bk_ref[...].astype(jnp.float32)).astype(k_ref.dtype)
    v_ref[...] = (jnp.dot(xnb, wv_ref[...], preferred_element_type=jnp.float32)
                  + bv_ref[...].astype(jnp.float32)).astype(v_ref.dtype)


def matmul_bias_act_kernel(x_ref, w_ref, b_ref, o_ref, acc_ref, *, activation):
    k = pl.program_id(2)

    @pl.when(k == 0)
    def _init():
        acc_ref[...] = jnp.zeros_like(acc_ref)

    acc_ref[...] += jnp.dot(x_ref[...], w_ref[...],
                            preferred_element_type=jnp.float32)

    @pl.when(k == pl.num_programs(2) - 1)
    def _finalize():
        out = acc_ref[...] + b_ref[...].astype(jnp.float32)
        if activation == "gelu":
            # TODO(synk): tanh-approximate GELU; switch to exact erf GELU if the external
            #             pretrained BERT uses it.
            out = jax.nn.gelu(out, approximate=True)
        elif activation == "relu":
            out = jnp.maximum(out, 0.0)
        o_ref[...] = out.astype(o_ref.dtype)


def matmul_res_ln_kernel(x_ref, w_ref, b_ref, res_ref, g_ref, beta_ref,
                         o_ref, acc_ref, *, eps):
    # 2-D grid: (row tiles, K tiles); N (= hidden) is a single full tile so the
    # LayerNorm reduction over the feature axis is valid inside the epilogue.
    k = pl.program_id(1)

    @pl.when(k == 0)
    def _init():
        acc_ref[...] = jnp.zeros_like(acc_ref)

    acc_ref[...] += jnp.dot(x_ref[...], w_ref[...],
                            preferred_element_type=jnp.float32)

    @pl.when(k == pl.num_programs(1) - 1)
    def _finalize():
        h = (acc_ref[...] + b_ref[...].astype(jnp.float32)
             + res_ref[...].astype(jnp.float32))
        mu = jnp.mean(h, axis=-1, keepdims=True)
        var = jnp.mean(jnp.square(h - mu), axis=-1, keepdims=True)
        hn = (h - mu) * jax.lax.rsqrt(var + eps)
        o_ref[...] = (hn * g_ref[...].astype(jnp.float32)
                      + beta_ref[...].astype(jnp.float32)).astype(o_ref.dtype)


def flash_attn_kernel(q_ref, k_ref, v_ref, bias_ref, o_ref,
                      m_sc, l_sc, acc_sc):
    ki = pl.program_id(2)

    @pl.when(ki == 0)
    def _init():
        m_sc[...] = jnp.full_like(m_sc, -1e30)
        l_sc[...] = jnp.zeros_like(l_sc)
        acc_sc[...] = jnp.zeros_like(acc_sc)

    q = q_ref[0]                     # (tq, D) bf16, sm_scale already folded into W_q
    k = k_ref[0]                     # (tk, D) bf16
    v = v_ref[0]                     # (tk, D) bf16
    # scores in f32; additive mask bias applied in f32 BEFORE the online-softmax max update.
    # TODO(synk): rows whose keys are ALL masked produce a uniform softmax (not zeros);
    #             acceptable for the demo mask, add a guard for production masks.
    s = jax.lax.dot_general(q, k, (((1,), (1,)), ((), ())),
                            preferred_element_type=jnp.float32)
    s = s + bias_ref[0]              # bias block (1, tk) broadcasts over tq

    m_prev = m_sc[...]
    m_new = jnp.maximum(m_prev, s.max(axis=-1, keepdims=True))
    alpha = jnp.exp(m_prev - m_new)
    p = jnp.exp(s - m_new)
    l_sc[...] = alpha * l_sc[...] + p.sum(axis=-1, keepdims=True)
    acc_sc[...] = alpha * acc_sc[...] + jnp.dot(p.astype(v.dtype), v,
                                                preferred_element_type=jnp.float32)
    m_sc[...] = m_new

    @pl.when(ki == pl.num_programs(2) - 1)
    def _finalize():
        inv_l = pl.reciprocal(l_sc[...], approx=True)
        o_ref[0] = (acc_sc[...] * inv_l).astype(o_ref.dtype)


# ----------------------------------------------------------------------------- wrappers
def pallas_emb_ln_qkv(emb2d, gamma, beta, wq, wk, wv, bq, bk, bv,
                      eps=1e-12, out_dtype=jnp.bfloat16, tm_pref=256):
    M, H = emb2d.shape
    tm = _tile(M, tm_pref, 8)
    g2, b2 = gamma.reshape(1, H), beta.reshape(1, H)
    bq2, bk2, bv2 = bq.reshape(1, H), bk.reshape(1, H), bv.reshape(1, H)
    return pl.pallas_call(
        functools.partial(emb_ln_qkv_kernel, eps=eps),
        out_shape=tuple(jax.ShapeDtypeStruct((M, H), out_dtype) for _ in range(4)),
        grid_spec=pltpu.PrefetchScalarGridSpec(
            num_scalar_prefetch=0,
            grid=(M // tm,),
            in_specs=[pl.BlockSpec((tm, H), lambda i: (i, 0)),
                      _single_buffered((1, H), lambda i: (0, 0)),
                      _single_buffered((1, H), lambda i: (0, 0)),
                      _single_buffered((H, H), lambda i: (0, 0)),
                      _single_buffered((H, H), lambda i: (0, 0)),
                      _single_buffered((H, H), lambda i: (0, 0)),
                      _single_buffered((1, H), lambda i: (0, 0)),
                      _single_buffered((1, H), lambda i: (0, 0)),
                      _single_buffered((1, H), lambda i: (0, 0))],
            out_specs=[pl.BlockSpec((tm, H), lambda i: (i, 0)) for _ in range(4)],
        ),
        compiler_params=pltpu.CompilerParams(
            dimension_semantics=("parallel",), vmem_limit_bytes=_VMEM_LIMIT),
    )(emb2d, g2, b2, wq, wk, wv, bq2, bk2, bv2)


def pallas_matmul(x, w, b, activation="none", out_dtype=jnp.bfloat16,
                  tm_pref=256, tn_pref=256, tk_pref=512):
    # v7x: keep tm/tn <= 256 (64 MiB VMEM); v6e/v5e: tm can be pushed to 512 with more VMEM.
    M, K = x.shape
    _, N = w.shape
    tm = _tile(M, tm_pref, 8)
    tn = _tile(N, tn_pref, 128)
    tk = _tile(K, tk_pref, 128)
    b2 = b.reshape(1, N)
    return pl.pallas_call(
        functools.partial(matmul_bias_act_kernel, activation=activation),
        out_shape=jax.ShapeDtypeStruct((M, N), out_dtype),
        grid_spec=pltpu.PrefetchScalarGridSpec(
            num_scalar_prefetch=0,
            grid=(M // tm, N // tn, K // tk),           # K last (reduction)
            in_specs=[pl.BlockSpec((tm, tk), lambda i, j, k: (i, k)),
                      pl.BlockSpec((tk, tn), lambda i, j, k: (k, j)),
                      _single_buffered((1, tn), lambda i, j, k: (0, j))],
            out_specs=pl.BlockSpec((tm, tn), lambda i, j, k: (i, j)),
            scratch_shapes=[pltpu.VMEM((tm, tn), jnp.float32)],
        ),
        compiler_params=pltpu.CompilerParams(
            dimension_semantics=("parallel", "parallel", "arbitrary"),
            vmem_limit_bytes=_VMEM_LIMIT),
    )(x, w, b2)


def pallas_matmul_residual_ln(x, w, b, res, gamma, beta, eps=1e-12,
                              out_dtype=jnp.bfloat16, tm_pref=256, tk_pref=512):
    # N is a single full tile (needed for the LN reduction); keep tm small enough that the
    # M axis still yields >=2 parallel blocks at production M so both v7x TCs get work.
    M, K = x.shape
    _, N = w.shape
    tm = _tile(M, tm_pref, 8)
    tk = _tile(K, tk_pref, 128)
    b2 = b.reshape(1, N)
    g2 = gamma.reshape(1, N)
    be2 = beta.reshape(1, N)
    return pl.pallas_call(
        functools.partial(matmul_res_ln_kernel, eps=eps),
        out_shape=jax.ShapeDtypeStruct((M, N), out_dtype),
        grid_spec=pltpu.PrefetchScalarGridSpec(
            num_scalar_prefetch=0,
            grid=(M // tm, K // tk),                    # K last (reduction)
            in_specs=[pl.BlockSpec((tm, tk), lambda i, k: (i, k)),
                      pl.BlockSpec((tk, N), lambda i, k: (k, 0)),
                      _single_buffered((1, N), lambda i, k: (0, 0)),
                      _single_buffered((tm, N), lambda i, k: (i, 0)),   # residual
                      _single_buffered((1, N), lambda i, k: (0, 0)),
                      _single_buffered((1, N), lambda i, k: (0, 0))],
            out_specs=pl.BlockSpec((tm, N), lambda i, k: (i, 0)),
            scratch_shapes=[pltpu.VMEM((tm, N), jnp.float32)],
        ),
        compiler_params=pltpu.CompilerParams(
            dimension_semantics=("parallel", "arbitrary"),
            vmem_limit_bytes=_VMEM_LIMIT),
    )(x, w, b2, res, g2, be2)


def pallas_flash_attention(q, k, v, mask_bias, tq_pref=256, tk_pref=256):
    # v5e: prefer tq_pref=128 (single vector-store slot, 128-native MXU); v6e/v7x: 256.
    B, S, D = q.shape
    tq = _tile(S, tq_pref, 8)
    tk = _tile(S, tk_pref, 128)
    return pl.pallas_call(
        flash_attn_kernel,
        out_shape=jax.ShapeDtypeStruct((B, S, D), q.dtype),
        grid_spec=pltpu.PrefetchScalarGridSpec(
            num_scalar_prefetch=0,
            grid=(B, S // tq, S // tk),                 # KV axis last (reduction)
            in_specs=[pl.BlockSpec((1, tq, D), lambda b, qi, ki: (b, qi, 0)),
                      pl.BlockSpec((1, tk, D), lambda b, qi, ki: (b, ki, 0)),
                      pl.BlockSpec((1, tk, D), lambda b, qi, ki: (b, ki, 0)),
                      pl.BlockSpec((1, 1, tk), lambda b, qi, ki: (b, 0, ki))],
            out_specs=pl.BlockSpec((1, tq, D), lambda b, qi, ki: (b, qi, 0)),
            scratch_shapes=[pltpu.VMEM((tq, 1), jnp.float32),   # running max m
                            pltpu.VMEM((tq, 1), jnp.float32),   # running denom l
                            pltpu.VMEM((tq, D), jnp.float32)],  # output accumulator
        ),
        compiler_params=pltpu.CompilerParams(
            dimension_semantics=("parallel", "parallel", "arbitrary"),
            vmem_limit_bytes=_VMEM_LIMIT),
    )(q, k, v, mask_bias)


# ----------------------------------------------------------------------------- model
def init_params(key, vocab=64, max_seq=16, hidden=128, ffn=512,
                n_species=4, n_lysis=3, head_hidden=128, dtype=jnp.bfloat16):
    # TODO(synk): the real TOXI_REG wraps externally pretrained BERT / dnn weights;
    #             deterministic random stand-ins with the same shapes are used here.
    ks = jax.random.split(key, 10)
    s = 0.02
    sm_scale = 1.0 / math.sqrt(hidden)

    def nrm(k, shape, scale=1.0):
        return (jax.random.normal(k, shape, jnp.float32) * s * scale).astype(dtype)

    feat_pad = ((hidden + n_species + n_lysis + 127) // 128) * 128
    return {
        "word_emb": nrm(ks[0], (vocab, hidden)),
        "pos_emb": nrm(ks[1], (max_seq, hidden)),
        "emb_ln_g": jnp.ones((hidden,), dtype),
        "emb_ln_b": jnp.zeros((hidden,), dtype),
        # sm_scale folded into W_q / b_q -> the flash kernel applies no per-step scale.
        "wq": nrm(ks[2], (hidden, hidden), scale=sm_scale),
        "wk": nrm(ks[3], (hidden, hidden)),
        "wv": nrm(ks[4], (hidden, hidden)),
        "bq": jnp.zeros((hidden,), dtype),
        "bk": jnp.zeros((hidden,), dtype),
        "bv": jnp.zeros((hidden,), dtype),
        "wo": nrm(ks[5], (hidden, hidden)),
        "bo": jnp.zeros((hidden,), dtype),
        "ln1_g": jnp.ones((hidden,), dtype),
        "ln1_b": jnp.zeros((hidden,), dtype),
        "w1": nrm(ks[6], (hidden, ffn)),
        "b1": jnp.zeros((ffn,), dtype),
        "w2": nrm(ks[7], (ffn, hidden)),
        "b2": jnp.zeros((hidden,), dtype),
        "ln2_g": jnp.ones((hidden,), dtype),
        "ln2_b": jnp.zeros((hidden,), dtype),
        "head": {
            "w1": nrm(ks[8], (feat_pad, head_hidden)),   # padded-K first head layer
            "b1": jnp.zeros((head_hidden,), dtype),
            "w2": jax.random.normal(ks[9], (head_hidden, 1), jnp.float32) * s,
            "b2": jnp.zeros((1,), jnp.float32),
        },
    }


def toxi_reg_forward(params, input_ids, attention_mask, onehot_species, onehot_lysis):
    B, S = input_ids.shape
    H = params["word_emb"].shape[1]

    # ---------------- pretrain_bert stand-in ----------------
    # embedding gather + positional add in plain JAX -> dense bf16 slab for the kernels
    emb = params["word_emb"][input_ids] + params["pos_emb"][None, :S, :]
    emb2d_raw = emb.reshape(B * S, H).astype(jnp.bfloat16)

    # fused embedding LayerNorm + Q/K/V projections: one kernel, four outputs
    # (eliminates the standalone LN round-trip AND the jnp.split(qkv) HBM copy).
    emb2d, q2d, k2d, v2d = pallas_emb_ln_qkv(
        emb2d_raw, params["emb_ln_g"], params["emb_ln_b"],
        params["wq"], params["wk"], params["wv"],
        params["bq"], params["bk"], params["bv"])

    q = q2d.reshape(B, S, H)
    k = k2d.reshape(B, S, H)
    v = v2d.reshape(B, S, H)

    # flash attention (single head, head_dim = H); additive -1e9 mask bias in f32
    mask_bias = ((1.0 - attention_mask.astype(jnp.float32)) * -1e9)[:, None, :]
    attn = pallas_flash_attention(q, k, v, mask_bias)
    attn2d = attn.reshape(B * S, H)

    # attention out-projection + residual + LayerNorm fused
    h1 = pallas_matmul_residual_ln(attn2d, params["wo"], params["bo"], emb2d,
                                   params["ln1_g"], params["ln1_b"])

    # FFN: H -> 4H (GELU epilogue), then 4H -> H + residual + LayerNorm fused
    ffn = pallas_matmul(h1, params["w1"], params["b1"], activation="gelu")
    h2 = pallas_matmul_residual_ln(ffn, params["w2"], params["b2"], h1,
                                   params["ln2_g"], params["ln2_b"])

    hidden_states = h2.reshape(B, S, H)          # == pretrain(input_ids, attention_mask)[0]
    cls = hidden_states[:, 0, :]                 # [B, H]

    # ---------------- dnn regression head ----------------
    feat = jnp.concatenate([cls.astype(jnp.float32),
                            onehot_species.astype(jnp.float32),
                            onehot_lysis.astype(jnp.float32)], axis=1)
    f_pad = params["head"]["w1"].shape[0]
    rows_pad = max(8, ((B + 7) // 8) * 8)        # >= 8 sublanes: no masked partial stores
    feat = jnp.pad(feat, ((0, rows_pad - B), (0, f_pad - feat.shape[1]))).astype(jnp.bfloat16)

    hh = pallas_matmul(feat, params["head"]["w1"], params["head"]["b1"],
                       activation="relu")        # lane-dense [rows_pad, 128] kernel output
    # final 1-wide projection kept in plain JAX so no kernel emits a [B, 1] masked store
    out = hh[:B].astype(jnp.float32) @ params["head"]["w2"] + params["head"]["b2"]
    return out, cls.astype(jnp.float32)


# ----------------------------------------------------------------------------- main
if __name__ == "__main__":
    B, S, V = 2, 16, 64
    n_species, n_lysis = 4, 3

    key = jax.random.PRNGKey(0)
    kp, kid, ksp, kly = jax.random.split(key, 4)

    params = init_params(kp, vocab=V, max_seq=S, hidden=128, ffn=512,
                         n_species=n_species, n_lysis=n_lysis)

    input_ids = jax.random.randint(kid, (B, S), 0, V, dtype=jnp.int32)
    # batch 0 fully attended; batch 1 has the last 4 positions masked out
    attention_mask = (jnp.arange(S)[None, :] < jnp.array([[S], [S - 4]])).astype(jnp.int32)
    onehot_species = jax.nn.one_hot(jax.random.randint(ksp, (B,), 0, n_species), n_species)
    onehot_lysis = jax.nn.one_hot(jax.random.randint(kly, (B,), 0, n_lysis), n_lysis)

    fwd = jax.jit(toxi_reg_forward)
    out, cls = fwd(params, input_ids, attention_mask, onehot_species, onehot_lysis)
    jax.block_until_ready((out, cls))

    assert out.shape == (B, 1), out.shape
    assert cls.shape == (B, 128), cls.shape
    assert bool(jnp.all(jnp.isfinite(out))) and bool(jnp.all(jnp.isfinite(cls)))
    print("KERNEL_OK")
</pallas_src>

<mosaic_0001>
module attributes {stable_mosaic.version = 11 : i64} {
  func.func @flash_attn_kernel(%arg0: i32, %arg1: i32, %arg2: i32, %arg3: memref<1x16x128xbf16, #tpu.memory_space<vmem>>, %arg4: memref<1x16x128xbf16, #tpu.memory_space<vmem>>, %arg5: memref<1x16x128xbf16, #tpu.memory_space<vmem>>, %arg6: memref<1x1x16xf32, #tpu.memory_space<vmem>>, %arg7: memref<1x16x128xbf16, #tpu.memory_space<vmem>>, %arg8: memref<16x1xf32, #tpu.memory_space<vmem>>, %arg9: memref<16x1xf32, #tpu.memory_space<vmem>>, %arg10: memref<16x128xf32, #tpu.memory_space<vmem>>) attributes {dimension_semantics = [#tpu.dimension_semantics<parallel>, #tpu.dimension_semantics<parallel>, #tpu.dimension_semantics<arbitrary>], iteration_bounds = array<i64: 2, 1, 1>, scalar_prefetch = 0 : i64, scratch_operands = 3 : i64, tpu.core_type = #tpu.core_type<tc>, window_params = [{transform_indices = @transform_0, window_bounds = array<i64: 1, 16, 128>}, {transform_indices = @transform_1, window_bounds = array<i64: 1, 16, 128>}, {transform_indices = @transform_2, window_bounds = array<i64: 1, 16, 128>}, {transform_indices = @transform_3, window_bounds = array<i64: 1, 1, 16>}, {transform_indices = @transform_4, window_bounds = array<i64: 1, 16, 128>}]} {
    %c0_i32 = arith.constant 0 : i32
    %0 = arith.cmpi eq, %arg2, %c0_i32 : i32
    %1 = arith.extui %0 : i1 to i32
    %c0_i32_0 = arith.constant 0 : i32
    %2 = arith.cmpi ne, %1, %c0_i32_0 : i32
    scf.if %2 {
      %cst_29 = arith.constant -1.000000e+30 : f32
      %40 = vector.broadcast %cst_29 : f32 to vector<16x1xf32>
      %c0_30 = arith.constant 0 : index
      %c0_31 = arith.constant 0 : index
      %41 = vector.load %arg8[%c0_30, %c0_31] : memref<16x1xf32, #tpu.memory_space<vmem>>, vector<16x1xf32>
      tpu.vector_store %arg8[%c0_30, %c0_31], %40 {strides = array<i32>} : memref<16x1xf32, #tpu.memory_space<vmem>>, vector<16x1xf32>,
      %cst_32 = arith.constant 0.000000e+00 : f32
      %42 = vector.broadcast %cst_32 : f32 to vector<16x1xf32>
      %c0_33 = arith.constant 0 : index
      %c0_34 = arith.constant 0 : index
      %43 = vector.load %arg9[%c0_33, %c0_34] : memref<16x1xf32, #tpu.memory_space<vmem>>, vector<16x1xf32>
      tpu.vector_store %arg9[%c0_33, %c0_34], %42 {strides = array<i32>} : memref<16x1xf32, #tpu.memory_space<vmem>>, vector<16x1xf32>,
      %cst_35 = arith.constant 0.000000e+00 : f32
      %44 = vector.broadcast %cst_35 : f32 to vector<16x128xf32>
      %c0_36 = arith.constant 0 : index
      %c0_37 = arith.constant 0 : index
      %45 = vector.load %arg10[%c0_36, %c0_37] : memref<16x128xf32, #tpu.memory_space<vmem>>, vector<16x128xf32>
      tpu.vector_store %arg10[%c0_36, %c0_37], %44 {strides = array<i32>} : memref<16x128xf32, #tpu.memory_space<vmem>>, vector<16x128xf32>,
    } else {
    }
    %c0 = arith.constant 0 : index
    %c0_1 = arith.constant 0 : index
    %c0_2 = arith.constant 0 : index
    %3 = vector.load %arg3[%c0, %c0_1, %c0_2] : memref<1x16x128xbf16, #tpu.memory_space<vmem>>, vector<1x16x128xbf16>
    %4 = vector.shape_cast %3 : vector<1x16x128xbf16> to vector<16x128xbf16>
    %c0_3 = arith.constant 0 : index
    %c0_4 = arith.constant 0 : index
    %c0_5 = arith.constant 0 : index
    %5 = vector.load %arg4[%c0_3, %c0_4, %c0_5] : memref<1x16x128xbf16, #tpu.memory_space<vmem>>, vector<1x16x128xbf16>
    %6 = vector.shape_cast %5 : vector<1x16x128xbf16> to vector<16x128xbf16>
    %c0_6 = arith.constant 0 : index
    %c0_7 = arith.constant 0 : index
    %c0_8 = arith.constant 0 : index
    %7 = vector.load %arg5[%c0_6, %c0_7, %c0_8] : memref<1x16x128xbf16, #tpu.memory_space<vmem>>, vector<1x16x128xbf16>
    %8 = vector.shape_cast %7 : vector<1x16x128xbf16> to vector<16x128xbf16>
    %cst = arith.constant dense<0.000000e+00> : vector<16x16xf32>
    %9 = tpu.matmul %4, %6, %cst {dimension_numbers = #tpu.dot_dimension_numbers<[1], [1], [0], [0], [0, 0, 1, 0], [], []>} : vector<16x128xbf16>, vector<16x128xbf16>, vector<16x16xf32> -> vector<16x16xf32>
    %c0_9 = arith.constant 0 : index
    %c0_10 = arith.constant 0 : index
    %c0_11 = arith.constant 0 : index
    %10 = vector.load %arg6[%c0_9, %c0_10, %c0_11] : memref<1x1x16xf32, #tpu.memory_space<vmem>>, vector<1x1x16xf32>
    %11 = vector.shape_cast %10 : vector<1x1x16xf32> to vector<1x16xf32>
    %12 = vector.broadcast %11 : vector<1x16xf32> to vector<16x16xf32>
    %13 = arith.addf %9, %12 : vector<16x16xf32>
    %c0_12 = arith.constant 0 : index
    %c0_13 = arith.constant 0 : index
    %14 = vector.load %arg8[%c0_12, %c0_13] : memref<16x1xf32, #tpu.memory_space<vmem>>, vector<16x1xf32>
    %cst_14 = arith.constant dense<0xFF800000> : vector<16xf32>
    %15 = vector.multi_reduction <maximumf>, %13, %cst_14 [1] : vector<16x16xf32> to vector<16xf32>
    %16 = vector.shape_cast %15 : vector<16xf32> to vector<16x1xf32>
    %17 = arith.maximumf %14, %16 : vector<16x1xf32>
    %18 = arith.subf %14, %17 : vector<16x1xf32>
    %19 = math.exp %18 : vector<16x1xf32>
    %20 = vector.broadcast %17 : vector<16x1xf32> to vector<16x16xf32>
    %21 = arith.subf %13, %20 : vector<16x16xf32>
    %22 = math.exp %21 : vector<16x16xf32>
    %c0_15 = arith.constant 0 : index
    %c0_16 = arith.constant 0 : index
    %23 = vector.load %arg9[%c0_15, %c0_16] : memref<16x1xf32, #tpu.memory_space<vmem>>, vector<16x1xf32>
    %24 = arith.mulf %19, %23 : vector<16x1xf32>
    %cst_17 = arith.constant dense<0.000000e+00> : vector<16xf32>
    %25 = vector.multi_reduction <add>, %22, %cst_17 [1] : vector<16x16xf32> to vector<16xf32>
    %26 = vector.shape_cast %25 : vector<16xf32> to vector<16x1xf32>
    %27 = arith.addf %24, %26 : vector<16x1xf32>
    %c0_18 = arith.constant 0 : index
    %c0_19 = arith.constant 0 : index
    %28 = vector.load %arg9[%c0_18, %c0_19] : memref<16x1xf32, #tpu.memory_space<vmem>>, vector<16x1xf32>
    tpu.vector_store %arg9[%c0_18, %c0_19], %27 {strides = array<i32>} : memref<16x1xf32, #tpu.memory_space<vmem>>, vector<16x1xf32>,
    %c0_20 = arith.constant 0 : index
    %c0_21 = arith.constant 0 : index
    %29 = vector.load %arg10[%c0_20, %c0_21] : memref<16x128xf32, #tpu.memory_space<vmem>>, vector<16x128xf32>
    %30 = vector.broadcast %19 : vector<16x1xf32> to vector<16x128xf32>
    %31 = arith.mulf %30, %29 : vector<16x128xf32>
    %32 = arith.truncf %22 : vector<16x16xf32> to vector<16x16xbf16>
    %cst_22 = arith.constant dense<0.000000e+00> : vector<16x128xf32>
    %33 = tpu.matmul %32, %8, %cst_22 {dimension_numbers = #tpu.dot_dimension_numbers<[1], [0], [0], [1], [0, 0, 1, 1], [], []>} : vector<16x16xbf16>, vector<16x128xbf16>, vector<16x128xf32> -> vector<16x128xf32>
    %34 = arith.addf %31, %33 : vector<16x128xf32>
    %c0_23 = arith.constant 0 : index
    %c0_24 = arith.constant 0 : index
    %35 = vector.load %arg10[%c0_23, %c0_24] : memref<16x128xf32, #tpu.memory_space<vmem>>, vector<16x128xf32>
    tpu.vector_store %arg10[%c0_23, %c0_24], %34 {strides = array<i32>} : memref<16x128xf32, #tpu.memory_space<vmem>>, vector<16x128xf32>,
    %c0_25 = arith.constant 0 : index
    %c0_26 = arith.constant 0 : index
    %36 = vector.load %arg8[%c0_25, %c0_26] : memref<16x1xf32, #tpu.memory_space<vmem>>, vector<16x1xf32>
    tpu.vector_store %arg8[%c0_25, %c0_26], %17 {strides = array<i32>} : memref<16x1xf32, #tpu.memory_space<vmem>>, vector<16x1xf32>,
    %c0_i32_27 = arith.constant 0 : i32
    %37 = arith.cmpi eq, %arg2, %c0_i32_27 : i32
    %38 = arith.extui %37 : i1 to i32
    %c0_i32_28 = arith.constant 0 : i32
    %39 = arith.cmpi ne, %38, %c0_i32_28 : i32
    scf.if %39 {
      %c0_29 = arith.constant 0 : index
      %c0_30 = arith.constant 0 : index
      %40 = vector.load %arg9[%c0_29, %c0_30] : memref<16x1xf32, #tpu.memory_space<vmem>>, vector<16x1xf32>
      %41 = tpu.reciprocal %40 {approx = true} : vector<16x1xf32> -> vector<16x1xf32>
      %c0_31 = arith.constant 0 : index
      %c0_32 = arith.constant 0 : index
      %42 = vector.load %arg10[%c0_31, %c0_32] : memref<16x128xf32, #tpu.memory_space<vmem>>, vector<16x128xf32>
      %43 = vector.broadcast %41 : vector<16x1xf32> to vector<16x128xf32>
      %44 = arith.mulf %42, %43 : vector<16x128xf32>
      %45 = arith.truncf %44 : vector<16x128xf32> to vector<16x128xbf16>
      %c0_33 = arith.constant 0 : index
      %c0_34 = arith.constant 0 : index
      %c0_35 = arith.constant 0 : index
      %46 = vector.load %arg7[%c0_33, %c0_34, %c0_35] : memref<1x16x128xbf16, #tpu.memory_space<vmem>>, vector<1x16x128xbf16>
      %47 = vector.shape_cast %46 : vector<1x16x128xbf16> to vector<16x128xbf16>
      %48 = vector.shape_cast %45 : vector<16x128xbf16> to vector<1x16x128xbf16>
      tpu.vector_store %arg7[%c0_33, %c0_34, %c0_35], %48 {strides = array<i32>} : memref<1x16x128xbf16, #tpu.memory_space<vmem>>, vector<1x16x128xbf16>,
    } else {
    }
    return
  }
  func.func @transform_0(%arg0: i32, %arg1: i32, %arg2: i32) -> (i32, i32, i32) {
    %c0_i32 = arith.constant 0 : i32
    %c0_i32_0 = arith.constant 0 : i32
    return %arg0, %arg1, %c0_i32 : i32, i32, i32
  }
  func.func @transform_1(%arg0: i32, %arg1: i32, %arg2: i32) -> (i32, i32, i32) {
    %c0_i32 = arith.constant 0 : i32
    %c0_i32_0 = arith.constant 0 : i32
    return %arg0, %arg2, %c0_i32 : i32, i32, i32
  }
  func.func @transform_2(%arg0: i32, %arg1: i32, %arg2: i32) -> (i32, i32, i32) {
    %c0_i32 = arith.constant 0 : i32
    %c0_i32_0 = arith.constant 0 : i32
    return %arg0, %arg2, %c0_i32 : i32, i32, i32
  }
  func.func @transform_3(%arg0: i32, %arg1: i32, %arg2: i32) -> (i32, i32, i32) {
    %c0_i32 = arith.constant 0 : i32
    %c0_i32_0 = arith.constant 0 : i32
    return %arg0, %c0_i32, %arg2 : i32, i32, i32
  }
  func.func @transform_4(%arg0: i32, %arg1: i32, %arg2: i32) -> (i32, i32, i32) {
    %c0_i32 = arith.constant 0 : i32
    %c0_i32_0 = arith.constant 0 : i32
    return %arg0, %arg1, %c0_i32 : i32, i32, i32
  }
}

module attributes {stable_mosaic.version = 11 : i64} {
  func.func @emb_ln_qkv_kernel(%arg0: i32, %arg1: memref<32x128xbf16, #tpu.memory_space<vmem>>, %arg2: memref<1x128xbf16, #tpu.memory_space<vmem>>, %arg3: memref<1x128xbf16, #tpu.memory_space<vmem>>, %arg4: memref<128x128xbf16, #tpu.memory_space<vmem>>, %arg5: memref<128x128xbf16, #tpu.memory_space<vmem>>, %arg6: memref<128x128xbf16, #tpu.memory_space<vmem>>, %arg7: memref<1x128xbf16, #tpu.memory_space<vmem>>, %arg8: memref<1x128xbf16, #tpu.memory_space<vmem>>, %arg9: memref<1x128xbf16, #tpu.memory_space<vmem>>, %arg10: memref<32x128xbf16, #tpu.memory_space<vmem>>, %arg11: memref<32x128xbf16, #tpu.memory_space<vmem>>, %arg12: memref<32x128xbf16, #tpu.memory_space<vmem>>, %arg13: memref<32x128xbf16, #tpu.memory_space<vmem>>) attributes {dimension_semantics = [#tpu.dimension_semantics<parallel>], iteration_bounds = array<i64: 1>, scalar_prefetch = 0 : i64, scratch_operands = 0 : i64, tpu.core_type = #tpu.core_type<tc>, window_params = [{transform_indices = @transform_0, window_bounds = array<i64: 32, 128>}, {pipeline_mode = #tpu.pipeline_mode<synchronous>, transform_indices = @transform_1, window_bounds = array<i64: 1, 128>}, {pipeline_mode = #tpu.pipeline_mode<synchronous>, transform_indices = @transform_2, window_bounds = array<i64: 1, 128>}, {pipeline_mode = #tpu.pipeline_mode<synchronous>, transform_indices = @transform_3, window_bounds = array<i64: 128, 128>}, {pipeline_mode = #tpu.pipeline_mode<synchronous>, transform_indices = @transform_4, window_bounds = array<i64: 128, 128>}, {pipeline_mode = #tpu.pipeline_mode<synchronous>, transform_indices = @transform_5, window_bounds = array<i64: 128, 128>}, {pipeline_mode = #tpu.pipeline_mode<synchronous>, transform_indices = @transform_6, window_bounds = array<i64: 1, 128>}, {pipeline_mode = #tpu.pipeline_mode<synchronous>, transform_indices = @transform_7, window_bounds = array<i64: 1, 128>}, {pipeline_mode = #tpu.pipeline_mode<synchronous>, transform_indices = @transform_8, window_bounds = array<i64: 1, 128>}, {transform_indices = @transform_9, window_bounds = array<i64: 32, 128>}, {transform_indices = @transform_10, window_bounds = array<i64: 32, 128>}, {transform_indices = @transform_11, window_bounds = array<i64: 32, 128>}, {transform_indices = @transform_12, window_bounds = array<i64: 32, 128>}]} {
    %c0 = arith.constant 0 : index
    %c0_0 = arith.constant 0 : index
    %0 = vector.load %arg1[%c0, %c0_0] : memref<32x128xbf16, #tpu.memory_space<vmem>>, vector<32x128xbf16>
    %1 = arith.extf %0 : vector<32x128xbf16> to vector<32x128xf32>
    %cst = arith.constant dense<0.000000e+00> : vector<32xf32>
    %2 = vector.multi_reduction <add>, %1, %cst [1] : vector<32x128xf32> to vector<32xf32>
    %3 = vector.shape_cast %2 : vector<32xf32> to vector<32x1xf32>
    %cst_1 = arith.constant 1.280000e+02 : f32
    %4 = vector.broadcast %cst_1 : f32 to vector<32x1xf32>
    %5 = arith.divf %3, %4 : vector<32x1xf32>
    %6 = vector.broadcast %5 : vector<32x1xf32> to vector<32x128xf32>
    %7 = arith.subf %1, %6 : vector<32x128xf32>
    %8 = arith.mulf %7, %7 : vector<32x128xf32>
    %cst_2 = arith.constant dense<0.000000e+00> : vector<32xf32>
    %9 = vector.multi_reduction <add>, %8, %cst_2 [1] : vector<32x128xf32> to vector<32xf32>
    %10 = vector.shape_cast %9 : vector<32xf32> to vector<32x1xf32>
    %cst_3 = arith.constant 1.280000e+02 : f32
    %11 = vector.broadcast %cst_3 : f32 to vector<32x1xf32>
    %12 = arith.divf %10, %11 : vector<32x1xf32>
    %13 = vector.broadcast %5 : vector<32x1xf32> to vector<32x128xf32>
    %14 = arith.subf %1, %13 : vector<32x128xf32>
    %cst_4 = arith.constant 9.99999996E-13 : f32
    %15 = vector.broadcast %cst_4 : f32 to vector<32x1xf32>
    %16 = arith.addf %12, %15 : vector<32x1xf32>
    %17 = math.rsqrt %16 : vector<32x1xf32>
    %18 = vector.broadcast %17 : vector<32x1xf32> to vector<32x128xf32>
    %19 = arith.mulf %14, %18 : vector<32x128xf32>
    %c0_5 = arith.constant 0 : index
    %c0_6 = arith.constant 0 : index
    %20 = vector.load %arg2[%c0_5, %c0_6] : memref<1x128xbf16, #tpu.memory_space<vmem>>, vector<1x128xbf16>
    %21 = arith.extf %20 : vector<1x128xbf16> to vector<1x128xf32>
    %22 = vector.broadcast %21 : vector<1x128xf32> to vector<32x128xf32>
    %23 = arith.mulf %19, %22 : vector<32x128xf32>
    %c0_7 = arith.constant 0 : index
    %c0_8 = arith.constant 0 : index
    %24 = vector.load %arg3[%c0_7, %c0_8] : memref<1x128xbf16, #tpu.memory_space<vmem>>, vector<1x128xbf16>
    %25 = arith.extf %24 : vector<1x128xbf16> to vector<1x128xf32>
    %26 = vector.broadcast %25 : vector<1x128xf32> to vector<32x128xf32>
    %27 = arith.addf %23, %26 : vector<32x128xf32>
    %28 = arith.truncf %27 : vector<32x128xf32> to vector<32x128xbf16>
    %c0_9 = arith.constant 0 : index
    %c0_10 = arith.constant 0 : index
    %29 = vector.load %arg10[%c0_9, %c0_10] : memref<32x128xbf16, #tpu.memory_space<vmem>>, vector<32x128xbf16>
    tpu.vector_store %arg10[%c0_9, %c0_10], %28 {strides = array<i32>} : memref<32x128xbf16, #tpu.memory_space<vmem>>, vector<32x128xbf16>,
    %c0_11 = arith.constant 0 : index
    %c0_12 = arith.constant 0 : index
    %30 = vector.load %arg4[%c0_11, %c0_12] : memref<128x128xbf16, #tpu.memory_space<vmem>>, vector<128x128xbf16>
    %cst_13 = arith.constant dense<0.000000e+00> : vector<32x128xf32>
    %31 = tpu.matmul %28, %30, %cst_13 {dimension_numbers = #tpu.dot_dimension_numbers<[1], [0], [0], [1], [0, 0, 1, 1], [], []>} : vector<32x128xbf16>, vector<128x128xbf16>, vector<32x128xf32> -> vector<32x128xf32>
    %c0_14 = arith.constant 0 : index
    %c0_15 = arith.constant 0 : index
    %32 = vector.load %arg7[%c0_14, %c0_15] : memref<1x128xbf16, #tpu.memory_space<vmem>>, vector<1x128xbf16>
    %33 = arith.extf %32 : vector<1x128xbf16> to vector<1x128xf32>
    %34 = vector.broadcast %33 : vector<1x128xf32> to vector<32x128xf32>
    %35 = arith.addf %31, %34 : vector<32x128xf32>
    %36 = arith.truncf %35 : vector<32x128xf32> to vector<32x128xbf16>
    %c0_16 = arith.constant 0 : index
    %c0_17 = arith.constant 0 : index
    %37 = vector.load %arg11[%c0_16, %c0_17] : memref<32x128xbf16, #tpu.memory_space<vmem>>, vector<32x128xbf16>
    tpu.vector_store %arg11[%c0_16, %c0_17], %36 {strides = array<i32>} : memref<32x128xbf16, #tpu.memory_space<vmem>>, vector<32x128xbf16>,
    %c0_18 = arith.constant 0 : index
    %c0_19 = arith.constant 0 : index
    %38 = vector.load %arg5[%c0_18, %c0_19] : memref<128x128xbf16, #tpu.memory_space<vmem>>, vector<128x128xbf16>
    %cst_20 = arith.constant dense<0.000000e+00> : vector<32x128xf32>
    %39 = tpu.matmul %28, %38, %cst_20 {dimension_numbers = #tpu.dot_dimension_numbers<[1], [0], [0], [1], [0, 0, 1, 1], [], []>} : vector<32x128xbf16>, vector<128x128xbf16>, vector<32x128xf32> -> vector<32x128xf32>
    %c0_21 = arith.constant 0 : index
    %c0_22 = arith.constant 0 : index
    %40 = vector.load %arg8[%c0_21, %c0_22] : memref<1x128xbf16, #tpu.memory_space<vmem>>, vector<1x128xbf16>
    %41 = arith.extf %40 : vector<1x128xbf16> to vector<1x128xf32>
    %42 = vector.broadcast %41 : vector<1x128xf32> to vector<32x128xf32>
    %43 = arith.addf %39, %42 : vector<32x128xf32>
    %44 = arith.truncf %43 : vector<32x128xf32> to vector<32x128xbf16>
    %c0_23 = arith.constant 0 : index
    %c0_24 = arith.constant 0 : index
    %45 = vector.load %arg12[%c0_23, %c0_24] : memref<32x128xbf16, #tpu.memory_space<vmem>>, vector<32x128xbf16>
    tpu.vector_store %arg12[%c0_23, %c0_24], %44 {strides = array<i32>} : memref<32x128xbf16, #tpu.memory_space<vmem>>, vector<32x128xbf16>,
    %c0_25 = arith.constant 0 : index
    %c0_26 = arith.constant 0 : index
    %46 = vector.load %arg6[%c0_25, %c0_26] : memref<128x128xbf16, #tpu.memory_space<vmem>>, vector<128x128xbf16>
    %cst_27 = arith.constant dense<0.000000e+00> : vector<32x128xf32>
    %47 = tpu.matmul %28, %46, %cst_27 {dimension_numbers = #tpu.dot_dimension_numbers<[1], [0], [0], [1], [0, 0, 1, 1], [], []>} : vector<32x128xbf16>, vector<128x128xbf16>, vector<32x128xf32> -> vector<32x128xf32>
    %c0_28 = arith.constant 0 : index
    %c0_29 = arith.constant 0 : index
    %48 = vector.load %arg9[%c0_28, %c0_29] : memref<1x128xbf16, #tpu.memory_space<vmem>>, vector<1x128xbf16>
    %49 = arith.extf %48 : vector<1x128xbf16> to vector<1x128xf32>
    %50 = vector.broadcast %49 : vector<1x128xf32> to vector<32x128xf32>
    %51 = arith.addf %47, %50 : vector<32x128xf32>
    %52 = arith.truncf %51 : vector<32x128xf32> to vector<32x128xbf16>
    %c0_30 = arith.constant 0 : index
    %c0_31 = arith.constant 0 : index
    %53 = vector.load %arg13[%c0_30, %c0_31] : memref<32x128xbf16, #tpu.memory_space<vmem>>, vector<32x128xbf16>
    tpu.vector_store %arg13[%c0_30, %c0_31], %52 {strides = array<i32>} : memref<32x128xbf16, #tpu.memory_space<vmem>>, vector<32x128xbf16>,
    return
  }
  func.func @transform_0(%arg0: i32) -> (i32, i32) {
    %c0_i32 = arith.constant 0 : i32
    %c0_i32_0 = arith.constant 0 : i32
    return %arg0, %c0_i32 : i32, i32
  }
  func.func @transform_1(%arg0: i32) -> (i32, i32) {
    %c0_i32 = arith.constant 0 : i32
    %c0_i32_0 = arith.constant 0 : i32
    %c0_i32_1 = arith.constant 0 : i32
    return %c0_i32, %c0_i32_0 : i32, i32
  }
  func.func @transform_2(%arg0: i32) -> (i32, i32) {
    %c0_i32 = arith.constant 0 : i32
    %c0_i32_0 = arith.constant 0 : i32
    %c0_i32_1 = arith.constant 0 : i32
    return %c0_i32, %c0_i32_0 : i32, i32
  }
  func.func @transform_3(%arg0: i32) -> (i32, i32) {
    %c0_i32 = arith.constant 0 : i32
    %c0_i32_0 = arith.constant 0 : i32
    %c0_i32_1 = arith.constant 0 : i32
    return %c0_i32, %c0_i32_0 : i32, i32
  }
  func.func @transform_4(%arg0: i32) -> (i32, i32) {
    %c0_i32 = arith.constant 0 : i32
    %c0_i32_0 = arith.constant 0 : i32
    %c0_i32_1 = arith.constant 0 : i32
    return %c0_i32, %c0_i32_0 : i32, i32
  }
  func.func @transform_5(%arg0: i32) -> (i32, i32) {
    %c0_i32 = arith.constant 0 : i32
    %c0_i32_0 = arith.constant 0 : i32
    %c0_i32_1 = arith.constant 0 : i32
    return %c0_i32, %c0_i32_0 : i32, i32
  }
  func.func @transform_6(%arg0: i32) -> (i32, i32) {
    %c0_i32 = arith.constant 0 : i32
    %c0_i32_0 = arith.constant 0 : i32
    %c0_i32_1 = arith.constant 0 : i32
    return %c0_i32, %c0_i32_0 : i32, i32
  }
  func.func @transform_7(%arg0: i32) -> (i32, i32) {
    %c0_i32 = arith.constant 0 : i32
    %c0_i32_0 = arith.constant 0 : i32
    %c0_i32_1 = arith.constant 0 : i32
    return %c0_i32, %c0_i32_0 : i32, i32
  }
  func.func @transform_8(%arg0: i32) -> (i32, i32) {
    %c0_i32 = arith.constant 0 : i32
    %c0_i32_0 = arith.constant 0 : i32
    %c0_i32_1 = arith.constant 0 : i32
    return %c0_i32, %c0_i32_0 : i32, i32
  }
  func.func @transform_9(%arg0: i32) -> (i32, i32) {
    %c0_i32 = arith.constant 0 : i32
    %c0_i32_0 = arith.constant 0 : i32
    return %arg0, %c0_i32 : i32, i32
  }
  func.func @transform_10(%arg0: i32) -> (i32, i32) {
    %c0_i32 = arith.constant 0 : i32
    %c0_i32_0 = arith.constant 0 : i32
    return %arg0, %c0_i32 : i32, i32
  }
  func.func @transform_11(%arg0: i32) -> (i32, i32) {
    %c0_i32 = arith.constant 0 : i32
    %c0_i32_0 = arith.constant 0 : i32
    return %arg0, %c0_i32 : i32, i32
  }
  func.func @transform_12(%arg0: i32) -> (i32, i32) {
    %c0_i32 = arith.constant 0 : i32
    %c0_i32_0 = arith.constant 0 : i32
    return %arg0, %c0_i32 : i32, i32
  }
}

module attributes {stable_mosaic.version = 11 : i64} {
  func.func @matmul_res_ln_kernel(%arg0: i32, %arg1: i32, %arg2: memref<32x128xbf16, #tpu.memory_space<vmem>>, %arg3: memref<128x128xbf16, #tpu.memory_space<vmem>>, %arg4: memref<1x128xbf16, #tpu.memory_space<vmem>>, %arg5: memref<32x128xbf16, #tpu.memory_space<vmem>>, %arg6: memref<1x128xbf16, #tpu.memory_space<vmem>>, %arg7: memref<1x128xbf16, #tpu.memory_space<vmem>>, %arg8: memref<32x128xbf16, #tpu.memory_space<vmem>>, %arg9: memref<32x128xf32, #tpu.memory_space<vmem>>) attributes {dimension_semantics = [#tpu.dimension_semantics<parallel>, #tpu.dimension_semantics<arbitrary>], iteration_bounds = array<i64: 1, 1>, scalar_prefetch = 0 : i64, scratch_operands = 1 : i64, tpu.core_type = #tpu.core_type<tc>, window_params = [{transform_indices = @transform_0, window_bounds = array<i64: 32, 128>}, {transform_indices = @transform_1, window_bounds = array<i64: 128, 128>}, {pipeline_mode = #tpu.pipeline_mode<synchronous>, transform_indices = @transform_2, window_bounds = array<i64: 1, 128>}, {pipeline_mode = #tpu.pipeline_mode<synchronous>, transform_indices = @transform_3, window_bounds = array<i64: 32, 128>}, {pipeline_mode = #tpu.pipeline_mode<synchronous>, transform_indices = @transform_4, window_bounds = array<i64: 1, 128>}, {pipeline_mode = #tpu.pipeline_mode<synchronous>, transform_indices = @transform_5, window_bounds = array<i64: 1, 128>}, {transform_indices = @transform_6, window_bounds = array<i64: 32, 128>}]} {
    %c0_i32 = arith.constant 0 : i32
    %0 = arith.cmpi eq, %arg1, %c0_i32 : i32
    %1 = arith.extui %0 : i1 to i32
    %c0_i32_0 = arith.constant 0 : i32
    %2 = arith.cmpi ne, %1, %c0_i32_0 : i32
    scf.if %2 {
      %cst_10 = arith.constant 0.000000e+00 : f32
      %12 = vector.broadcast %cst_10 : f32 to vector<32x128xf32>
      %c0_11 = arith.constant 0 : index
      %c0_12 = arith.constant 0 : index
      %13 = vector.load %arg9[%c0_11, %c0_12] : memref<32x128xf32, #tpu.memory_space<vmem>>, vector<32x128xf32>
      tpu.vector_store %arg9[%c0_11, %c0_12], %12 {strides = array<i32>} : memref<32x128xf32, #tpu.memory_space<vmem>>, vector<32x128xf32>,
    } else {
    }
    %c0 = arith.constant 0 : index
    %c0_1 = arith.constant 0 : index
    %3 = vector.load %arg9[%c0, %c0_1] : memref<32x128xf32, #tpu.memory_space<vmem>>, vector<32x128xf32>
    %c0_2 = arith.constant 0 : index
    %c0_3 = arith.constant 0 : index
    %4 = vector.load %arg2[%c0_2, %c0_3] : memref<32x128xbf16, #tpu.memory_space<vmem>>, vector<32x128xbf16>
    %c0_4 = arith.constant 0 : index
    %c0_5 = arith.constant 0 : index
    %5 = vector.load %arg3[%c0_4, %c0_5] : memref<128x128xbf16, #tpu.memory_space<vmem>>, vector<128x128xbf16>
    %cst = arith.constant dense<0.000000e+00> : vector<32x128xf32>
    %6 = tpu.matmul %4, %5, %cst {dimension_numbers = #tpu.dot_dimension_numbers<[1], [0], [0], [1], [0, 0, 1, 1], [], []>} : vector<32x128xbf16>, vector<128x128xbf16>, vector<32x128xf32> -> vector<32x128xf32>
    %7 = arith.addf %3, %6 : vector<32x128xf32>
    %c0_6 = arith.constant 0 : index
    %c0_7 = arith.constant 0 : index
    %8 = vector.load %arg9[%c0_6, %c0_7] : memref<32x128xf32, #tpu.memory_space<vmem>>, vector<32x128xf32>
    tpu.vector_store %arg9[%c0_6, %c0_7], %7 {strides = array<i32>} : memref<32x128xf32, #tpu.memory_space<vmem>>, vector<32x128xf32>,
    %c0_i32_8 = arith.constant 0 : i32
    %9 = arith.cmpi eq, %arg1, %c0_i32_8 : i32
    %10 = arith.extui %9 : i1 to i32
    %c0_i32_9 = arith.constant 0 : i32
    %11 = arith.cmpi ne, %10, %c0_i32_9 : i32
    scf.if %11 {
      %c0_10 = arith.constant 0 : index
      %c0_11 = arith.constant 0 : index
      %12 = vector.load %arg9[%c0_10, %c0_11] : memref<32x128xf32, #tpu.memory_space<vmem>>, vector<32x128xf32>
      %c0_12 = arith.constant 0 : index
      %c0_13 = arith.constant 0 : index
      %13 = vector.load %arg4[%c0_12, %c0_13] : memref<1x128xbf16, #tpu.memory_space<vmem>>, vector<1x128xbf16>
      %14 = arith.extf %13 : vector<1x128xbf16> to vector<1x128xf32>
      %15 = vector.broadcast %14 : vector<1x128xf32> to vector<32x128xf32>
      %16 = arith.addf %12, %15 : vector<32x128xf32>
      %c0_14 = arith.constant 0 : index
      %c0_15 = arith.constant 0 : index
      %17 = vector.load %arg5[%c0_14, %c0_15] : memref<32x128xbf16, #tpu.memory_space<vmem>>, vector<32x128xbf16>
      %18 = arith.extf %17 : vector<32x128xbf16> to vector<32x128xf32>
      %19 = arith.addf %16, %18 : vector<32x128xf32>
      %cst_16 = arith.constant dense<0.000000e+00> : vector<32xf32>
      %20 = vector.multi_reduction <add>, %19, %cst_16 [1] : vector<32x128xf32> to vector<32xf32>
      %21 = vector.shape_cast %20 : vector<32xf32> to vector<32x1xf32>
      %cst_17 = arith.constant 1.280000e+02 : f32
      %22 = vector.broadcast %cst_17 : f32 to vector<32x1xf32>
      %23 = arith.divf %21, %22 : vector<32x1xf32>
      %24 = vector.broadcast %23 : vector<32x1xf32> to vector<32x128xf32>
      %25 = arith.subf %19, %24 : vector<32x128xf32>
      %26 = arith.mulf %25, %25 : vector<32x128xf32>
      %cst_18 = arith.constant dense<0.000000e+00> : vector<32xf32>
      %27 = vector.multi_reduction <add>, %26, %cst_18 [1] : vector<32x128xf32> to vector<32xf32>
      %28 = vector.shape_cast %27 : vector<32xf32> to vector<32x1xf32>
      %cst_19 = arith.constant 1.280000e+02 : f32
      %29 = vector.broadcast %cst_19 : f32 to vector<32x1xf32>
      %30 = arith.divf %28, %29 : vector<32x1xf32>
      %31 = vector.broadcast %23 : vector<32x1xf32> to vector<32x128xf32>
      %32 = arith.subf %19, %31 : vector<32x128xf32>
      %cst_20 = arith.constant 9.99999996E-13 : f32
      %33 = vector.broadcast %cst_20 : f32 to vector<32x1xf32>
      %34 = arith.addf %30, %33 : vector<32x1xf32>
      %35 = math.rsqrt %34 : vector<32x1xf32>
      %36 = vector.broadcast %35 : vector<32x1xf32> to vector<32x128xf32>
      %37 = arith.mulf %32, %36 : vector<32x128xf32>
      %c0_21 = arith.constant 0 : index
      %c0_22 = arith.constant 0 : index
      %38 = vector.load %arg6[%c0_21, %c0_22] : memref<1x128xbf16, #tpu.memory_space<vmem>>, vector<1x128xbf16>
      %39 = arith.extf %38 : vector<1x128xbf16> to vector<1x128xf32>
      %40 = vector.broadcast %39 : vector<1x128xf32> to vector<32x128xf32>
      %41 = arith.mulf %37, %40 : vector<32x128xf32>
      %c0_23 = arith.constant 0 : index
      %c0_24 = arith.constant 0 : index
      %42 = vector.load %arg7[%c0_23, %c0_24] : memref<1x128xbf16, #tpu.memory_space<vmem>>, vector<1x128xbf16>
      %43 = arith.extf %42 : vector<1x128xbf16> to vector<1x128xf32>
      %44 = vector.broadcast %43 : vector<1x128xf32> to vector<32x128xf32>
      %45 = arith.addf %41, %44 : vector<32x128xf32>
      %46 = arith.truncf %45 : vector<32x128xf32> to vector<32x128xbf16>
      %c0_25 = arith.constant 0 : index
      %c0_26 = arith.constant 0 : index
      %47 = vector.load %arg8[%c0_25, %c0_26] : memref<32x128xbf16, #tpu.memory_space<vmem>>, vector<32x128xbf16>
      tpu.vector_store %arg8[%c0_25, %c0_26], %46 {strides = array<i32>} : memref<32x128xbf16, #tpu.memory_space<vmem>>, vector<32x128xbf16>,
    } else {
    }
    return
  }
  func.func @transform_0(%arg0: i32, %arg1: i32) -> (i32, i32) {
    %c0_i32 = arith.constant 0 : i32
    return %arg0, %arg1 : i32, i32
  }
  func.func @transform_1(%arg0: i32, %arg1: i32) -> (i32, i32) {
    %c0_i32 = arith.constant 0 : i32
    %c0_i32_0 = arith.constant 0 : i32
    return %arg1, %c0_i32 : i32, i32
  }
  func.func @transform_2(%arg0: i32, %arg1: i32) -> (i32, i32) {
    %c0_i32 = arith.constant 0 : i32
    %c0_i32_0 = arith.constant 0 : i32
    %c0_i32_1 = arith.constant 0 : i32
    return %c0_i32, %c0_i32_0 : i32, i32
  }
  func.func @transform_3(%arg0: i32, %arg1: i32) -> (i32, i32) {
    %c0_i32 = arith.constant 0 : i32
    %c0_i32_0 = arith.constant 0 : i32
    return %arg0, %c0_i32 : i32, i32
  }
  func.func @transform_4(%arg0: i32, %arg1: i32) -> (i32, i32) {
    %c0_i32 = arith.constant 0 : i32
    %c0_i32_0 = arith.constant 0 : i32
    %c0_i32_1 = arith.constant 0 : i32
    return %c0_i32, %c0_i32_0 : i32, i32
  }
  func.func @transform_5(%arg0: i32, %arg1: i32) -> (i32, i32) {
    %c0_i32 = arith.constant 0 : i32
    %c0_i32_0 = arith.constant 0 : i32
    %c0_i32_1 = arith.constant 0 : i32
    return %c0_i32, %c0_i32_0 : i32, i32
  }
  func.func @transform_6(%arg0: i32, %arg1: i32) -> (i32, i32) {
    %c0_i32 = arith.constant 0 : i32
    %c0_i32_0 = arith.constant 0 : i32
    return %arg0, %c0_i32 : i32, i32
  }
}

module attributes {stable_mosaic.version = 11 : i64} {
  func.func @matmul_bias_act_kernel(%arg0: i32, %arg1: i32, %arg2: i32, %arg3: memref<32x128xbf16, #tpu.memory_space<vmem>>, %arg4: memref<128x256xbf16, #tpu.memory_space<vmem>>, %arg5: memref<1x256xbf16, #tpu.memory_space<vmem>>, %arg6: memref<32x256xbf16, #tpu.memory_space<vmem>>, %arg7: memref<32x256xf32, #tpu.memory_space<vmem>>) attributes {dimension_semantics = [#tpu.dimension_semantics<parallel>, #tpu.dimension_semantics<parallel>, #tpu.dimension_semantics<arbitrary>], iteration_bounds = array<i64: 1, 2, 1>, scalar_prefetch = 0 : i64, scratch_operands = 1 : i64, tpu.core_type = #tpu.core_type<tc>, window_params = [{transform_indices = @transform_0, window_bounds = array<i64: 32, 128>}, {transform_indices = @transform_1, window_bounds = array<i64: 128, 256>}, {pipeline_mode = #tpu.pipeline_mode<synchronous>, transform_indices = @transform_2, window_bounds = array<i64: 1, 256>}, {transform_indices = @transform_3, window_bounds = array<i64: 32, 256>}]} {
    %c0_i32 = arith.constant 0 : i32
    %0 = arith.cmpi eq, %arg2, %c0_i32 : i32
    %1 = arith.extui %0 : i1 to i32
    %c0_i32_0 = arith.constant 0 : i32
    %2 = arith.cmpi ne, %1, %c0_i32_0 : i32
    scf.if %2 {
      %cst_10 = arith.constant 0.000000e+00 : f32
      %12 = vector.broadcast %cst_10 : f32 to vector<32x256xf32>
      %c0_11 = arith.constant 0 : index
      %c0_12 = arith.constant 0 : index
      %13 = vector.load %arg7[%c0_11, %c0_12] : memref<32x256xf32, #tpu.memory_space<vmem>>, vector<32x256xf32>
      tpu.vector_store %arg7[%c0_11, %c0_12], %12 {strides = array<i32>} : memref<32x256xf32, #tpu.memory_space<vmem>>, vector<32x256xf32>,
    } else {
    }
    %c0 = arith.constant 0 : index
    %c0_1 = arith.constant 0 : index
    %3 = vector.load %arg7[%c0, %c0_1] : memref<32x256xf32, #tpu.memory_space<vmem>>, vector<32x256xf32>
    %c0_2 = arith.constant 0 : index
    %c0_3 = arith.constant 0 : index
    %4 = vector.load %arg3[%c0_2, %c0_3] : memref<32x128xbf16, #tpu.memory_space<vmem>>, vector<32x128xbf16>
    %c0_4 = arith.constant 0 : index
    %c0_5 = arith.constant 0 : index
    %5 = vector.load %arg4[%c0_4, %c0_5] : memref<128x256xbf16, #tpu.memory_space<vmem>>, vector<128x256xbf16>
    %cst = arith.constant dense<0.000000e+00> : vector<32x256xf32>
    %6 = tpu.matmul %4, %5, %cst {dimension_numbers = #tpu.dot_dimension_numbers<[1], [0], [0], [1], [0, 0, 1, 1], [], []>} : vector<32x128xbf16>, vector<128x256xbf16>, vector<32x256xf32> -> vector<32x256xf32>
    %7 = arith.addf %3, %6 : vector<32x256xf32>
    %c0_6 = arith.constant 0 : index
    %c0_7 = arith.constant 0 : index
    %8 = vector.load %arg7[%c0_6, %c0_7] : memref<32x256xf32, #tpu.memory_space<vmem>>, vector<32x256xf32>
    tpu.vector_store %arg7[%c0_6, %c0_7], %7 {strides = array<i32>} : memref<32x256xf32, #tpu.memory_space<vmem>>, vector<32x256xf32>,
    %c0_i32_8 = arith.constant 0 : i32
    %9 = arith.cmpi eq, %arg2, %c0_i32_8 : i32
    %10 = arith.extui %9 : i1 to i32
    %c0_i32_9 = arith.constant 0 : i32
    %11 = arith.cmpi ne, %10, %c0_i32_9 : i32
    scf.if %11 {
      %c0_10 = arith.constant 0 : index
      %c0_11 = arith.constant 0 : index
      %12 = vector.load %arg7[%c0_10, %c0_11] : memref<32x256xf32, #tpu.memory_space<vmem>>, vector<32x256xf32>
      %c0_12 = arith.constant 0 : index
      %c0_13 = arith.constant 0 : index
      %13 = vector.load %arg5[%c0_12, %c0_13] : memref<1x256xbf16, #tpu.memory_space<vmem>>, vector<1x256xbf16>
      %14 = arith.extf %13 : vector<1x256xbf16> to vector<1x256xf32>
      %15 = vector.broadcast %14 : vector<1x256xf32> to vector<32x256xf32>
      %16 = arith.addf %12, %15 : vector<32x256xf32>
      %17 = arith.mulf %16, %16 : vector<32x256xf32>
      %18 = arith.mulf %16, %17 : vector<32x256xf32>
      %cst_14 = arith.constant 4.471500e-02 : f32
      %19 = vector.broadcast %cst_14 : f32 to vector<32x256xf32>
      %20 = arith.mulf %19, %18 : vector<32x256xf32>
      %21 = arith.addf %16, %20 : vector<32x256xf32>
      %cst_15 = arith.constant 0.797884583 : f32
      %22 = vector.broadcast %cst_15 : f32 to vector<32x256xf32>
      %23 = arith.mulf %22, %21 : vector<32x256xf32>
      %24 = math.tanh %23 : vector<32x256xf32>
      %cst_16 = arith.constant 1.000000e+00 : f32
      %25 = vector.broadcast %cst_16 : f32 to vector<32x256xf32>
      %26 = arith.addf %25, %24 : vector<32x256xf32>
      %cst_17 = arith.constant 5.000000e-01 : f32
      %27 = vector.broadcast %cst_17 : f32 to vector<32x256xf32>
      %28 = arith.mulf %27, %26 : vector<32x256xf32>
      %29 = arith.mulf %16, %28 : vector<32x256xf32>
      %30 = arith.truncf %29 : vector<32x256xf32> to vector<32x256xbf16>
      %c0_18 = arith.constant 0 : index
      %c0_19 = arith.constant 0 : index
      %31 = vector.load %arg6[%c0_18, %c0_19] : memref<32x256xbf16, #tpu.memory_space<vmem>>, vector<32x256xbf16>
      tpu.vector_store %arg6[%c0_18, %c0_19], %30 {strides = array<i32>} : memref<32x256xbf16, #tpu.memory_space<vmem>>, vector<32x256xbf16>,
    } else {
    }
    return
  }
  func.func @transform_0(%arg0: i32, %arg1: i32, %arg2: i32) -> (i32, i32) {
    %c0_i32 = arith.constant 0 : i32
    return %arg0, %arg2 : i32, i32
  }
  func.func @transform_1(%arg0: i32, %arg1: i32, %arg2: i32) -> (i32, i32) {
    %c0_i32 = arith.constant 0 : i32
    return %arg2, %arg1 : i32, i32
  }
  func.func @transform_2(%arg0: i32, %arg1: i32, %arg2: i32) -> (i32, i32) {
    %c0_i32 = arith.constant 0 : i32
    %c0_i32_0 = arith.constant 0 : i32
    return %c0_i32, %arg1 : i32, i32
  }
  func.func @transform_3(%arg0: i32, %arg1: i32, %arg2: i32) -> (i32, i32) {
    %c0_i32 = arith.constant 0 : i32
    return %arg0, %arg1 : i32, i32
  }
}

module attributes {stable_mosaic.version = 11 : i64} {
  func.func @matmul_res_ln_kernel(%arg0: i32, %arg1: i32, %arg2: memref<32x512xbf16, #tpu.memory_space<vmem>>, %arg3: memref<512x128xbf16, #tpu.memory_space<vmem>>, %arg4: memref<1x128xbf16, #tpu.memory_space<vmem>>, %arg5: memref<32x128xbf16, #tpu.memory_space<vmem>>, %arg6: memref<1x128xbf16, #tpu.memory_space<vmem>>, %arg7: memref<1x128xbf16, #tpu.memory_space<vmem>>, %arg8: memref<32x128xbf16, #tpu.memory_space<vmem>>, %arg9: memref<32x128xf32, #tpu.memory_space<vmem>>) attributes {dimension_semantics = [#tpu.dimension_semantics<parallel>, #tpu.dimension_semantics<arbitrary>], iteration_bounds = array<i64: 1, 1>, scalar_prefetch = 0 : i64, scratch_operands = 1 : i64, tpu.core_type = #tpu.core_type<tc>, window_params = [{transform_indices = @transform_0, window_bounds = array<i64: 32, 512>}, {transform_indices = @transform_1, window_bounds = array<i64: 512, 128>}, {pipeline_mode = #tpu.pipeline_mode<synchronous>, transform_indices = @transform_2, window_bounds = array<i64: 1, 128>}, {pipeline_mode = #tpu.pipeline_mode<synchronous>, transform_indices = @transform_3, window_bounds = array<i64: 32, 128>}, {pipeline_mode = #tpu.pipeline_mode<synchronous>, transform_indices = @transform_4, window_bounds = array<i64: 1, 128>}, {pipeline_mode = #tpu.pipeline_mode<synchronous>, transform_indices = @transform_5, window_bounds = array<i64: 1, 128>}, {transform_indices = @transform_6, window_bounds = array<i64: 32, 128>}]} {
    %c0_i32 = arith.constant 0 : i32
    %0 = arith.cmpi eq, %arg1, %c0_i32 : i32
    %1 = arith.extui %0 : i1 to i32
    %c0_i32_0 = arith.constant 0 : i32
    %2 = arith.cmpi ne, %1, %c0_i32_0 : i32
    scf.if %2 {
      %cst_10 = arith.constant 0.000000e+00 : f32
      %12 = vector.broadcast %cst_10 : f32 to vector<32x128xf32>
      %c0_11 = arith.constant 0 : index
      %c0_12 = arith.constant 0 : index
      %13 = vector.load %arg9[%c0_11, %c0_12] : memref<32x128xf32, #tpu.memory_space<vmem>>, vector<32x128xf32>
      tpu.vector_store %arg9[%c0_11, %c0_12], %12 {strides = array<i32>} : memref<32x128xf32, #tpu.memory_space<vmem>>, vector<32x128xf32>,
    } else {
    }
    %c0 = arith.constant 0 : index
    %c0_1 = arith.constant 0 : index
    %3 = vector.load %arg9[%c0, %c0_1] : memref<32x128xf32, #tpu.memory_space<vmem>>, vector<32x128xf32>
    %c0_2 = arith.constant 0 : index
    %c0_3 = arith.constant 0 : index
    %4 = vector.load %arg2[%c0_2, %c0_3] : memref<32x512xbf16, #tpu.memory_space<vmem>>, vector<32x512xbf16>
    %c0_4 = arith.constant 0 : index
    %c0_5 = arith.constant 0 : index
    %5 = vector.load %arg3[%c0_4, %c0_5] : memref<512x128xbf16, #tpu.memory_space<vmem>>, vector<512x128xbf16>
    %cst = arith.constant dense<0.000000e+00> : vector<32x128xf32>
    %6 = tpu.matmul %4, %5, %cst {dimension_numbers = #tpu.dot_dimension_numbers<[1], [0], [0], [1], [0, 0, 1, 1], [], []>} : vector<32x512xbf16>, vector<512x128xbf16>, vector<32x128xf32> -> vector<32x128xf32>
    %7 = arith.addf %3, %6 : vector<32x128xf32>
    %c0_6 = arith.constant 0 : index
    %c0_7 = arith.constant 0 : index
    %8 = vector.load %arg9[%c0_6, %c0_7] : memref<32x128xf32, #tpu.memory_space<vmem>>, vector<32x128xf32>
    tpu.vector_store %arg9[%c0_6, %c0_7], %7 {strides = array<i32>} : memref<32x128xf32, #tpu.memory_space<vmem>>, vector<32x128xf32>,
    %c0_i32_8 = arith.constant 0 : i32
    %9 = arith.cmpi eq, %arg1, %c0_i32_8 : i32
    %10 = arith.extui %9 : i1 to i32
    %c0_i32_9 = arith.constant 0 : i32
    %11 = arith.cmpi ne, %10, %c0_i32_9 : i32
    scf.if %11 {
      %c0_10 = arith.constant 0 : index
      %c0_11 = arith.constant 0 : index
      %12 = vector.load %arg9[%c0_10, %c0_11] : memref<32x128xf32, #tpu.memory_space<vmem>>, vector<32x128xf32>
      %c0_12 = arith.constant 0 : index
      %c0_13 = arith.constant 0 : index
      %13 = vector.load %arg4[%c0_12, %c0_13] : memref<1x128xbf16, #tpu.memory_space<vmem>>, vector<1x128xbf16>
      %14 = arith.extf %13 : vector<1x128xbf16> to vector<1x128xf32>
      %15 = vector.broadcast %14 : vector<1x128xf32> to vector<32x128xf32>
      %16 = arith.addf %12, %15 : vector<32x128xf32>
      %c0_14 = arith.constant 0 : index
      %c0_15 = arith.constant 0 : index
      %17 = vector.load %arg5[%c0_14, %c0_15] : memref<32x128xbf16, #tpu.memory_space<vmem>>, vector<32x128xbf16>
      %18 = arith.extf %17 : vector<32x128xbf16> to vector<32x128xf32>
      %19 = arith.addf %16, %18 : vector<32x128xf32>
      %cst_16 = arith.constant dense<0.000000e+00> : vector<32xf32>
      %20 = vector.multi_reduction <add>, %19, %cst_16 [1] : vector<32x128xf32> to vector<32xf32>
      %21 = vector.shape_cast %20 : vector<32xf32> to vector<32x1xf32>
      %cst_17 = arith.constant 1.280000e+02 : f32
      %22 = vector.broadcast %cst_17 : f32 to vector<32x1xf32>
      %23 = arith.divf %21, %22 : vector<32x1xf32>
      %24 = vector.broadcast %23 : vector<32x1xf32> to vector<32x128xf32>
      %25 = arith.subf %19, %24 : vector<32x128xf32>
      %26 = arith.mulf %25, %25 : vector<32x128xf32>
      %cst_18 = arith.constant dense<0.000000e+00> : vector<32xf32>
      %27 = vector.multi_reduction <add>, %26, %cst_18 [1] : vector<32x128xf32> to vector<32xf32>
      %28 = vector.shape_cast %27 : vector<32xf32> to vector<32x1xf32>
      %cst_19 = arith.constant 1.280000e+02 : f32
      %29 = vector.broadcast %cst_19 : f32 to vector<32x1xf32>
      %30 = arith.divf %28, %29 : vector<32x1xf32>
      %31 = vector.broadcast %23 : vector<32x1xf32> to vector<32x128xf32>
      %32 = arith.subf %19, %31 : vector<32x128xf32>
      %cst_20 = arith.constant 9.99999996E-13 : f32
      %33 = vector.broadcast %cst_20 : f32 to vector<32x1xf32>
      %34 = arith.addf %30, %33 : vector<32x1xf32>
      %35 = math.rsqrt %34 : vector<32x1xf32>
      %36 = vector.broadcast %35 : vector<32x1xf32> to vector<32x128xf32>
      %37 = arith.mulf %32, %36 : vector<32x128xf32>
      %c0_21 = arith.constant 0 : index
      %c0_22 = arith.constant 0 : index
      %38 = vector.load %arg6[%c0_21, %c0_22] : memref<1x128xbf16, #tpu.memory_space<vmem>>, vector<1x128xbf16>
      %39 = arith.extf %38 : vector<1x128xbf16> to vector<1x128xf32>
      %40 = vector.broadcast %39 : vector<1x128xf32> to vector<32x128xf32>
      %41 = arith.mulf %37, %40 : vector<32x128xf32>
      %c0_23 = arith.constant 0 : index
      %c0_24 = arith.constant 0 : index
      %42 = vector.load %arg7[%c0_23, %c0_24] : memref<1x128xbf16, #tpu.memory_space<vmem>>, vector<1x128xbf16>
      %43 = arith.extf %42 : vector<1x128xbf16> to vector<1x128xf32>
      %44 = vector.broadcast %43 : vector<1x128xf32> to vector<32x128xf32>
      %45 = arith.addf %41, %44 : vector<32x128xf32>
      %46 = arith.truncf %45 : vector<32x128xf32> to vector<32x128xbf16>
      %c0_25 = arith.constant 0 : index
      %c0_26 = arith.constant 0 : index
      %47 = vector.load %arg8[%c0_25, %c0_26] : memref<32x128xbf16, #tpu.memory_space<vmem>>, vector<32x128xbf16>
      tpu.vector_store %arg8[%c0_25, %c0_26], %46 {strides = array<i32>} : memref<32x128xbf16, #tpu.memory_space<vmem>>, vector<32x128xbf16>,
    } else {
    }
    return
  }
  func.func @transform_0(%arg0: i32, %arg1: i32) -> (i32, i32) {
    %c0_i32 = arith.constant 0 : i32
    return %arg0, %arg1 : i32, i32
  }
  func.func @transform_1(%arg0: i32, %arg1: i32) -> (i32, i32) {
    %c0_i32 = arith.constant 0 : i32
    %c0_i32_0 = arith.constant 0 : i32
    return %arg1, %c0_i32 : i32, i32
  }
  func.func @transform_2(%arg0: i32, %arg1: i32) -> (i32, i32) {
    %c0_i32 = arith.constant 0 : i32
    %c0_i32_0 = arith.constant 0 : i32
    %c0_i32_1 = arith.constant 0 : i32
    return %c0_i32, %c0_i32_0 : i32, i32
  }
  func.func @transform_3(%arg0: i32, %arg1: i32) -> (i32, i32) {
    %c0_i32 = arith.constant 0 : i32
    %c0_i32_0 = arith.constant 0 : i32
    return %arg0, %c0_i32 : i32, i32
  }
  func.func @transform_4(%arg0: i32, %arg1: i32) -> (i32, i32) {
    %c0_i32 = arith.constant 0 : i32
    %c0_i32_0 = arith.constant 0 : i32
    %c0_i32_1 = arith.constant 0 : i32
    return %c0_i32, %c0_i32_0 : i32, i32
  }
  func.func @transform_5(%arg0: i32, %arg1: i32) -> (i32, i32) {
    %c0_i32 = arith.constant 0 : i32
    %c0_i32_0 = arith.constant 0 : i32
    %c0_i32_1 = arith.constant 0 : i32
    return %c0_i32, %c0_i32_0 : i32, i32
  }
  func.func @transform_6(%arg0: i32, %arg1: i32) -> (i32, i32) {
    %c0_i32 = arith.constant 0 : i32
    %c0_i32_0 = arith.constant 0 : i32
    return %arg0, %c0_i32 : i32, i32
  }
}

module attributes {stable_mosaic.version = 11 : i64} {
  func.func @matmul_bias_act_kernel(%arg0: i32, %arg1: i32, %arg2: i32, %arg3: memref<8x256xbf16, #tpu.memory_space<vmem>>, %arg4: memref<256x128xbf16, #tpu.memory_space<vmem>>, %arg5: memref<1x128xbf16, #tpu.memory_space<vmem>>, %arg6: memref<8x128xbf16, #tpu.memory_space<vmem>>, %arg7: memref<8x128xf32, #tpu.memory_space<vmem>>) attributes {dimension_semantics = [#tpu.dimension_semantics<parallel>, #tpu.dimension_semantics<parallel>, #tpu.dimension_semantics<arbitrary>], iteration_bounds = array<i64: 1, 1, 1>, scalar_prefetch = 0 : i64, scratch_operands = 1 : i64, tpu.core_type = #tpu.core_type<tc>, window_params = [{transform_indices = @transform_0, window_bounds = array<i64: 8, 256>}, {transform_indices = @transform_1, window_bounds = array<i64: 256, 128>}, {pipeline_mode = #tpu.pipeline_mode<synchronous>, transform_indices = @transform_2, window_bounds = array<i64: 1, 128>}, {transform_indices = @transform_3, window_bounds = array<i64: 8, 128>}]} {
    %c0_i32 = arith.constant 0 : i32
    %0 = arith.cmpi eq, %arg2, %c0_i32 : i32
    %1 = arith.extui %0 : i1 to i32
    %c0_i32_0 = arith.constant 0 : i32
    %2 = arith.cmpi ne, %1, %c0_i32_0 : i32
    scf.if %2 {
      %cst_10 = arith.constant 0.000000e+00 : f32
      %12 = vector.broadcast %cst_10 : f32 to vector<8x128xf32>
      %c0_11 = arith.constant 0 : index
      %c0_12 = arith.constant 0 : index
      %13 = vector.load %arg7[%c0_11, %c0_12] : memref<8x128xf32, #tpu.memory_space<vmem>>, vector<8x128xf32>
      tpu.vector_store %arg7[%c0_11, %c0_12], %12 {strides = array<i32>} : memref<8x128xf32, #tpu.memory_space<vmem>>, vector<8x128xf32>,
    } else {
    }
    %c0 = arith.constant 0 : index
    %c0_1 = arith.constant 0 : index
    %3 = vector.load %arg7[%c0, %c0_1] : memref<8x128xf32, #tpu.memory_space<vmem>>, vector<8x128xf32>
    %c0_2 = arith.constant 0 : index
    %c0_3 = arith.constant 0 : index
    %4 = vector.load %arg3[%c0_2, %c0_3] : memref<8x256xbf16, #tpu.memory_space<vmem>>, vector<8x256xbf16>
    %c0_4 = arith.constant 0 : index
    %c0_5 = arith.constant 0 : index
    %5 = vector.load %arg4[%c0_4, %c0_5] : memref<256x128xbf16, #tpu.memory_space<vmem>>, vector<256x128xbf16>
    %cst = arith.constant dense<0.000000e+00> : vector<8x128xf32>
    %6 = tpu.matmul %4, %5, %cst {dimension_numbers = #tpu.dot_dimension_numbers<[1], [0], [0], [1], [0, 0, 1, 1], [], []>} : vector<8x256xbf16>, vector<256x128xbf16>, vector<8x128xf32> -> vector<8x128xf32>
    %7 = arith.addf %3, %6 : vector<8x128xf32>
    %c0_6 = arith.constant 0 : index
    %c0_7 = arith.constant 0 : index
    %8 = vector.load %arg7[%c0_6, %c0_7] : memref<8x128xf32, #tpu.memory_space<vmem>>, vector<8x128xf32>
    tpu.vector_store %arg7[%c0_6, %c0_7], %7 {strides = array<i32>} : memref<8x128xf32, #tpu.memory_space<vmem>>, vector<8x128xf32>,
    %c0_i32_8 = arith.constant 0 : i32
    %9 = arith.cmpi eq, %arg2, %c0_i32_8 : i32
    %10 = arith.extui %9 : i1 to i32
    %c0_i32_9 = arith.constant 0 : i32
    %11 = arith.cmpi ne, %10, %c0_i32_9 : i32
    scf.if %11 {
      %c0_10 = arith.constant 0 : index
      %c0_11 = arith.constant 0 : index
      %12 = vector.load %arg7[%c0_10, %c0_11] : memref<8x128xf32, #tpu.memory_space<vmem>>, vector<8x128xf32>
      %c0_12 = arith.constant 0 : index
      %c0_13 = arith.constant 0 : index
      %13 = vector.load %arg5[%c0_12, %c0_13] : memref<1x128xbf16, #tpu.memory_space<vmem>>, vector<1x128xbf16>
      %14 = arith.extf %13 : vector<1x128xbf16> to vector<1x128xf32>
      %15 = vector.broadcast %14 : vector<1x128xf32> to vector<8x128xf32>
      %16 = arith.addf %12, %15 : vector<8x128xf32>
      %cst_14 = arith.constant 0.000000e+00 : f32
      %17 = vector.broadcast %cst_14 : f32 to vector<8x128xf32>
      %18 = arith.maximumf %16, %17 : vector<8x128xf32>
      %19 = arith.truncf %18 : vector<8x128xf32> to vector<8x128xbf16>
      %c0_15 = arith.constant 0 : index
      %c0_16 = arith.constant 0 : index
      %20 = vector.load %arg6[%c0_15, %c0_16] : memref<8x128xbf16, #tpu.memory_space<vmem>>, vector<8x128xbf16>
      tpu.vector_store %arg6[%c0_15, %c0_16], %19 {strides = array<i32>} : memref<8x128xbf16, #tpu.memory_space<vmem>>, vector<8x128xbf16>,
    } else {
    }
    return
  }
  func.func @transform_0(%arg0: i32, %arg1: i32, %arg2: i32) -> (i32, i32) {
    %c0_i32 = arith.constant 0 : i32
    return %arg0, %arg2 : i32, i32
  }
  func.func @transform_1(%arg0: i32, %arg1: i32, %arg2: i32) -> (i32, i32) {
    %c0_i32 = arith.constant 0 : i32
    return %arg2, %arg1 : i32, i32
  }
  func.func @transform_2(%arg0: i32, %arg1: i32, %arg2: i32) -> (i32, i32) {
    %c0_i32 = arith.constant 0 : i32
    %c0_i32_0 = arith.constant 0 : i32
    return %c0_i32, %arg1 : i32, i32
  }
  func.func @transform_3(%arg0: i32, %arg1: i32, %arg2: i32) -> (i32, i32) {
    %c0_i32 = arith.constant 0 : i32
    return %arg0, %arg1 : i32, i32
  }
}

</mosaic_0001>

<llo_original>
// kernel: toxi_reg_forward.8
$region0: #{toxi_reg_forward.8}
  #allocation0 [shape = 'u32[]', space=smem, size = 0x4, offset = 0x4, fixed_abs, tag = 'smem constant byte address 0x4 - core index']
  #allocation1 [shape = 'u32[144,128]{1,0:T(1,128)}', space=vmem, size = 0x12000, scoped, tag = 'internal scratch']
  #allocation2 [shape = 'f32[32,128]{1,0:T(8,128)}', space=vmem, size = 0x4000, scoped, tag = 'scratch operand']
  %s0 = inlined_call_operand.vmem [shape: bf16[32,128], index: 0, kind: input, shape index: {}]
  %s1 = inlined_call_operand.vmem [shape: bf16[128,128], index: 1, kind: input, shape index: {}]
  %s2 = inlined_call_operand.vmem [shape: bf16[1,128], index: 2, kind: input, shape index: {}]
  %s3 = inlined_call_operand.vmem [shape: bf16[32,128], index: 3, kind: input, shape index: {}]
  %s4 = inlined_call_operand.vmem [shape: bf16[1,128], index: 4, kind: input, shape index: {}]
  %s5 = inlined_call_operand.vmem [shape: bf16[1,128], index: 5, kind: input, shape index: {}]
  %s6 = inlined_call_operand.vmem [shape: bf16[32,128], index: 6, kind: output, shape index: {}]
  %s7 = sld [smem:[#allocation0]]
  $region42: #{toxi_reg_forward.8} parent=0
    _
  %s9 = ssub.s32 1, %s7
  %s10 = scalar_select 0, %s9, %s7
  // Predicated region
  $region2: #{toxi_reg_forward.8} parent=0 // pred_check
    _
  $region3: #{toxi_reg_forward.8} parent=0 // pred_check_branch
    %12 = sbr.rel (0) target = $region5
  $region4: #{toxi_reg_forward.8} parent=0 // pred_region
    _
  $region5: #{toxi_reg_forward.8} parent=0 // pred_fallthru
    _
  // Predicated region
  $region6: #{toxi_reg_forward.8} parent=0 // pred_check
    _
  $region7: #{toxi_reg_forward.8} parent=0 // pred_check_branch
    %14 = sbr.rel (0) target = $region9
  $region8: #{toxi_reg_forward.8} parent=0 // pred_region
    _
  $region9: #{toxi_reg_forward.8} parent=0 // pred_fallthru
    _
  // Predicated region
  $region10: #{toxi_reg_forward.8} parent=0 // pred_check
    _
  $region11: #{toxi_reg_forward.8} parent=0 // pred_check_branch
    %16 = sbr.rel (0) target = $region13
  $region12: #{toxi_reg_forward.8} parent=0 // pred_region
    _
  $region13: #{toxi_reg_forward.8} parent=0 // pred_fallthru
    _
  // Predicated region
  $region14: #{toxi_reg_forward.8} parent=0 // pred_check
    _
  $region15: #{toxi_reg_forward.8} parent=0 // pred_check_branch
    %18 = sbr.rel (0) target = $region17
  $region16: #{toxi_reg_forward.8} parent=0 // pred_region
    _
  $region17: #{toxi_reg_forward.8} parent=0 // pred_fallthru
    _
  // Predicated region
  $region18: #{toxi_reg_forward.8} parent=0 // pred_check
    _
  $region19: #{toxi_reg_forward.8} parent=0 // pred_check_branch
    %20 = sbr.rel (0) target = $region21
  $region20: #{toxi_reg_forward.8} parent=0 // pred_region
    _
  $region21: #{toxi_reg_forward.8} parent=0 // pred_fallthru
    _
  // Predicated region
  $region22: #{toxi_reg_forward.8} parent=0 // pred_check
    _
  $region23: #{toxi_reg_forward.8} parent=0 // pred_check_branch
    %22 = sbr.rel (0) target = $region25
  $region24: #{toxi_reg_forward.8} parent=0 // pred_region
    _
  $region25: #{toxi_reg_forward.8} parent=0 // pred_fallthru
    _
  %p24 = scmp.eq.s32.totalorder 0, 0
  // Predicated region
  $region26: #{toxi_reg_forward.8} parent=0 // pred_check
    %p25 = pneg %p24
  $region27: #{toxi_reg_forward.8} parent=0 // pred_check_branch
    %27 = sbr.rel (%p25) target = $region29
  $region28: #{toxi_reg_forward.8} parent=0 // pred_region
    %28 = vst [vmem:[#allocation2] sm:$0xff] 0.0
    %29 = vst [vmem:[#allocation2 + $0x8] sm:$0xff] 0.0
    %30 = vst [vmem:[#allocation2 + $0x10] sm:$0xff] 0.0
    %31 = vst [vmem:[#allocation2 + $0x18] sm:$0xff] 0.0
  $region29: #{toxi_reg_forward.8} parent=0 // pred_fallthru
    _
  %v32 = vld [vmem:[#allocation2] sm:$0xff]
  %v33 = vld [vmem:[#allocation2 + $0x8] sm:$0xff]
  %v34 = vld [vmem:[#allocation2 + $0x10] sm:$0xff]
  %v35 = vld [vmem:[#allocation2 + $0x18] sm:$0xff]
  %v36 = vld [vmem:[%s0] sm:$0xf]
  %v37 = vld [vmem:[%s0 + $0x4] sm:$0xf]
  %v38 = vld [vmem:[%s0 + $0x8] sm:$0xf]
  %v39 = vld [vmem:[%s0 + $0xc] sm:$0xf]
  %v40 = vld [vmem:[%s1] sm:$0xf]
  %v41 = vld [vmem:[%s1 + $0x4] sm:$0xf]
  %v42 = vld [vmem:[%s1 + $0x8] sm:$0xf]
  %v43 = vld [vmem:[%s1 + $0xc] sm:$0xf]
  %v44 = vld [vmem:[%s1 + $0x10] sm:$0xf]
  %v45 = vld [vmem:[%s1 + $0x14] sm:$0xf]
  %v46 = vld [vmem:[%s1 + $0x18] sm:$0xf]
  %v47 = vld [vmem:[%s1 + $0x1c] sm:$0xf]
  %v48 = vld [vmem:[%s1 + $0x20] sm:$0xf]
  %v49 = vld [vmem:[%s1 + $0x24] sm:$0xf]
  %v50 = vld [vmem:[%s1 + $0x28] sm:$0xf]
  %v51 = vld [vmem:[%s1 + $0x2c] sm:$0xf]
  %v52 = vld [vmem:[%s1 + $0x30] sm:$0xf]
  %v53 = vld [vmem:[%s1 + $0x34] sm:$0xf]
  %v54 = vld [vmem:[%s1 + $0x38] sm:$0xf]
  %v55 = vld [vmem:[%s1 + $0x3c] sm:$0xf]
  %v60 = vunpack.c.l.b16 %v36
  %v61 = vunpack.c.l.b16 %v37
  %v62 = vunpack.c.l.b16 %v38
  %v63 = vunpack.c.l.b16 %v39
  %v64 = vpack.c.b16 %v61, %v60
  %v65 = vpack.c.b16 %v63, %v62
  %v84 = vunpack.c.l.b16 %v40
  %v85 = vunpack.c.l.b16 %v41
  %v86 = vunpack.c.l.b16 %v42
  %v87 = vunpack.c.l.b16 %v43
  %v88 = vunpack.c.l.b16 %v44
  %v89 = vunpack.c.l.b16 %v45
  %v90 = vunpack.c.l.b16 %v46
  %v91 = vunpack.c.l.b16 %v47
  %v92 = vunpack.c.l.b16 %v48
  %v93 = vunpack.c.l.b16 %v49
  %v94 = vunpack.c.l.b16 %v50
  %v95 = vunpack.c.l.b16 %v51
  %v96 = vunpack.c.l.b16 %v52
  %v97 = vunpack.c.l.b16 %v53
  %v98 = vunpack.c.l.b16 %v54
  %v99 = vunpack.c.l.b16 %v55
  %v100 = vpack.c.b16 %v85, %v84
  %v101 = vpack.c.b16 %v87, %v86
  %v102 = vpack.c.b16 %v89, %v88
  %v103 = vpack.c.b16 %v91, %v90
  %v104 = vpack.c.b16 %v93, %v92
  %v105 = vpack.c.b16 %v95, %v94
  %v106 = vpack.c.b16 %v97, %v96
  %v107 = vpack.c.b16 %v99, %v98
  %116 = vmatprep.subr.bf16.mxu0 0
  %117 = vmatpush1.bf16.msra.mxu0 %v107
  %118 = vmatprep.subr.bf16.mxu0 0
  %119 = vmatpush1.bf16.msra.mxu0 %v106
  %120 = vmatprep.subr.bf16.mxu0 0
  %121 = vmatpush1.bf16.msra.mxu0 %v105
  %122 = vmatprep.subr.bf16.mxu0 0
  %123 = vmatpush1.bf16.msra.mxu0 %v104
  %124 = vmatprep.subr.bf16.mxu0 0
  %125 = vmatpush1.bf16.msra.mxu0 %v103
  %126 = vmatprep.subr.bf16.mxu0 0
  %127 = vmatpush1.bf16.msra.mxu0 %v102
  %128 = vmatprep.subr.bf16.mxu0 0
  %129 = vmatpush1.bf16.msra.mxu0 %v101
  %130 = vmatprep.subr.bf16.mxu0 0
  %131 = vmatpush1.bf16.msra.mxu0 %v100
  %132 = vmatprep.subr.bf16.mxu0 0
  %133 = vmatpush2.bf16.msra.mxu0 0
  %134 = vmatprep.subr.bf16.mxu0 0
  %135 = vmatpush2.bf16.msra.mxu0 0
  %136 = vmatprep.subr.bf16.mxu0 0
  %137 = vmatpush2.bf16.msra.mxu0 0
  %138 = vmatprep.subr.bf16.mxu0 0
  %139 = vmatpush2.bf16.msra.mxu0 0
  %140 = vmatprep.subr.bf16.mxu0 0
  %141 = vmatpush2.bf16.msra.mxu0 0
  %142 = vmatprep.subr.bf16.mxu0 0
  %143 = vmatpush2.bf16.msra.mxu0 0
  %144 = vmatprep.subr.bf16.mxu0 0
  %145 = vmatpush2.bf16.msra.mxu0 0
  %146 = vmatprep.subr.bf16.mxu0 0
  %147 = vmatpush2.bf16.msra.mxu0 0
  %148 = vmatprep.mubr.bf16.mxu0 0
  %149 = vmatmul.mubr.bf16.gmra.mxu0 %v64
  %v150 = vpop.f32.mrf.mxu0
  %v151 = vadd.f32 0.0, %v150
  %v152 = vpop.f32.mrf.mxu0
  %v153 = vpop.f32.mrf.mxu0
  %v154 = vadd.f32 0.0, %v153
  %v155 = vpop.f32.mrf.mxu0
  %156 = vmatprep.mubr.bf16.mxu0 0
  %157 = vmatmul.mubr.bf16.gmra.mxu0 %v65
  %v158 = vpop.f32.mrf.mxu0
  %v159 = vadd.f32 0.0, %v158
  %v160 = vpop.f32.mrf.mxu0
  %v161 = vpop.f32.mrf.mxu0
  %v162 = vadd.f32 0.0, %v161
  %v163 = vpop.f32.mrf.mxu0
  %164 = vdwg.mxu0
  %v165 = vadd.f32 %v32, %v151
  %v166 = vadd.f32 %v33, %v154
  %v167 = vadd.f32 %v34, %v159
  %v168 = vadd.f32 %v35, %v162
  %169 = vst [vmem:[#allocation2] sm:$0xff] %v165
  %170 = vst [vmem:[#allocation2 + $0x8] sm:$0xff] %v166
  %171 = vst [vmem:[#allocation2 + $0x10] sm:$0xff] %v167
  %172 = vst [vmem:[#allocation2 + $0x18] sm:$0xff] %v168
  // Predicated region
  $region30: #{toxi_reg_forward.8} parent=0 // pred_check
    %p173 = pneg %p24
  $region31: #{toxi_reg_forward.8} parent=0 // pred_check_branch
    %175 = sbr.rel (%p173) target = $region33
  $region32: #{toxi_reg_forward.8} parent=0 // pred_region
    %v176 = vld [vmem:[#allocation2] sm:$0xff]
    %v177 = vld [vmem:[#allocation2 + $0x8] sm:$0xff]
    %v178 = vld [vmem:[#allocation2 + $0x10] sm:$0xff]
    %v179 = vld [vmem:[#allocation2 + $0x18] sm:$0xff]
    %v180 = vld [vmem:[%s2] sm:$0x1]
    %v181 = vunpack.c.l.bf16 %v180
    %v182 = vlaneseq
    %v183 = vshrl.u32 %v182, 7
    %v184 = vsub.s32 0, %v183
    %v185 = vrot.slane %v181, %v184
    %v186 = vadd.f32 %v176, %v185
    %v187 = vadd.f32 %v177, %v185
    %v188 = vadd.f32 %v178, %v185
    %v189 = vadd.f32 %v179, %v185
    %v190 = vld [vmem:[%s3] sm:$0xf]
    %v191 = vld [vmem:[%s3 + $0x4] sm:$0xf]
    %v192 = vld [vmem:[%s3 + $0x8] sm:$0xf]
    %v193 = vld [vmem:[%s3 + $0xc] sm:$0xf]
    %v194 = vunpack.c.l.bf16 %v190
    %v195 = vunpack.c.l.bf16 %v191
    %v196 = vunpack.c.l.bf16 %v192
    %v197 = vunpack.c.l.bf16 %v193
    %v198 = vadd.f32 %v186, %v194
    %v199 = vadd.f32 %v187, %v195
    %v200 = vadd.f32 %v188, %v196
    %v201 = vadd.f32 %v189, %v197
    %202 = vadd.xlane.f32.xlu0 %v198
    %v203 = vpop.xlane.xlu0 %202
    %204 = vadd.xlane.f32.xlu0 %v199
    %v205 = vpop.xlane.xlu0 %204
    %206 = vadd.xlane.f32.xlu0 %v200
    %v207 = vpop.xlane.xlu0 %206
    %208 = vadd.xlane.f32.xlu0 %v201
    %v209 = vpop.xlane.xlu0 %208
    %v210 = vrcp.pop 128.0
    %v211 = vmul.f32 %v203, %v210
    %v212 = vmul.f32 %v205, %v210
    %v213 = vmul.f32 %v207, %v210
    %v214 = vmul.f32 %v209, %v210
    %v215 = vsub.f32 %v198, %v211
    %v216 = vsub.f32 %v199, %v212
    %v217 = vsub.f32 %v200, %v213
    %v218 = vsub.f32 %v201, %v214
    %v219 = vmul.f32 %v215, %v215
    %v220 = vmul.f32 %v216, %v216
    %v221 = vmul.f32 %v217, %v217
    %v222 = vmul.f32 %v218, %v218
    %223 = vadd.xlane.f32.xlu0 %v219
    %v224 = vpop.xlane.xlu0 %223
    %225 = vadd.xlane.f32.xlu0 %v220
    %v226 = vpop.xlane.xlu0 %225
    %227 = vadd.xlane.f32.xlu0 %v221
    %v228 = vpop.xlane.xlu0 %227
    %229 = vadd.xlane.f32.xlu0 %v222
    %v230 = vpop.xlane.xlu0 %229
    %v231 = vmul.f32 %v224, %v210
    %v232 = vmul.f32 %v226, %v210
    %v233 = vmul.f32 %v228, %v210
    %v234 = vmul.f32 %v230, %v210
    %v235 = vadd.f32 %v231, 1e-12
    %v236 = vadd.f32 %v232, 1e-12
    %v237 = vadd.f32 %v233, 1e-12
    %v238 = vadd.f32 %v234, 1e-12
    %v239 = vrsqrt.pop %v235
    %v240 = vrsqrt.pop %v236
    %v241 = vrsqrt.pop %v237
    %v242 = vrsqrt.pop %v238
    %v243 = vmul.f32 %v215, %v239
    %v244 = vmul.f32 %v216, %v240
    %v245 = vmul.f32 %v217, %v241
    %v246 = vmul.f32 %v218, %v242
    %v247 = vld [vmem:[%s4] sm:$0x1]
    %v248 = vunpack.c.l.bf16 %v247
    %v249 = vlaneseq
    %v250 = vshrl.u32 %v249, 7
    %v251 = vsub.s32 0, %v250
    %v252 = vrot.slane %v248, %v251
    %v253 = vmul.f32 %v243, %v252
    %v254 = vmul.f32 %v244, %v252
    %v255 = vmul.f32 %v245, %v252
    %v256 = vmul.f32 %v246, %v252
    %v257 = vld [vmem:[%s5] sm:$0x1]
    %v258 = vunpack.c.l.bf16 %v257
    %v259 = vlaneseq
    %v260 = vshrl.u32 %v259, 7
    %v261 = vsub.s32 0, %v260
    %v262 = vrot.slane %v258, %v261
    %v263 = vadd.f32 %v253, %v262
    %v264 = vadd.f32 %v254, %v262
    %v265 = vadd.f32 %v255, %v262
    %v266 = vadd.f32 %v256, %v262
    %v267 = vpack.c.bf16 %v264, %v263
    %v268 = vpack.c.bf16 %v266, %v265
    %v271 = vunpack.c.l.b16 %v267
    %v272 = vunpack.c.h.b16 %v267
    %v273 = vunpack.c.l.b16 %v268
    %v274 = vunpack.c.h.b16 %v268
    %v275 = vpack.c.b16 %v271, %v271
    %v276 = vpack.c.b16 %v272, %v272
    %v277 = vpack.c.b16 %v273, %v273
    %v278 = vpack.c.b16 %v274, %v274
    %283 = vst [vmem:[%s6] sm:$0xf] %v275
    %284 = vst [vmem:[%s6 + $0x4] sm:$0xf] %v276
    %285 = vst [vmem:[%s6 + $0x8] sm:$0xf] %v277
    %286 = vst [vmem:[%s6 + $0xc] sm:$0xf] %v278
  $region33: #{toxi_reg_forward.8} parent=0 // pred_fallthru
    _
  // Predicated region
  $region34: #{toxi_reg_forward.8} parent=0 // pred_check
    _
  $region35: #{toxi_reg_forward.8} parent=0 // pred_check_branch
    %288 = sbr.rel (0) target = $region37
  $region36: #{toxi_reg_forward.8} parent=0 // pred_region
    _
  $region37: #{toxi_reg_forward.8} parent=0 // pred_fallthru
    _
  // Predicated region
  $region38: #{toxi_reg_forward.8} parent=0 // pred_check
    _
  $region39: #{toxi_reg_forward.8} parent=0 // pred_check_branch
    %290 = sbr.rel (0) target = $region41
  $region40: #{toxi_reg_forward.8} parent=0 // pred_region
    _
  $region41: #{toxi_reg_forward.8} parent=0 // pred_fallthru
    _

// kernel: toxi_reg_forward.9
$region0: #{toxi_reg_forward.9}
  #allocation0 [shape = 'u32[]', space=smem, size = 0x4, offset = 0x4, fixed_abs, tag = 'smem constant byte address 0x4 - core index']
  #allocation1 [shape = 'u32[144,128]{1,0:T(1,128)}', space=vmem, size = 0x12000, scoped, tag = 'internal scratch']
  #allocation2 [shape = 'f32[32,256]{1,0:T(8,128)}', space=vmem, size = 0x8000, scoped, tag = 'scratch operand']
  %s0 = inlined_call_operand.vmem [shape: bf16[32,128], index: 0, kind: input, shape index: {}]
  %s1 = inlined_call_operand.vmem [shape: bf16[128,512], index: 1, kind: input, shape index: {}]
  %s2 = inlined_call_operand.vmem [shape: bf16[1,512], index: 2, kind: input, shape index: {}]
  %s3 = inlined_call_operand.vmem [shape: bf16[32,512], index: 3, kind: output, shape index: {}]
  %s4 = sld [smem:[#allocation0]]
  $region125: #{toxi_reg_forward.9} parent=0
    _
  %s6 = ssub.s32 1, %s4
  %s7 = scalar_select 0, %s6, %s4
  $region1: #{toxi_reg_forward.9} parent=0
    #allocation3 [shape = 'u8[131072]{0}', space=vmem, size = 0x20000, scoped, tag = 'input window, operand 1']
    #allocation4 [shape = 'u8[32768]{0}', space=vmem, size = 0x8000, scoped, tag = 'output window, operand 0']
    loop: start=0, step=1, limit=4
    $region2: #{toxi_reg_forward.9} parent=1 // loop_pre_header
      _
    $region3: #{toxi_reg_forward.9} parent=1 // loop_header
      %s9 = sphi 0, %s13
      %p10 = scmp.ge.s32.totalorder %s9, 4
      %s16 = sphi 0, %s35
      %s17 = sphi 0, %s31
      %s18 = sphi 0, %s27
      %s19 = sphi 0, %s16
      %s20 = sphi 0, %s17
      %s21 = sphi 0, %s18
      %s22 = sphi 0, %s19
      %s23 = sphi 0, %s20
      %s24 = sphi 0, %s21
      %s40 = sphi 0, %s42
      %s43 = sphi 0, %s40
      %s44 = sphi 0, %s43
      %s60 = sphi 0, %s44
      %s68 = sphi 0, %s70
      %s71 = sphi 0, %s68
      %s72 = sphi 0, %s71
      %s88 = sphi 0, %s72
      %s94 = sphi 0, %s96
      %s97 = sphi 0, %s94
      %s98 = sphi 0, %s97
      %s114 = sphi 0, %s98
      %s122 = sphi 0, %s124
      %s125 = sphi 0, %s122
      %s126 = sphi 0, %s125
      %s142 = sphi 0, %s126
    $region4: #{toxi_reg_forward.9} parent=1 // loop_header_branch
      %12 = sbr.rel (%p10) target = $region8
    $region5: #{toxi_reg_forward.9} parent=1 // loop_body
      %s14 = ssub.s32 %s9, 1
      %s15 = ssub.s32 %s9, 2
      %s25 = sadd.s32 1, %s18
      %p26 = scmp.ge.s32.totalorder %s25, 1
      %s27 = scalar_select %p26, 0, %s25
      %s28 = sadd.s32 1, %s17
      %s29 = scalar_select %p26, %s28, %s17
      %p30 = scmp.ge.s32.totalorder %s29, 2
      %s31 = scalar_select %p30, 0, %s29
      %s32 = sadd.s32 1, %s16
      %s33 = scalar_select %p30, %s32, %s16
      %p34 = scmp.ge.s32.totalorder %s33, 1
      %s35 = scalar_select %p34, 0, %s33
      %s36 = ssub.s32 %s16, %s35
      %s37 = ssub.s32 %s18, %s27
      %s38 = sor.u32 %s36, %s37
      %p39 = scmp.eq.s32.totalorder %s38, 0
      %s41 = sadd.s32 %s40, 1
      %s42 = scalar_select %p39, %s40, %s41
      %p45 = pneg %p39
      %p46 = scmp.eq.s32.totalorder %s9, 1
      %p47 = por %p45, %p46
      %p48 = scmp.ne.s32.totalorder %s40, %s43
      %p49 = scmp.eq.s32.totalorder %s9, 0
      %p50 = por %p48, %p49
      %p51 = scmp.ne.s32.totalorder %s40, %s43
      %p52 = scmp.eq.s32.totalorder %s14, 1
      %p53 = por %p51, %p52
      %p54 = scmp.ne.s32.totalorder %s43, %s44
      %p55 = scmp.eq.s32.totalorder %s14, 0
      %p56 = por %p54, %p55
      %p57 = scmp.ne.s32.totalorder %s43, %s44
      %p58 = scmp.eq.s32.totalorder %s15, 1
      %p59 = por %p57, %p58
      %p61 = scmp.ne.s32.totalorder %s44, %s60
      %p62 = scmp.eq.s32.totalorder %s15, 0
      %p63 = por %p61, %p62
      %s64 = ssub.s32 %s18, %s27
      %s65 = ssub.s32 %s17, %s31
      %s66 = sor.u32 %s64, %s65
      %p67 = scmp.eq.s32.totalorder %s66, 0
      %s69 = sadd.s32 %s68, 1
      %s70 = scalar_select %p67, %s68, %s69
      %p73 = pneg %p67
      %p74 = scmp.eq.s32.totalorder %s9, 1
      %p75 = por %p73, %p74
      %p76 = scmp.ne.s32.totalorder %s68, %s71
      %p77 = scmp.eq.s32.totalorder %s9, 0
      %p78 = por %p76, %p77
      %p79 = scmp.ne.s32.totalorder %s68, %s71
      %p80 = scmp.eq.s32.totalorder %s14, 1
      %p81 = por %p79, %p80
      %p82 = scmp.ne.s32.totalorder %s71, %s72
      %p83 = scmp.eq.s32.totalorder %s14, 0
      %p84 = por %p82, %p83
      %p85 = scmp.ne.s32.totalorder %s71, %s72
      %p86 = scmp.eq.s32.totalorder %s15, 1
      %p87 = por %p85, %p86
      %p89 = scmp.ne.s32.totalorder %s72, %s88
      %p90 = scmp.eq.s32.totalorder %s15, 0
      %p91 = por %p89, %p90
      %s92 = ssub.s32 %s17, %s31
      %p93 = scmp.eq.s32.totalorder %s92, 0
      %s95 = sadd.s32 %s94, 1
      %s96 = scalar_select %p93, %s94, %s95
      %p99 = pneg %p93
      %p100 = scmp.eq.s32.totalorder %s9, 1
      %p101 = por %p99, %p100
      %p102 = scmp.ne.s32.totalorder %s94, %s97
      %p103 = scmp.eq.s32.totalorder %s9, 0
      %p104 = por %p102, %p103
      %p105 = scmp.ne.s32.totalorder %s94, %s97
      %p106 = scmp.eq.s32.totalorder %s14, 1
      %p107 = por %p105, %p106
      %p108 = scmp.ne.s32.totalorder %s97, %s98
      %p109 = scmp.eq.s32.totalorder %s14, 0
      %p110 = por %p108, %p109
      %p111 = scmp.ne.s32.totalorder %s97, %s98
      %p112 = scmp.eq.s32.totalorder %s15, 1
      %p113 = por %p111, %p112
      %p115 = scmp.ne.s32.totalorder %s98, %s114
      %p116 = scmp.eq.s32.totalorder %s15, 0
      %p117 = por %p115, %p116
      %s118 = ssub.s32 %s16, %s35
      %s119 = ssub.s32 %s17, %s31
      %s120 = sor.u32 %s118, %s119
      %p121 = scmp.eq.s32.totalorder %s120, 0
      %s123 = sadd.s32 %s122, 1
      %s124 = scalar_select %p121, %s122, %s123
      %p127 = pneg %p121
      %p128 = scmp.eq.s32.totalorder %s9, 1
      %p129 = por %p127, %p128
      %p130 = scmp.ne.s32.totalorder %s122, %s125
      %p131 = scmp.eq.s32.totalorder %s9, 0
      %p132 = por %p130, %p131
      %p133 = scmp.ne.s32.totalorder %s122, %s125
      %p134 = scmp.eq.s32.totalorder %s14, 1
      %p135 = por %p133, %p134
      %p136 = scmp.ne.s32.totalorder %s125, %s126
      %p137 = scmp.eq.s32.totalorder %s14, 0
      %p138 = por %p136, %p137
      %p139 = scmp.ne.s32.totalorder %s125, %s126
      %p140 = scmp.eq.s32.totalorder %s15, 1
      %p141 = por %p139, %p140
      %p143 = scmp.ne.s32.totalorder %s126, %s142
      %p144 = scmp.eq.s32.totalorder %s15, 0
      %p145 = por %p143, %p144
      %p146 = scmp.le.s32.totalorder 1, %s9
      %p147 = scmp.lt.s32.totalorder %s9, 3
      %p148 = pnand %p146, %p147
      %p149 = pneg %p148
      // Predicated region
      $region9: #{toxi_reg_forward.9} parent=5 // pred_check
        _
      $region10: #{toxi_reg_forward.9} parent=5 // pred_check_branch
        %151 = sbr.rel (%p148) target = $region12
      $region11: #{toxi_reg_forward.9} parent=5 // pred_region
        %s152 = ssub.s32 %s9, 1
        // Predicated region
        $region13: #{toxi_reg_forward.9} parent=11 // pred_check
          %p153 = pneg %p56
        $region14: #{toxi_reg_forward.9} parent=11 // pred_check_branch
          %155 = sbr.rel (%p153) target = $region16
        $region15: #{toxi_reg_forward.9} parent=11 // pred_region
          %s156 = smul.u32 4, %s19
          %p157 = scmp.lt.s32.totalorder %s156, 3
          %s158 = scalar_select %p157, %s156, 3
          %p159 = scmp.lt.s32.totalorder %s21, 0
          %s160 = scalar_select %p159, %s21, 0
          %s161 = sadd.s32 %s160, %s158
          %s162 = smul.addr %s161, 4
          %s163 = scalar_lea.vmem %s0, %s162
          %s164 = smul.u32 4, %s19
        $region16: #{toxi_reg_forward.9} parent=11 // pred_fallthru
          _
        // Predicated region
        $region17: #{toxi_reg_forward.9} parent=11 // pred_check
          %p165 = pneg %p110
        $region18: #{toxi_reg_forward.9} parent=11 // pred_check_branch
          %167 = sbr.rel (%p165) target = $region20
        $region19: #{toxi_reg_forward.9} parent=11 // pred_region
          %s168 = smul.u32 2, %s20
          %p169 = scmp.lt.s32.totalorder %s168, 3
          %s170 = scalar_select %p169, %s168, 3
          %s171 = scalar_lea.vmem %s2, %s170
          %s172 = smul.u32 2, %s20
        $region20: #{toxi_reg_forward.9} parent=11 // pred_fallthru
          _
      $region12: #{toxi_reg_forward.9} parent=5 // pred_fallthru
        _
      %p173 = scmp.lt.s32.totalorder %s9, 2
      // Predicated region
      $region21: #{toxi_reg_forward.9} parent=5 // pred_check
        %p174 = pneg %p173
      $region22: #{toxi_reg_forward.9} parent=5 // pred_check_branch
        %176 = sbr.rel (%p174) target = $region24
      $region23: #{toxi_reg_forward.9} parent=5 // pred_region
        // Predicated region
        $region25: #{toxi_reg_forward.9} parent=23 // pred_check
          %p177 = pneg %p78
        $region26: #{toxi_reg_forward.9} parent=23 // pred_check_branch
          %179 = sbr.rel (%p177) target = $region28
        $region27: #{toxi_reg_forward.9} parent=23 // pred_region
          %s180 = sand.u32 %s68, 1
          %s181 = sand.u32 %s68, 1
          %s182 = smul.addr %s181, 128
          %s183 = scalar_lea.vmem [#allocation3], %s182
          %s184 = smul.u32 16, %s18
          %s185 = smul.u32 2, %s17
          %s186 = smul.addr %s184, 4
          %s187 = sadd.s32 %s185, %s186
          %s188 = smul.addr %s187, 4
          %s189 = scalar_lea.vmem %s1, %s188
          // Predicated region
          $region29: #{toxi_reg_forward.9} parent=27 // pred_check
            _
          $region30: #{toxi_reg_forward.9} parent=27 // pred_check_branch
            %191 = sbr.rel (0) target = $region32
          $region31: #{toxi_reg_forward.9} parent=27 // pred_region
            // Predicated region
            $region33: #{toxi_reg_forward.9} parent=31 // pred_check
              _
            $region34: #{toxi_reg_forward.9} parent=31 // pred_check_branch
              %193 = sbr.rel (0) target = $region36
            $region35: #{toxi_reg_forward.9} parent=31 // pred_region
              // Predicated region
              $region48: #{toxi_reg_forward.9} parent=35 // pred_check
                _
              $region49: #{toxi_reg_forward.9} parent=35 // pred_check_branch
                %239 = sbr.rel (0) target = $region51
              $region50: #{toxi_reg_forward.9} parent=35 // pred_region
                loop: start=0, step=1, limit=1
                $region52: #{toxi_reg_forward.9} parent=50 // loop_pre_header
                  _
                $region53: #{toxi_reg_forward.9} parent=50 // loop_header
                  %s241 = sphi 0, %s245
                  %p242 = scmp.ge.s32.totalorder %s241, 1
                  %s246 = sphi %s189, %s189
                  %s247 = sphi %s183, %s183
                $region54: #{toxi_reg_forward.9} parent=50 // loop_header_branch
                  %244 = sbr.rel (%p242) target = $region58
                $region55: #{toxi_reg_forward.9} parent=50 // loop_body
                  %v248 = vld [vmem:[%s246] sm:$0xff]
                  %249 = vst [vmem:[%s247] sm:$0xff] %v248
                  %v250 = vld [vmem:[%s246 + $0x10] sm:$0xff]
                  %251 = vst [vmem:[%s247 + $0x8] sm:$0xff] %v250
                  %v252 = vld [vmem:[%s246 + $0x20] sm:$0xff]
                  %253 = vst [vmem:[%s247 + $0x10] sm:$0xff] %v252
                  %v254 = vld [vmem:[%s246 + $0x30] sm:$0xff]
                  %255 = vst [vmem:[%s247 + $0x18] sm:$0xff] %v254
                  %v256 = vld [vmem:[%s246 + $0x40] sm:$0xff]
                  %257 = vst [vmem:[%s247 + $0x20] sm:$0xff] %v256
                  %v258 = vld [vmem:[%s246 + $0x50] sm:$0xff]
                  %259 = vst [vmem:[%s247 + $0x28] sm:$0xff] %v258
                  %v260 = vld [vmem:[%s246 + $0x60] sm:$0xff]
                  %261 = vst [vmem:[%s247 + $0x30] sm:$0xff] %v260
                  %v262 = vld [vmem:[%s246 + $0x70] sm:$0xff]
                  %263 = vst [vmem:[%s247 + $0x38] sm:$0xff] %v262
                  %v264 = vld [vmem:[%s246 + $0x80] sm:$0xff]
                  %265 = vst [vmem:[%s247 + $0x40] sm:$0xff] %v264
                  %v266 = vld [vmem:[%s246 + $0x90] sm:$0xff]
                  %267 = vst [vmem:[%s247 + $0x48] sm:$0xff] %v266
                  %v268 = vld [vmem:[%s246 + $0xa0] sm:$0xff]
                  %269 = vst [vmem:[%s247 + $0x50] sm:$0xff] %v268
                  %v270 = vld [vmem:[%s246 + $0xb0] sm:$0xff]
                  %271 = vst [vmem:[%s247 + $0x58] sm:$0xff] %v270
                  %v272 = vld [vmem:[%s246 + $0xc0] sm:$0xff]
                  %273 = vst [vmem:[%s247 + $0x60] sm:$0xff] %v272
                  %v274 = vld [vmem:[%s246 + $0xd0] sm:$0xff]
                  %275 = vst [vmem:[%s247 + $0x68] sm:$0xff] %v274
                  %v276 = vld [vmem:[%s246 + $0xe0] sm:$0xff]
                  %277 = vst [vmem:[%s247 + $0x70] sm:$0xff] %v276
                  %v278 = vld [vmem:[%s246 + $0xf0] sm:$0xff]
                  %279 = vst [vmem:[%s247 + $0x78] sm:$0xff] %v278
                $region56: #{toxi_reg_forward.9} parent=50 // loop_footer
                  %s245 = sadd.s32 1, %s241
                $region57: #{toxi_reg_forward.9} parent=50 // loop_footer_branch
                  %240 = sbr.rel target = $region53
                $region58: #{toxi_reg_forward.9} parent=50 // loop_exit
                  _
              $region51: #{toxi_reg_forward.9} parent=35 // pred_fallthru
                _
              // Predicated region
              $region59: #{toxi_reg_forward.9} parent=35 // pred_check
                _
              $region60: #{toxi_reg_forward.9} parent=35 // pred_check_branch
                %281 = sbr.rel target = $region62
              $region61: #{toxi_reg_forward.9} parent=35 // pred_region
                _
              $region62: #{toxi_reg_forward.9} parent=35 // pred_fallthru
                _
            $region36: #{toxi_reg_forward.9} parent=31 // pred_fallthru
              _
            // Predicated region
            $region37: #{toxi_reg_forward.9} parent=31 // pred_check
              _
            $region38: #{toxi_reg_forward.9} parent=31 // pred_check_branch
              %195 = sbr.rel target = $region40
            $region39: #{toxi_reg_forward.9} parent=31 // pred_region
              %s197 = ssub.s32 256, 1
              loop: start=0, step=1, limit=1
              $region41: #{toxi_reg_forward.9} parent=39 // loop_pre_header
                _
              $region42: #{toxi_reg_forward.9} parent=39 // loop_header
                %s199 = sphi 0, %s203
                %p200 = scmp.ge.s32.totalorder %s199, 1
                %s204 = sphi %s189, %s189
                %s205 = sphi %s183, %s183
              $region43: #{toxi_reg_forward.9} parent=39 // loop_header_branch
                %202 = sbr.rel (%p200) target = $region47
              $region44: #{toxi_reg_forward.9} parent=39 // loop_body
                %v206 = vld [vmem:[%s204] sm:%s197]
                %207 = vst [vmem:[%s205] sm:%s197] %v206
                %v208 = vld [vmem:[%s204 + $0x10] sm:%s197]
                %209 = vst [vmem:[%s205 + $0x8] sm:%s197] %v208
                %v210 = vld [vmem:[%s204 + $0x20] sm:%s197]
                %211 = vst [vmem:[%s205 + $0x10] sm:%s197] %v210
                %v212 = vld [vmem:[%s204 + $0x30] sm:%s197]
                %213 = vst [vmem:[%s205 + $0x18] sm:%s197] %v212
                %v214 = vld [vmem:[%s204 + $0x40] sm:%s197]
                %215 = vst [vmem:[%s205 + $0x20] sm:%s197] %v214
                %v216 = vld [vmem:[%s204 + $0x50] sm:%s197]
                %217 = vst [vmem:[%s205 + $0x28] sm:%s197] %v216
                %v218 = vld [vmem:[%s204 + $0x60] sm:%s197]
                %219 = vst [vmem:[%s205 + $0x30] sm:%s197] %v218
                %v220 = vld [vmem:[%s204 + $0x70] sm:%s197]
                %221 = vst [vmem:[%s205 + $0x38] sm:%s197] %v220
                %v222 = vld [vmem:[%s204 + $0x80] sm:%s197]
                %223 = vst [vmem:[%s205 + $0x40] sm:%s197] %v222
                %v224 = vld [vmem:[%s204 + $0x90] sm:%s197]
                %225 = vst [vmem:[%s205 + $0x48] sm:%s197] %v224
                %v226 = vld [vmem:[%s204 + $0xa0] sm:%s197]
                %227 = vst [vmem:[%s205 + $0x50] sm:%s197] %v226
                %v228 = vld [vmem:[%s204 + $0xb0] sm:%s197]
                %229 = vst [vmem:[%s205 + $0x58] sm:%s197] %v228
                %v230 = vld [vmem:[%s204 + $0xc0] sm:%s197]
                %231 = vst [vmem:[%s205 + $0x60] sm:%s197] %v230
                %v232 = vld [vmem:[%s204 + $0xd0] sm:%s197]
                %233 = vst [vmem:[%s205 + $0x68] sm:%s197] %v232
                %v234 = vld [vmem:[%s204 + $0xe0] sm:%s197]
                %235 = vst [vmem:[%s205 + $0x70] sm:%s197] %v234
                %v236 = vld [vmem:[%s204 + $0xf0] sm:%s197]
                %237 = vst [vmem:[%s205 + $0x78] sm:%s197] %v236
              $region45: #{toxi_reg_forward.9} parent=39 // loop_footer
                %s203 = sadd.s32 1, %s199
              $region46: #{toxi_reg_forward.9} parent=39 // loop_footer_branch
                %198 = sbr.rel target = $region42
              $region47: #{toxi_reg_forward.9} parent=39 // loop_exit
                _
            $region40: #{toxi_reg_forward.9} parent=31 // pred_fallthru
              _
          $region32: #{toxi_reg_forward.9} parent=27 // pred_fallthru
            _
          %282 = vnop
        $region28: #{toxi_reg_forward.9} parent=23 // pred_fallthru
          _
      $region24: #{toxi_reg_forward.9} parent=5 // pred_fallthru
        _
      %p283 = scmp.le.s32.totalorder 1, %s9
      %p284 = scmp.lt.s32.totalorder %s9, 3
      %p285 = pnand %p283, %p284
      %p286 = pneg %p285
      // Predicated region
      $region63: #{toxi_reg_forward.9} parent=5 // pred_check
        _
      $region64: #{toxi_reg_forward.9} parent=5 // pred_check_branch
        %288 = sbr.rel (%p285) target = $region66
      $region65: #{toxi_reg_forward.9} parent=5 // pred_region
        %s289 = ssub.s32 %s9, 1
        %s290 = sand.u32 %s71, 1
        %s291 = sand.u32 %s71, 1
        %s292 = smul.addr %s291, 128
        %s293 = scalar_lea.vmem [#allocation3], %s292
        // Predicated region
        $region67: #{toxi_reg_forward.9} parent=65 // pred_check
          %p294 = pneg %p84
        $region68: #{toxi_reg_forward.9} parent=65 // pred_check_branch
          %296 = sbr.rel (%p294) target = $region70
        $region69: #{toxi_reg_forward.9} parent=65 // pred_region
          _
        $region70: #{toxi_reg_forward.9} parent=65 // pred_fallthru
          _
        %s297 = smul.u32 4, %s19
        %p298 = scmp.lt.s32.totalorder %s297, 3
        %s299 = scalar_select %p298, %s297, 3
        %p300 = scmp.lt.s32.totalorder %s21, 0
        %s301 = scalar_select %p300, %s21, 0
        %s302 = sadd.s32 %s301, %s299
        %s303 = smul.addr %s302, 4
        %s304 = scalar_lea.vmem %s0, %s303
        %p305 = pneg %p56
        %p306 = pneg %p53
        %s307 = sand.u32 %s71, 1
        %s308 = sand.u32 %s71, 1
        %s309 = smul.addr %s308, 128
        %s310 = scalar_lea.vmem [#allocation3], %s309
        %p311 = pneg %p84
        %p312 = pneg %p81
        %s313 = smul.u32 2, %s20
        %p314 = scmp.lt.s32.totalorder %s313, 3
        %s315 = scalar_select %p314, %s313, 3
        %s316 = scalar_lea.vmem %s2, %s315
        %p317 = pneg %p110
        %p318 = pneg %p107
        %p319 = pneg %p138
        %p320 = pneg %p135
        %s321 = sand.u32 %s125, 1
        %s322 = sand.u32 %s125, 1
        %s323 = smul.addr %s322, 32
        %s324 = scalar_lea.vmem [#allocation4], %s323
        %s325 = smul.u32 4, %s19
        %p326 = scmp.lt.s32.totalorder %s325, 3
        %s327 = scalar_select %p326, %s325, 3
        %p328 = scmp.lt.s32.totalorder %s21, 0
        %s329 = scalar_select %p328, %s21, 0
        %s330 = sadd.s32 %s329, %s327
        %s331 = smul.addr %s330, 4
        %s332 = scalar_lea.vmem %s0, %s331
        %s333 = smul.u32 4, %s19
        %s334 = smul.u32 16, %s21
        %s335 = smul.u32 2, %s20
        %s336 = smul.u32 2, %s20
        %p337 = scmp.lt.s32.totalorder %s336, 3
        %s338 = scalar_select %p337, %s336, 3
        %s339 = scalar_lea.vmem %s2, %s338
        %s340 = smul.u32 2, %s20
        %s341 = smul.u32 4, %s19
        %s342 = smul.u32 2, %s20
        %p344 = scmp.eq.s32.totalorder %s21, 0
        // Predicated region
        $region71: #{toxi_reg_forward.9} parent=65 // pred_check
          %p345 = pneg %p344
        $region72: #{toxi_reg_forward.9} parent=65 // pred_check_branch
          %347 = sbr.rel (%p345) target = $region74
        $region73: #{toxi_reg_forward.9} parent=65 // pred_region
          %348 = vst [vmem:[#allocation2] sm:$0xff] 0.0
          %349 = vst [vmem:[#allocation2 + $0x8] sm:$0xff] 0.0
          %350 = vst [vmem:[#allocation2 + $0x10] sm:$0xff] 0.0
          %351 = vst [vmem:[#allocation2 + $0x18] sm:$0xff] 0.0
          %352 = vst [vmem:[#allocation2 + $0x20] sm:$0xff] 0.0
          %353 = vst [vmem:[#allocation2 + $0x28] sm:$0xff] 0.0
          %354 = vst [vmem:[#allocation2 + $0x30] sm:$0xff] 0.0
          %355 = vst [vmem:[#allocation2 + $0x38] sm:$0xff] 0.0
        $region74: #{toxi_reg_forward.9} parent=65 // pred_fallthru
          _
        %v356 = vld [vmem:[#allocation2] sm:$0xff]
        %v357 = vld [vmem:[#allocation2 + $0x8] sm:$0xff]
        %v358 = vld [vmem:[#allocation2 + $0x10] sm:$0xff]
        %v359 = vld [vmem:[#allocation2 + $0x18] sm:$0xff]
        %v360 = vld [vmem:[#allocation2 + $0x20] sm:$0xff]
        %v361 = vld [vmem:[#allocation2 + $0x28] sm:$0xff]
        %v362 = vld [vmem:[#allocation2 + $0x30] sm:$0xff]
        %v363 = vld [vmem:[#allocation2 + $0x38] sm:$0xff]
        %v364 = vld [vmem:[%s332] sm:$0xf]
        %v365 = vld [vmem:[%s332 + $0x4] sm:$0xf]
        %v366 = vld [vmem:[%s332 + $0x8] sm:$0xf]
        %v367 = vld [vmem:[%s332 + $0xc] sm:$0xf]
        %v368 = vld [vmem:[%s293] sm:$0xff]
        %v369 = vld [vmem:[%s293 + $0x8] sm:$0xff]
        %v370 = vld [vmem:[%s293 + $0x10] sm:$0xff]
        %v371 = vld [vmem:[%s293 + $0x18] sm:$0xff]
        %v372 = vld [vmem:[%s293 + $0x20] sm:$0xff]
        %v373 = vld [vmem:[%s293 + $0x28] sm:$0xff]
        %v374 = vld [vmem:[%s293 + $0x30] sm:$0xff]
        %v375 = vld [vmem:[%s293 + $0x38] sm:$0xff]
        %v376 = vld [vmem:[%s293 + $0x40] sm:$0xff]
        %v377 = vld [vmem:[%s293 + $0x48] sm:$0xff]
        %v378 = vld [vmem:[%s293 + $0x50] sm:$0xff]
        %v379 = vld [vmem:[%s293 + $0x58] sm:$0xff]
        %v380 = vld [vmem:[%s293 + $0x60] sm:$0xff]
        %v381 = vld [vmem:[%s293 + $0x68] sm:$0xff]
        %v382 = vld [vmem:[%s293 + $0x70] sm:$0xff]
        %v383 = vld [vmem:[%s293 + $0x78] sm:$0xff]
        %v388 = vunpack.c.l.b16 %v364
        %v389 = vunpack.c.l.b16 %v365
        %v390 = vunpack.c.l.b16 %v366
        %v391 = vunpack.c.l.b16 %v367
        %v392 = vpack.c.b16 %v389, %v388
        %v393 = vpack.c.b16 %v391, %v390
        %v412 = vunpack.c.l.b16 %v368
        %v413 = vunpack.c.h.b16 %v368
        %v414 = vunpack.c.l.b16 %v369
        %v415 = vunpack.c.h.b16 %v369
        %v416 = vunpack.c.l.b16 %v370
        %v417 = vunpack.c.h.b16 %v370
        %v418 = vunpack.c.l.b16 %v371
        %v419 = vunpack.c.h.b16 %v371
        %v420 = vunpack.c.l.b16 %v372
        %v421 = vunpack.c.h.b16 %v372
        %v422 = vunpack.c.l.b16 %v373
        %v423 = vunpack.c.h.b16 %v373
        %v424 = vunpack.c.l.b16 %v374
        %v425 = vunpack.c.h.b16 %v374
        %v426 = vunpack.c.l.b16 %v375
        %v427 = vunpack.c.h.b16 %v375
        %v428 = vunpack.c.l.b16 %v376
        %v429 = vunpack.c.h.b16 %v376
        %v430 = vunpack.c.l.b16 %v377
        %v431 = vunpack.c.h.b16 %v377
        %v432 = vunpack.c.l.b16 %v378
        %v433 = vunpack.c.h.b16 %v378
        %v434 = vunpack.c.l.b16 %v379
        %v435 = vunpack.c.h.b16 %v379
        %v436 = vunpack.c.l.b16 %v380
        %v437 = vunpack.c.h.b16 %v380
        %v438 = vunpack.c.l.b16 %v381
        %v439 = vunpack.c.h.b16 %v381
        %v440 = vunpack.c.l.b16 %v382
        %v441 = vunpack.c.h.b16 %v382
        %v442 = vunpack.c.l.b16 %v383
        %v443 = vunpack.c.h.b16 %v383
        %v444 = vpack.c.b16 %v414, %v412
        %v445 = vpack.c.b16 %v415, %v413
        %v446 = vpack.c.b16 %v418, %v416
        %v447 = vpack.c.b16 %v419, %v417
        %v448 = vpack.c.b16 %v422, %v420
        %v449 = vpack.c.b16 %v423, %v421
        %v450 = vpack.c.b16 %v426, %v424
        %v451 = vpack.c.b16 %v427, %v425
        %v452 = vpack.c.b16 %v430, %v428
        %v453 = vpack.c.b16 %v431, %v429
        %v454 = vpack.c.b16 %v434, %v432
        %v455 = vpack.c.b16 %v435, %v433
        %v456 = vpack.c.b16 %v438, %v436
        %v457 = vpack.c.b16 %v439, %v437
        %v458 = vpack.c.b16 %v442, %v440
        %v459 = vpack.c.b16 %v443, %v441
        %476 = vmatprep.subr.bf16.mxu0 %v459
        %477 = vmatpush1.bf16.msra.mxu0 %v458
        %478 = vmatprep.subr.bf16.mxu0 %v457
        %479 = vmatpush1.bf16.msra.mxu0 %v456
        %480 = vmatprep.subr.bf16.mxu0 %v455
        %481 = vmatpush1.bf16.msra.mxu0 %v454
        %482 = vmatprep.subr.bf16.mxu0 %v453
        %483 = vmatpush1.bf16.msra.mxu0 %v452
        %484 = vmatprep.subr.bf16.mxu0 %v451
        %485 = vmatpush1.bf16.msra.mxu0 %v450
        %486 = vmatprep.subr.bf16.mxu0 %v449
        %487 = vmatpush1.bf16.msra.mxu0 %v448
        %488 = vmatprep.subr.bf16.mxu0 %v447
        %489 = vmatpush1.bf16.msra.mxu0 %v446
        %490 = vmatprep.subr.bf16.mxu0 %v445
        %491 = vmatpush1.bf16.msra.mxu0 %v444
        %492 = vmatprep.subr.bf16.mxu0 0
        %493 = vmatpush2.bf16.msra.mxu0 0
        %494 = vmatprep.subr.bf16.mxu0 0
        %495 = vmatpush2.bf16.msra.mxu0 0
        %496 = vmatprep.subr.bf16.mxu0 0
        %497 = vmatpush2.bf16.msra.mxu0 0
        %498 = vmatprep.subr.bf16.mxu0 0
        %499 = vmatpush2.bf16.msra.mxu0 0
        %500 = vmatprep.subr.bf16.mxu0 0
        %501 = vmatpush2.bf16.msra.mxu0 0
        %502 = vmatprep.subr.bf16.mxu0 0
        %503 = vmatpush2.bf16.msra.mxu0 0
        %504 = vmatprep.subr.bf16.mxu0 0
        %505 = vmatpush2.bf16.msra.mxu0 0
        %506 = vmatprep.subr.bf16.mxu0 0
        %507 = vmatpush2.bf16.msra.mxu0 0
        %508 = vmatprep.mubr.bf16.mxu0 0
        %509 = vmatmul.mubr.bf16.gmra.mxu0 %v392
        %v510 = vpop.f32.mrf.mxu0
        %v511 = vadd.f32 0.0, %v510
        %v512 = vpop.f32.mrf.mxu0
        %v513 = vadd.f32 0.0, %v512
        %v514 = vpop.f32.mrf.mxu0
        %v515 = vadd.f32 0.0, %v514
        %v516 = vpop.f32.mrf.mxu0
        %v517 = vadd.f32 0.0, %v516
        %518 = vmatprep.mubr.bf16.mxu0 0
        %519 = vmatmul.mubr.bf16.gmra.mxu0 %v393
        %v520 = vpop.f32.mrf.mxu0
        %v521 = vadd.f32 0.0, %v520
        %v522 = vpop.f32.mrf.mxu0
        %v523 = vadd.f32 0.0, %v522
        %v524 = vpop.f32.mrf.mxu0
        %v525 = vadd.f32 0.0, %v524
        %v526 = vpop.f32.mrf.mxu0
        %v527 = vadd.f32 0.0, %v526
        %528 = vdwg.mxu0
        %v529 = vadd.f32 %v356, %v511
        %v530 = vadd.f32 %v357, %v513
        %v531 = vadd.f32 %v358, %v515
        %v532 = vadd.f32 %v359, %v517
        %v533 = vadd.f32 %v360, %v521
        %v534 = vadd.f32 %v361, %v523
        %v535 = vadd.f32 %v362, %v525
        %v536 = vadd.f32 %v363, %v527
        %537 = vst [vmem:[#allocation2] sm:$0xff] %v529
        %538 = vst [vmem:[#allocation2 + $0x8] sm:$0xff] %v530
        %539 = vst [vmem:[#allocation2 + $0x10] sm:$0xff] %v531
        %540 = vst [vmem:[#allocation2 + $0x18] sm:$0xff] %v532
        %541 = vst [vmem:[#allocation2 + $0x20] sm:$0xff] %v533
        %542 = vst [vmem:[#allocation2 + $0x28] sm:$0xff] %v534
        %543 = vst [vmem:[#allocation2 + $0x30] sm:$0xff] %v535
        %544 = vst [vmem:[#allocation2 + $0x38] sm:$0xff] %v536
        // Predicated region
        $region75: #{toxi_reg_forward.9} parent=65 // pred_check
          %p545 = pneg %p344
        $region76: #{toxi_reg_forward.9} parent=65 // pred_check_branch
          %547 = sbr.rel (%p545) target = $region78
        $region77: #{toxi_reg_forward.9} parent=65 // pred_region
          %v548 = vld [vmem:[#allocation2] sm:$0xff]
          %v549 = vld [vmem:[#allocation2 + $0x8] sm:$0xff]
          %v550 = vld [vmem:[#allocation2 + $0x10] sm:$0xff]
          %v551 = vld [vmem:[#allocation2 + $0x18] sm:$0xff]
          %v552 = vld [vmem:[#allocation2 + $0x20] sm:$0xff]
          %v553 = vld [vmem:[#allocation2 + $0x28] sm:$0xff]
          %v554 = vld [vmem:[#allocation2 + $0x30] sm:$0xff]
          %v555 = vld [vmem:[#allocation2 + $0x38] sm:$0xff]
          %v556 = vld [vmem:[%s339] sm:$0x3]
          %v557 = vunpack.c.l.bf16 %v556
          %v559 = vlaneseq
          %v560 = vshrl.u32 %v559, 7
          %v561 = vsub.s32 0, %v560
          %v562 = vrot.slane %v557, %v561
          %v563 = vlaneseq
          %v564 = vshrl.u32 %v563, 7
          %v565 = vsub.s32 2, %v564
          %v566 = vrot.slane %v557, %v565
          %v569 = vlaneseq
          %v570 = vshrl.u32 %v569, 7
          %v571 = vsub.s32 0, %v570
          %v572 = vrot.slane %v562, %v571
          %v573 = vlaneseq
          %v574 = vshrl.u32 %v573, 7
          %v575 = vsub.s32 0, %v574
          %v576 = vrot.slane %v566, %v575
          %v577 = vadd.f32 %v548, %v572
          %v578 = vadd.f32 %v549, %v576
          %v579 = vadd.f32 %v550, %v572
          %v580 = vadd.f32 %v551, %v576
          %v581 = vadd.f32 %v552, %v572
          %v582 = vadd.f32 %v553, %v576
          %v583 = vadd.f32 %v554, %v572
          %v584 = vadd.f32 %v555, %v576
          %v585 = vmul.f32 %v577, %v577
          %v586 = vmul.f32 %v578, %v578
          %v587 = vmul.f32 %v579, %v579
          %v588 = vmul.f32 %v580, %v580
          %v589 = vmul.f32 %v581, %v581
          %v590 = vmul.f32 %v582, %v582
          %v591 = vmul.f32 %v583, %v583
          %v592 = vmul.f32 %v584, %v584
          %v593 = vmul.f32 %v577, %v585
          %v594 = vmul.f32 %v578, %v586
          %v595 = vmul.f32 %v579, %v587
          %v596 = vmul.f32 %v580, %v588
          %v597 = vmul.f32 %v581, %v589
          %v598 = vmul.f32 %v582, %v590
          %v599 = vmul.f32 %v583, %v591
          %v600 = vmul.f32 %v584, %v592
          %v601 = vmul.f32 %v593, 0.044715
          %v602 = vmul.f32 %v594, 0.044715
          %v603 = vmul.f32 %v595, 0.044715
          %v604 = vmul.f32 %v596, 0.044715
          %v605 = vmul.f32 %v597, 0.044715
          %v606 = vmul.f32 %v598, 0.044715
          %v607 = vmul.f32 %v599, 0.044715
          %v608 = vmul.f32 %v600, 0.044715
          %v609 = vadd.f32 %v577, %v601
          %v610 = vadd.f32 %v578, %v602
          %v611 = vadd.f32 %v579, %v603
          %v612 = vadd.f32 %v580, %v604
          %v613 = vadd.f32 %v581, %v605
          %v614 = vadd.f32 %v582, %v606
          %v615 = vadd.f32 %v583, %v607
          %v616 = vadd.f32 %v584, %v608
          %v617 = vmul.f32 %v609, 0.7978846
          %v618 = vmul.f32 %v610, 0.7978846
          %v619 = vmul.f32 %v611, 0.7978846
          %v620 = vmul.f32 %v612, 0.7978846
          %v621 = vmul.f32 %v613, 0.7978846
          %v622 = vmul.f32 %v614, 0.7978846
          %v623 = vmul.f32 %v615, 0.7978846
          %v624 = vmul.f32 %v616, 0.7978846
          %v625 = vtanh.pop %v617
          %v626 = vtanh.pop %v618
          %v627 = vtanh.pop %v619
          %v628 = vtanh.pop %v620
          %v629 = vtanh.pop %v621
          %v630 = vtanh.pop %v622
          %v631 = vtanh.pop %v623
          %v632 = vtanh.pop %v624
          %v633 = vadd.f32 %v625, 1.0
          %v634 = vadd.f32 %v626, 1.0
          %v635 = vadd.f32 %v627, 1.0
          %v636 = vadd.f32 %v628, 1.0
          %v637 = vadd.f32 %v629, 1.0
          %v638 = vadd.f32 %v630, 1.0
          %v639 = vadd.f32 %v631, 1.0
          %v640 = vadd.f32 %v632, 1.0
          %v641 = vmul.f32 %v633, 0.5
          %v642 = vmul.f32 %v634, 0.5
          %v643 = vmul.f32 %v635, 0.5
          %v644 = vmul.f32 %v636, 0.5
          %v645 = vmul.f32 %v637, 0.5
          %v646 = vmul.f32 %v638, 0.5
          %v647 = vmul.f32 %v639, 0.5
          %v648 = vmul.f32 %v640, 0.5
          %v649 = vmul.f32 %v577, %v641
          %v650 = vmul.f32 %v578, %v642
          %v651 = vmul.f32 %v579, %v643
          %v652 = vmul.f32 %v580, %v644
          %v653 = vmul.f32 %v581, %v645
          %v654 = vmul.f32 %v582, %v646
          %v655 = vmul.f32 %v583, %v647
          %v656 = vmul.f32 %v584, %v648
          %v657 = vpack.c.bf16 %v651, %v649
          %v658 = vpack.c.bf16 %v652, %v650
          %v659 = vpack.c.bf16 %v655, %v653
          %v660 = vpack.c.bf16 %v656, %v654
          %v665 = vunpack.c.l.b16 %v657
          %v666 = vunpack.c.l.b16 %v658
          %v667 = vunpack.c.h.b16 %v657
          %v668 = vunpack.c.h.b16 %v658
          %v669 = vunpack.c.l.b16 %v659
          %v670 = vunpack.c.l.b16 %v660
          %v671 = vunpack.c.h.b16 %v659
          %v672 = vunpack.c.h.b16 %v660
          %v673 = vpack.c.b16 %v666, %v665
          %v674 = vpack.c.b16 %v668, %v667
          %v675 = vpack.c.b16 %v670, %v669
          %v676 = vpack.c.b16 %v672, %v671
          %681 = vst [vmem:[%s324] sm:$0xff] %v673
          %682 = vst [vmem:[%s324 + $0x8] sm:$0xff] %v674
          %683 = vst [vmem:[%s324 + $0x10] sm:$0xff] %v675
          %684 = vst [vmem:[%s324 + $0x18] sm:$0xff] %v676
        $region78: #{toxi_reg_forward.9} parent=65 // pred_fallthru
          _
        %s685 = sand.u32 %s125, 1
        %s686 = sand.u32 %s125, 1
        %s687 = smul.addr %s686, 32
        %s688 = scalar_lea.vmem [#allocation4], %s687
        // Predicated region
        $region79: #{toxi_reg_forward.9} parent=65 // pred_check
          %p689 = pneg %p135
        $region80: #{toxi_reg_forward.9} parent=65 // pred_check_branch
          %691 = sbr.rel (%p689) target = $region82
        $region81: #{toxi_reg_forward.9} parent=65 // pred_region
          %s692 = smul.u32 4, %s19
          %s693 = smul.u32 2, %s20
          %s694 = smul.addr %s692, 4
          %s695 = sadd.s32 %s693, %s694
          %s696 = smul.addr %s695, 4
          %s697 = scalar_lea.vmem %s3, %s696
          // Predicated region
          $region83: #{toxi_reg_forward.9} parent=81 // pred_check
            _
          $region84: #{toxi_reg_forward.9} parent=81 // pred_check_branch
            %699 = sbr.rel (0) target = $region86
          $region85: #{toxi_reg_forward.9} parent=81 // pred_region
            // Predicated region
            $region87: #{toxi_reg_forward.9} parent=85 // pred_check
              _
            $region88: #{toxi_reg_forward.9} parent=85 // pred_check_branch
              %701 = sbr.rel (0) target = $region90
            $region89: #{toxi_reg_forward.9} parent=85 // pred_region
              // Predicated region
              $region102: #{toxi_reg_forward.9} parent=89 // pred_check
                _
              $region103: #{toxi_reg_forward.9} parent=89 // pred_check_branch
                %723 = sbr.rel (0) target = $region105
              $region104: #{toxi_reg_forward.9} parent=89 // pred_region
                loop: start=0, step=1, limit=1
                $region106: #{toxi_reg_forward.9} parent=104 // loop_pre_header
                  _
                $region107: #{toxi_reg_forward.9} parent=104 // loop_header
                  %s725 = sphi 0, %s729
                  %p726 = scmp.ge.s32.totalorder %s725, 1
                  %s730 = sphi %s688, %s688
                  %s731 = sphi %s697, %s697
                $region108: #{toxi_reg_forward.9} parent=104 // loop_header_branch
                  %728 = sbr.rel (%p726) target = $region112
                $region109: #{toxi_reg_forward.9} parent=104 // loop_body
                  %v732 = vld [vmem:[%s730] sm:$0xff]
                  %733 = vst [vmem:[%s731] sm:$0xff] %v732
                  %v734 = vld [vmem:[%s730 + $0x8] sm:$0xff]
                  %735 = vst [vmem:[%s731 + $0x10] sm:$0xff] %v734
                  %v736 = vld [vmem:[%s730 + $0x10] sm:$0xff]
                  %737 = vst [vmem:[%s731 + $0x20] sm:$0xff] %v736
                  %v738 = vld [vmem:[%s730 + $0x18] sm:$0xff]
                  %739 = vst [vmem:[%s731 + $0x30] sm:$0xff] %v738
                $region110: #{toxi_reg_forward.9} parent=104 // loop_footer
                  %s729 = sadd.s32 1, %s725
                $region111: #{toxi_reg_forward.9} parent=104 // loop_footer_branch
                  %724 = sbr.rel target = $region107
                $region112: #{toxi_reg_forward.9} parent=104 // loop_exit
                  _
              $region105: #{toxi_reg_forward.9} parent=89 // pred_fallthru
                _
              // Predicated region
              $region113: #{toxi_reg_forward.9} parent=89 // pred_check
                _
              $region114: #{toxi_reg_forward.9} parent=89 // pred_check_branch
                %741 = sbr.rel target = $region116
              $region115: #{toxi_reg_forward.9} parent=89 // pred_region
                _
              $region116: #{toxi_reg_forward.9} parent=89 // pred_fallthru
                _
            $region90: #{toxi_reg_forward.9} parent=85 // pred_fallthru
              _
            // Predicated region
            $region91: #{toxi_reg_forward.9} parent=85 // pred_check
              _
            $region92: #{toxi_reg_forward.9} parent=85 // pred_check_branch
              %703 = sbr.rel target = $region94
            $region93: #{toxi_reg_forward.9} parent=85 // pred_region
              %s705 = ssub.s32 256, 1
              loop: start=0, step=1, limit=1
              $region95: #{toxi_reg_forward.9} parent=93 // loop_pre_header
                _
              $region96: #{toxi_reg_forward.9} parent=93 // loop_header
                %s707 = sphi 0, %s711
                %p708 = scmp.ge.s32.totalorder %s707, 1
                %s712 = sphi %s688, %s688
                %s713 = sphi %s697, %s697
              $region97: #{toxi_reg_forward.9} parent=93 // loop_header_branch
                %710 = sbr.rel (%p708) target = $region101
              $region98: #{toxi_reg_forward.9} parent=93 // loop_body
                %v714 = vld [vmem:[%s712] sm:%s705]
                %715 = vst [vmem:[%s713] sm:%s705] %v714
                %v716 = vld [vmem:[%s712 + $0x8] sm:%s705]
                %717 = vst [vmem:[%s713 + $0x10] sm:%s705] %v716
                %v718 = vld [vmem:[%s712 + $0x10] sm:%s705]
                %719 = vst [vmem:[%s713 + $0x20] sm:%s705] %v718
                %v720 = vld [vmem:[%s712 + $0x18] sm:%s705]
                %721 = vst [vmem:[%s713 + $0x30] sm:%s705] %v720
              $region99: #{toxi_reg_forward.9} parent=93 // loop_footer
                %s711 = sadd.s32 1, %s707
              $region100: #{toxi_reg_forward.9} parent=93 // loop_footer_branch
                %706 = sbr.rel target = $region96
              $region101: #{toxi_reg_forward.9} parent=93 // loop_exit
                _
            $region94: #{toxi_reg_forward.9} parent=85 // pred_fallthru
              _
          $region86: #{toxi_reg_forward.9} parent=81 // pred_fallthru
            _
          %742 = vnop
        $region82: #{toxi_reg_forward.9} parent=65 // pred_fallthru
          _
      $region66: #{toxi_reg_forward.9} parent=5 // pred_fallthru
        _
      %p743 = scmp.le.s32.totalorder 2, %s9
      // Predicated region
      $region117: #{toxi_reg_forward.9} parent=5 // pred_check
        %p744 = pneg %p743
      $region118: #{toxi_reg_forward.9} parent=5 // pred_check_branch
        %746 = sbr.rel (%p744) target = $region120
      $region119: #{toxi_reg_forward.9} parent=5 // pred_region
        %s747 = ssub.s32 %s9, 2
        // Predicated region
        $region121: #{toxi_reg_forward.9} parent=119 // pred_check
          %p748 = pneg %p141
        $region122: #{toxi_reg_forward.9} parent=119 // pred_check_branch
          %750 = sbr.rel (%p748) target = $region124
        $region123: #{toxi_reg_forward.9} parent=119 // pred_region
          %s751 = sand.u32 %s126, 1
          %s752 = sand.u32 %s126, 1
          %s753 = smul.addr %s752, 32
          %s754 = scalar_lea.vmem [#allocation4], %s753
        $region124: #{toxi_reg_forward.9} parent=119 // pred_fallthru
          _
      $region120: #{toxi_reg_forward.9} parent=5 // pred_fallthru
        _
    $region6: #{toxi_reg_forward.9} parent=1 // loop_footer
      %s13 = sadd.s32 1, %s9
    $region7: #{toxi_reg_forward.9} parent=1 // loop_footer_branch
      %8 = sbr.rel target = $region3
    $region8: #{toxi_reg_forward.9} parent=1 // loop_exit
      _

// kernel: toxi_reg_forward.7
$region0: #{toxi_reg_forward.7}
  #allocation0 [shape = 'u32[]', space=smem, size = 0x4, offset = 0x4, fixed_abs, tag = 'smem constant byte address 0x4 - core index']
  #allocation1 [shape = 'u32[144,128]{1,0:T(1,128)}', space=vmem, size = 0x12000, scoped, tag = 'internal scratch']
  #allocation2 [shape = 'f32[16,1]{1,0:T(8,128)}', space=vmem, size = 0x2000, scoped, tag = 'scratch operand']
  #allocation3 [shape = 'f32[16,1]{1,0:T(8,128)}', space=vmem, size = 0x2000, scoped, tag = 'scratch operand']
  #allocation4 [shape = 'f32[16,128]{1,0:T(8,128)}', space=vmem, size = 0x2000, scoped, tag = 'scratch operand']
  %s0 = inlined_call_operand.vmem [shape: bf16[2,16,128], index: 0, kind: input, shape index: {}]
  %s1 = inlined_call_operand.vmem [shape: bf16[2,16,128], index: 1, kind: input, shape index: {}]
  %s2 = inlined_call_operand.vmem [shape: bf16[2,16,128], index: 2, kind: input, shape index: {}]
  %s3 = inlined_call_operand.vmem [shape: f32[2,1,16], index: 3, kind: input, shape index: {}]
  %s4 = inlined_call_operand.vmem [shape: bf16[2,16,128], index: 4, kind: output, shape index: {}]
  %s5 = sld [smem:[#allocation0]]
  $region57: #{toxi_reg_forward.7} parent=0
    _
  %s7 = ssub.s32 1, %s5
  %s8 = scalar_select 0, %s7, %s5
  loop: start=0, step=1, limit=4
  $region2: #{toxi_reg_forward.7} parent=0 // loop_pre_header
    _
  $region3: #{toxi_reg_forward.7} parent=0 // loop_header
    %s10 = sphi 0, %s14
    %p11 = scmp.ge.s32.totalorder %s10, 4
    %s17 = sphi 0, %s36
    %s18 = sphi 0, %s32
    %s19 = sphi 0, %s28
    %s20 = sphi 0, %s17
    %s21 = sphi 0, %s18
    %s22 = sphi 0, %s19
    %s23 = sphi 0, %s20
    %s24 = sphi 0, %s21
    %s25 = sphi 0, %s22
    %s41 = sphi 0, %s43
    %s44 = sphi 0, %s41
    %s45 = sphi 0, %s44
    %s61 = sphi 0, %s45
    %s69 = sphi 0, %s71
    %s72 = sphi 0, %s69
    %s73 = sphi 0, %s72
    %s89 = sphi 0, %s73
    %s97 = sphi 0, %s99
    %s100 = sphi 0, %s97
    %s101 = sphi 0, %s100
    %s117 = sphi 0, %s101
    %s125 = sphi 0, %s127
    %s128 = sphi 0, %s125
    %s129 = sphi 0, %s128
    %s145 = sphi 0, %s129
    %s153 = sphi 0, %s155
    %s156 = sphi 0, %s153
    %s157 = sphi 0, %s156
    %s173 = sphi 0, %s157
  $region4: #{toxi_reg_forward.7} parent=0 // loop_header_branch
    %13 = sbr.rel (%p11) target = $region8
  $region5: #{toxi_reg_forward.7} parent=0 // loop_body
    %s15 = ssub.s32 %s10, 1
    %s16 = ssub.s32 %s10, 2
    %s26 = sadd.s32 1, %s19
    %p27 = scmp.ge.s32.totalorder %s26, 1
    %s28 = scalar_select %p27, 0, %s26
    %s29 = sadd.s32 1, %s18
    %s30 = scalar_select %p27, %s29, %s18
    %p31 = scmp.ge.s32.totalorder %s30, 1
    %s32 = scalar_select %p31, 0, %s30
    %s33 = sadd.s32 1, %s17
    %s34 = scalar_select %p31, %s33, %s17
    %p35 = scmp.ge.s32.totalorder %s34, 2
    %s36 = scalar_select %p35, 0, %s34
    %s37 = ssub.s32 %s17, %s36
    %s38 = ssub.s32 %s18, %s32
    %s39 = sor.u32 %s37, %s38
    %p40 = scmp.eq.s32.totalorder %s39, 0
    %s42 = sadd.s32 %s41, 1
    %s43 = scalar_select %p40, %s41, %s42
    %p46 = pneg %p40
    %p47 = scmp.eq.s32.totalorder %s10, 1
    %p48 = por %p46, %p47
    %p49 = scmp.ne.s32.totalorder %s41, %s44
    %p50 = scmp.eq.s32.totalorder %s10, 0
    %p51 = por %p49, %p50
    %p52 = scmp.ne.s32.totalorder %s41, %s44
    %p53 = scmp.eq.s32.totalorder %s15, 1
    %p54 = por %p52, %p53
    %p55 = scmp.ne.s32.totalorder %s44, %s45
    %p56 = scmp.eq.s32.totalorder %s15, 0
    %p57 = por %p55, %p56
    %p58 = scmp.ne.s32.totalorder %s44, %s45
    %p59 = scmp.eq.s32.totalorder %s16, 1
    %p60 = por %p58, %p59
    %p62 = scmp.ne.s32.totalorder %s45, %s61
    %p63 = scmp.eq.s32.totalorder %s16, 0
    %p64 = por %p62, %p63
    %s65 = ssub.s32 %s17, %s36
    %s66 = ssub.s32 %s19, %s28
    %s67 = sor.u32 %s65, %s66
    %p68 = scmp.eq.s32.totalorder %s67, 0
    %s70 = sadd.s32 %s69, 1
    %s71 = scalar_select %p68, %s69, %s70
    %p74 = pneg %p68
    %p75 = scmp.eq.s32.totalorder %s10, 1
    %p76 = por %p74, %p75
    %p77 = scmp.ne.s32.totalorder %s69, %s72
    %p78 = scmp.eq.s32.totalorder %s10, 0
    %p79 = por %p77, %p78
    %p80 = scmp.ne.s32.totalorder %s69, %s72
    %p81 = scmp.eq.s32.totalorder %s15, 1
    %p82 = por %p80, %p81
    %p83 = scmp.ne.s32.totalorder %s72, %s73
    %p84 = scmp.eq.s32.totalorder %s15, 0
    %p85 = por %p83, %p84
    %p86 = scmp.ne.s32.totalorder %s72, %s73
    %p87 = scmp.eq.s32.totalorder %s16, 1
    %p88 = por %p86, %p87
    %p90 = scmp.ne.s32.totalorder %s73, %s89
    %p91 = scmp.eq.s32.totalorder %s16, 0
    %p92 = por %p90, %p91
    %s93 = ssub.s32 %s17, %s36
    %s94 = ssub.s32 %s19, %s28
    %s95 = sor.u32 %s93, %s94
    %p96 = scmp.eq.s32.totalorder %s95, 0
    %s98 = sadd.s32 %s97, 1
    %s99 = scalar_select %p96, %s97, %s98
    %p102 = pneg %p96
    %p103 = scmp.eq.s32.totalorder %s10, 1
    %p104 = por %p102, %p103
    %p105 = scmp.ne.s32.totalorder %s97, %s100
    %p106 = scmp.eq.s32.totalorder %s10, 0
    %p107 = por %p105, %p106
    %p108 = scmp.ne.s32.totalorder %s97, %s100
    %p109 = scmp.eq.s32.totalorder %s15, 1
    %p110 = por %p108, %p109
    %p111 = scmp.ne.s32.totalorder %s100, %s101
    %p112 = scmp.eq.s32.totalorder %s15, 0
    %p113 = por %p111, %p112
    %p114 = scmp.ne.s32.totalorder %s100, %s101
    %p115 = scmp.eq.s32.totalorder %s16, 1
    %p116 = por %p114, %p115
    %p118 = scmp.ne.s32.totalorder %s101, %s117
    %p119 = scmp.eq.s32.totalorder %s16, 0
    %p120 = por %p118, %p119
    %s121 = ssub.s32 %s17, %s36
    %s122 = ssub.s32 %s19, %s28
    %s123 = sor.u32 %s121, %s122
    %p124 = scmp.eq.s32.totalorder %s123, 0
    %s126 = sadd.s32 %s125, 1
    %s127 = scalar_select %p124, %s125, %s126
    %p130 = pneg %p124
    %p131 = scmp.eq.s32.totalorder %s10, 1
    %p132 = por %p130, %p131
    %p133 = scmp.ne.s32.totalorder %s125, %s128
    %p134 = scmp.eq.s32.totalorder %s10, 0
    %p135 = por %p133, %p134
    %p136 = scmp.ne.s32.totalorder %s125, %s128
    %p137 = scmp.eq.s32.totalorder %s15, 1
    %p138 = por %p136, %p137
    %p139 = scmp.ne.s32.totalorder %s128, %s129
    %p140 = scmp.eq.s32.totalorder %s15, 0
    %p141 = por %p139, %p140
    %p142 = scmp.ne.s32.totalorder %s128, %s129
    %p143 = scmp.eq.s32.totalorder %s16, 1
    %p144 = por %p142, %p143
    %p146 = scmp.ne.s32.totalorder %s129, %s145
    %p147 = scmp.eq.s32.totalorder %s16, 0
    %p148 = por %p146, %p147
    %s149 = ssub.s32 %s17, %s36
    %s150 = ssub.s32 %s18, %s32
    %s151 = sor.u32 %s149, %s150
    %p152 = scmp.eq.s32.totalorder %s151, 0
    %s154 = sadd.s32 %s153, 1
    %s155 = scalar_select %p152, %s153, %s154
    %p158 = pneg %p152
    %p159 = scmp.eq.s32.totalorder %s10, 1
    %p160 = por %p158, %p159
    %p161 = scmp.ne.s32.totalorder %s153, %s156
    %p162 = scmp.eq.s32.totalorder %s10, 0
    %p163 = por %p161, %p162
    %p164 = scmp.ne.s32.totalorder %s153, %s156
    %p165 = scmp.eq.s32.totalorder %s15, 1
    %p166 = por %p164, %p165
    %p167 = scmp.ne.s32.totalorder %s156, %s157
    %p168 = scmp.eq.s32.totalorder %s15, 0
    %p169 = por %p167, %p168
    %p170 = scmp.ne.s32.totalorder %s156, %s157
    %p171 = scmp.eq.s32.totalorder %s16, 1
    %p172 = por %p170, %p171
    %p174 = scmp.ne.s32.totalorder %s157, %s173
    %p175 = scmp.eq.s32.totalorder %s16, 0
    %p176 = por %p174, %p175
    %p177 = scmp.le.s32.totalorder 1, %s10
    %p178 = scmp.lt.s32.totalorder %s10, 3
    %p179 = pnand %p177, %p178
    %p180 = pneg %p179
    // Predicated region
    $region9: #{toxi_reg_forward.7} parent=5 // pred_check
      _
    $region10: #{toxi_reg_forward.7} parent=5 // pred_check_branch
      %182 = sbr.rel (%p179) target = $region12
    $region11: #{toxi_reg_forward.7} parent=5 // pred_region
      %s183 = ssub.s32 %s10, 1
    $region12: #{toxi_reg_forward.7} parent=5 // pred_fallthru
      _
    %p184 = scmp.lt.s32.totalorder %s10, 2
    // Predicated region
    $region13: #{toxi_reg_forward.7} parent=5 // pred_check
      %p185 = pneg %p184
    $region14: #{toxi_reg_forward.7} parent=5 // pred_check_branch
      %187 = sbr.rel (%p185) target = $region16
    $region15: #{toxi_reg_forward.7} parent=5 // pred_region
      // Predicated region
      $region17: #{toxi_reg_forward.7} parent=15 // pred_check
        %p188 = pneg %p51
      $region18: #{toxi_reg_forward.7} parent=15 // pred_check_branch
        %190 = sbr.rel (%p188) target = $region20
      $region19: #{toxi_reg_forward.7} parent=15 // pred_region
        %s191 = smul.u32 2, %s18
        %p192 = scmp.lt.s32.totalorder %s17, 1
        %s193 = scalar_select %p192, %s17, 1
        %p194 = scmp.lt.s32.totalorder %s191, 1
        %s195 = scalar_select %p194, %s191, 1
        %s196 = smul.addr %s193, 2
        %s197 = sadd.s32 %s195, %s196
        %s198 = smul.addr %s197, 4
        %s199 = scalar_lea.vmem %s0, %s198
        %s200 = smul.u32 2, %s18
      $region20: #{toxi_reg_forward.7} parent=15 // pred_fallthru
        _
      // Predicated region
      $region21: #{toxi_reg_forward.7} parent=15 // pred_check
        %p201 = pneg %p79
      $region22: #{toxi_reg_forward.7} parent=15 // pred_check_branch
        %203 = sbr.rel (%p201) target = $region24
      $region23: #{toxi_reg_forward.7} parent=15 // pred_region
        %s204 = smul.u32 2, %s19
        %p205 = scmp.lt.s32.totalorder %s17, 1
        %s206 = scalar_select %p205, %s17, 1
        %p207 = scmp.lt.s32.totalorder %s204, 1
        %s208 = scalar_select %p207, %s204, 1
        %s209 = smul.addr %s206, 2
        %s210 = sadd.s32 %s208, %s209
        %s211 = smul.addr %s210, 4
        %s212 = scalar_lea.vmem %s1, %s211
        %s213 = smul.u32 2, %s19
      $region24: #{toxi_reg_forward.7} parent=15 // pred_fallthru
        _
      // Predicated region
      $region25: #{toxi_reg_forward.7} parent=15 // pred_check
        %p214 = pneg %p107
      $region26: #{toxi_reg_forward.7} parent=15 // pred_check_branch
        %216 = sbr.rel (%p214) target = $region28
      $region27: #{toxi_reg_forward.7} parent=15 // pred_region
        %s217 = smul.u32 2, %s19
        %p218 = scmp.lt.s32.totalorder %s17, 1
        %s219 = scalar_select %p218, %s17, 1
        %p220 = scmp.lt.s32.totalorder %s217, 1
        %s221 = scalar_select %p220, %s217, 1
        %s222 = smul.addr %s219, 2
        %s223 = sadd.s32 %s221, %s222
        %s224 = smul.addr %s223, 4
        %s225 = scalar_lea.vmem %s2, %s224
        %s226 = smul.u32 2, %s19
      $region28: #{toxi_reg_forward.7} parent=15 // pred_fallthru
        _
      // Predicated region
      $region29: #{toxi_reg_forward.7} parent=15 // pred_check
        %p227 = pneg %p135
      $region30: #{toxi_reg_forward.7} parent=15 // pred_check_branch
        %229 = sbr.rel (%p227) target = $region32
      $region31: #{toxi_reg_forward.7} parent=15 // pred_region
        %p230 = scmp.lt.s32.totalorder %s17, 1
        %s231 = scalar_select %p230, %s17, 1
        %p232 = scmp.lt.s32.totalorder %s19, 0
        %s233 = scalar_select %p232, %s19, 0
        %s234 = sadd.s32 %s233, %s231
        %s235 = scalar_lea.vmem %s3, %s234
      $region32: #{toxi_reg_forward.7} parent=15 // pred_fallthru
        _
    $region16: #{toxi_reg_forward.7} parent=5 // pred_fallthru
      _
    %p236 = scmp.le.s32.totalorder 1, %s10
    %p237 = scmp.lt.s32.totalorder %s10, 3
    %p238 = pnand %p236, %p237
    %p239 = pneg %p238
    // Predicated region
    $region33: #{toxi_reg_forward.7} parent=5 // pred_check
      _
    $region34: #{toxi_reg_forward.7} parent=5 // pred_check_branch
      %241 = sbr.rel (%p238) target = $region36
    $region35: #{toxi_reg_forward.7} parent=5 // pred_region
      %s242 = ssub.s32 %s10, 1
      %s243 = smul.u32 2, %s21
      %p244 = scmp.lt.s32.totalorder %s20, 1
      %s245 = scalar_select %p244, %s20, 1
      %p246 = scmp.lt.s32.totalorder %s243, 1
      %s247 = scalar_select %p246, %s243, 1
      %s248 = smul.addr %s245, 2
      %s249 = sadd.s32 %s247, %s248
      %s250 = smul.addr %s249, 4
      %s251 = scalar_lea.vmem %s0, %s250
      %p252 = pneg %p57
      %p253 = pneg %p54
      %s254 = smul.u32 2, %s22
      %p255 = scmp.lt.s32.totalorder %s20, 1
      %s256 = scalar_select %p255, %s20, 1
      %p257 = scmp.lt.s32.totalorder %s254, 1
      %s258 = scalar_select %p257, %s254, 1
      %s259 = smul.addr %s256, 2
      %s260 = sadd.s32 %s258, %s259
      %s261 = smul.addr %s260, 4
      %s262 = scalar_lea.vmem %s1, %s261
      %p263 = pneg %p85
      %p264 = pneg %p82
      %s265 = smul.u32 2, %s22
      %p266 = scmp.lt.s32.totalorder %s20, 1
      %s267 = scalar_select %p266, %s20, 1
      %p268 = scmp.lt.s32.totalorder %s265, 1
      %s269 = scalar_select %p268, %s265, 1
      %s270 = smul.addr %s267, 2
      %s271 = sadd.s32 %s269, %s270
      %s272 = smul.addr %s271, 4
      %s273 = scalar_lea.vmem %s2, %s272
      %p274 = pneg %p113
      %p275 = pneg %p110
      %p276 = scmp.lt.s32.totalorder %s20, 1
      %s277 = scalar_select %p276, %s20, 1
      %p278 = scmp.lt.s32.totalorder %s22, 0
      %s279 = scalar_select %p278, %s22, 0
      %s280 = sadd.s32 %s279, %s277
      %s281 = scalar_lea.vmem %s3, %s280
      %p282 = pneg %p141
      %p283 = pneg %p138
      %p284 = pneg %p169
      %p285 = pneg %p166
      %s286 = smul.u32 2, %s21
      %p287 = scmp.lt.s32.totalorder %s20, 1
      %s288 = scalar_select %p287, %s20, 1
      %p289 = scmp.lt.s32.totalorder %s286, 1
      %s290 = scalar_select %p289, %s286, 1
      %s291 = smul.addr %s288, 2
      %s292 = sadd.s32 %s290, %s291
      %s293 = smul.addr %s292, 4
      %s294 = scalar_lea.vmem %s4, %s293
      %s295 = smul.u32 2, %s21
      %p296 = scmp.lt.s32.totalorder %s20, 1
      %s297 = scalar_select %p296, %s20, 1
      %p298 = scmp.lt.s32.totalorder %s295, 1
      %s299 = scalar_select %p298, %s295, 1
      %s300 = smul.addr %s297, 2
      %s301 = sadd.s32 %s299, %s300
      %s302 = smul.addr %s301, 4
      %s303 = scalar_lea.vmem %s0, %s302
      %s304 = smul.u32 2, %s21
      %s305 = smul.u32 2, %s22
      %p306 = scmp.lt.s32.totalorder %s20, 1
      %s307 = scalar_select %p306, %s20, 1
      %p308 = scmp.lt.s32.totalorder %s305, 1
      %s309 = scalar_select %p308, %s305, 1
      %s310 = smul.addr %s307, 2
      %s311 = sadd.s32 %s309, %s310
      %s312 = smul.addr %s311, 4
      %s313 = scalar_lea.vmem %s1, %s312
      %s314 = smul.u32 2, %s22
      %s315 = smul.u32 2, %s22
      %p316 = scmp.lt.s32.totalorder %s20, 1
      %s317 = scalar_select %p316, %s20, 1
      %p318 = scmp.lt.s32.totalorder %s315, 1
      %s319 = scalar_select %p318, %s315, 1
      %s320 = smul.addr %s317, 2
      %s321 = sadd.s32 %s319, %s320
      %s322 = smul.addr %s321, 4
      %s323 = scalar_lea.vmem %s2, %s322
      %s324 = smul.u32 2, %s22
      %p325 = scmp.lt.s32.totalorder %s20, 1
      %s326 = scalar_select %p325, %s20, 1
      %p327 = scmp.lt.s32.totalorder %s22, 0
      %s328 = scalar_select %p327, %s22, 0
      %s329 = sadd.s32 %s328, %s326
      %s330 = scalar_lea.vmem %s3, %s329
      %s331 = smul.u32 2, %s21
      %p332 = scmp.lt.s32.totalorder %s20, 1
      %s333 = scalar_select %p332, %s20, 1
      %p334 = scmp.lt.s32.totalorder %s331, 1
      %s335 = scalar_select %p334, %s331, 1
      %s336 = smul.addr %s333, 2
      %s337 = sadd.s32 %s335, %s336
      %s338 = smul.addr %s337, 4
      %s339 = scalar_lea.vmem %s4, %s338
      %s340 = smul.u32 2, %s21
      %p342 = scmp.eq.s32.totalorder %s22, 0
      // Predicated region
      $region37: #{toxi_reg_forward.7} parent=35 // pred_check
        %p343 = pneg %p342
      $region38: #{toxi_reg_forward.7} parent=35 // pred_check_branch
        %345 = sbr.rel (%p343) target = $region40
      $region39: #{toxi_reg_forward.7} parent=35 // pred_region
        %vm346 = vcmask 7168
        %347 = vst.msk [vmem:[#allocation2] sm:$0xff] %vm346, -1e+30
        %348 = vst.msk [vmem:[#allocation2 + $0x8] sm:$0xff] %vm346, -1e+30
        %349 = vst.msk [vmem:[#allocation3] sm:$0xff] %vm346, 0.0
        %350 = vst.msk [vmem:[#allocation3 + $0x8] sm:$0xff] %vm346, 0.0
        %351 = vst [vmem:[#allocation4] sm:$0xff] 0.0
        %352 = vst [vmem:[#allocation4 + $0x8] sm:$0xff] 0.0
      $region40: #{toxi_reg_forward.7} parent=35 // pred_fallthru
        _
      %v353 = vld [vmem:[%s303] sm:$0xf]
      %v354 = vld [vmem:[%s303 + $0x4] sm:$0xf]
      %v355 = vld [vmem:[%s313] sm:$0xf]
      %v356 = vld [vmem:[%s313 + $0x4] sm:$0xf]
      %v357 = vld [vmem:[%s323] sm:$0xf]
      %v358 = vld [vmem:[%s323 + $0x4] sm:$0xf]
      %v359 = vld [vmem:[%s330] sm:$0x1]
      %v361 = vlaneseq
      %v362 = vshrl.u32 %v361, 7
      %v363 = vsub.s32 0, %v362
      %v364 = vrot.slane %v359, %v363
      %v368 = vunpack.c.l.b16 %v353
      %v369 = vunpack.c.l.b16 %v354
      %v370 = vpack.c.b16 %v369, %v368
      %v374 = vunpack.c.l.b16 %v355
      %v375 = vunpack.c.l.b16 %v356
      %v376 = vpack.c.b16 %v375, %v374
      %378 = vmatprep.subr.bf16.mxu0 0
      %379 = vmatpush1.bf16.xpose.msra.mxu0 0
      %380 = vmatprep.subr.bf16.mxu0 0
      %381 = vmatpush1.bf16.xpose.msra.mxu0 0
      %382 = vmatprep.subr.bf16.mxu0 0
      %383 = vmatpush1.bf16.xpose.msra.mxu0 0
      %384 = vmatprep.subr.bf16.mxu0 0
      %385 = vmatpush1.bf16.xpose.msra.mxu0 0
      %386 = vmatprep.subr.bf16.mxu0 0
      %387 = vmatpush1.bf16.xpose.msra.mxu0 0
      %388 = vmatprep.subr.bf16.mxu0 0
      %389 = vmatpush1.bf16.xpose.msra.mxu0 0
      %390 = vmatprep.subr.bf16.mxu0 0
      %391 = vmatpush1.bf16.xpose.msra.mxu0 0
      %392 = vmatprep.subr.bf16.mxu0 0
      %393 = vmatpush1.bf16.xpose.msra.mxu0 %v376
      %394 = vmatprep.subr.bf16.mxu0 0
      %395 = vmatpush2.bf16.xpose.msra.mxu0 0
      %396 = vmatprep.subr.bf16.mxu0 0
      %397 = vmatpush2.bf16.xpose.msra.mxu0 0
      %398 = vmatprep.subr.bf16.mxu0 0
      %399 = vmatpush2.bf16.xpose.msra.mxu0 0
      %400 = vmatprep.subr.bf16.mxu0 0
      %401 = vmatpush2.bf16.xpose.msra.mxu0 0
      %402 = vmatprep.subr.bf16.mxu0 0
      %403 = vmatpush2.bf16.xpose.msra.mxu0 0
      %404 = vmatprep.subr.bf16.mxu0 0
      %405 = vmatpush2.bf16.xpose.msra.mxu0 0
      %406 = vmatprep.subr.bf16.mxu0 0
      %407 = vmatpush2.bf16.xpose.msra.mxu0 0
      %408 = vmatprep.subr.bf16.mxu0 0
      %409 = vmatpush2.bf16.xpose.msra.mxu0 0
      %410 = vmatprep.mubr.bf16.mxu0 0
      %411 = vmatmul.mubr.bf16.gmra.mxu0 %v370
      %v412 = vpop.f32.mrf.mxu0
      %v413 = vadd.f32 %v364, %v412
      %v414 = vpop.f32.mrf.mxu0
      %v415 = vpop.f32.mrf.mxu0
      %v416 = vadd.f32 %v364, %v415
      %v417 = vpop.f32.mrf.mxu0
      %418 = vdwg.mxu0
      %v419 = vld [vmem:[#allocation2] sm:$0xff]
      %v420 = vld [vmem:[#allocation2 + $0x8] sm:$0xff]
      %vm421 = vcmask 130048
      %v422 = vsel %vm421, %v413, -inf
      %423 = vmax.xlane.f32.xlu0 %v422
      %v424 = vpop.xlane.xlu0 %423
      %v425 = vsel %vm421, %v416, -inf
      %426 = vmax.xlane.f32.xlu0 %v425
      %v427 = vpop.xlane.xlu0 %426
      %v428 = vmax.f32 %v419, %v424
      %v429 = vmax.f32 %v420, %v427
      %v430 = vsub.f32 %v419, %v428
      %v431 = vsub.f32 %v420, %v429
      %v432 = vmul.f32 %v430, 1.442695
      %v433 = vpow.pop %v432
      %v434 = vmul.f32 %v431, 1.442695
      %v435 = vpow.pop %v434
      %437 = vset.pattern.permute.xlu0 0
      %438 = vperm.xlu0 %437, %v428
      %v439 = vpop.permute.xlu0 %438
      %442 = vset.pattern.permute.xlu0 0
      %443 = vperm.xlu0 %442, %v429
      %v444 = vpop.permute.xlu0 %443
      %v446 = vsub.f32 %v413, %v439
      %v447 = vsub.f32 %v416, %v444
      %v448 = vmul.f32 %v446, 1.442695
      %v449 = vpow.pop %v448
      %v450 = vmul.f32 %v447, 1.442695
      %v451 = vpow.pop %v450
      %v452 = vld [vmem:[#allocation3] sm:$0xff]
      %v453 = vld [vmem:[#allocation3 + $0x8] sm:$0xff]
      %v454 = vmul.f32 %v433, %v452
      %v455 = vmul.f32 %v435, %v453
      %v456 = vsel %vm421, %v449, 0.0
      %457 = vadd.xlane.f32.xlu0 %v456
      %v458 = vpop.xlane.xlu0 %457
      %v459 = vsel %vm421, %v451, 0.0
      %460 = vadd.xlane.f32.xlu0 %v459
      %v461 = vpop.xlane.xlu0 %460
      %v462 = vadd.f32 %v454, %v458
      %v463 = vadd.f32 %v455, %v461
      %vm464 = vcmask 7168
      %465 = vst.msk [vmem:[#allocation3] sm:$0xff] %vm464, %v462
      %466 = vst.msk [vmem:[#allocation3 + $0x8] sm:$0xff] %vm464, %v463
      %v467 = vld [vmem:[#allocation4] sm:$0xff]
      %v468 = vld [vmem:[#allocation4 + $0x8] sm:$0xff]
      %470 = vset.pattern.permute.xlu0 0
      %471 = vperm.xlu0 %470, %v433
      %v472 = vpop.permute.xlu0 %471
      %475 = vset.pattern.permute.xlu0 0
      %476 = vperm.xlu0 %475, %v435
      %v477 = vpop.permute.xlu0 %476
      %v479 = vmul.f32 %v472, %v467
      %v480 = vmul.f32 %v477, %v468
      %v481 = vpack.c.bf16 %v451, %v449
      %v484 = vunpack.c.l.b16 %v357
      %v485 = vunpack.c.l.b16 %v358
      %v486 = vpack.c.b16 %v485, %v484
      %v489 = vsel %vm421, %v481, 0
      %491 = vmatprep.subr.bf16.mxu0 0
      %492 = vmatpush1.bf16.msra.mxu0 0
      %493 = vmatprep.subr.bf16.mxu0 0
      %494 = vmatpush1.bf16.msra.mxu0 0
      %495 = vmatprep.subr.bf16.mxu0 0
      %496 = vmatpush1.bf16.msra.mxu0 0
      %497 = vmatprep.subr.bf16.mxu0 0
      %498 = vmatpush1.bf16.msra.mxu0 0
      %499 = vmatprep.subr.bf16.mxu0 0
      %500 = vmatpush1.bf16.msra.mxu0 0
      %501 = vmatprep.subr.bf16.mxu0 0
      %502 = vmatpush1.bf16.msra.mxu0 0
      %503 = vmatprep.subr.bf16.mxu0 0
      %504 = vmatpush1.bf16.msra.mxu0 0
      %505 = vmatprep.subr.bf16.mxu0 0
      %506 = vmatpush1.bf16.msra.mxu0 %v486
      %507 = vmatprep.subr.bf16.mxu0 0
      %508 = vmatpush2.bf16.msra.mxu0 0
      %509 = vmatprep.subr.bf16.mxu0 0
      %510 = vmatpush2.bf16.msra.mxu0 0
      %511 = vmatprep.subr.bf16.mxu0 0
      %512 = vmatpush2.bf16.msra.mxu0 0
      %513 = vmatprep.subr.bf16.mxu0 0
      %514 = vmatpush2.bf16.msra.mxu0 0
      %515 = vmatprep.subr.bf16.mxu0 0
      %516 = vmatpush2.bf16.msra.mxu0 0
      %517 = vmatprep.subr.bf16.mxu0 0
      %518 = vmatpush2.bf16.msra.mxu0 0
      %519 = vmatprep.subr.bf16.mxu0 0
      %520 = vmatpush2.bf16.msra.mxu0 0
      %521 = vmatprep.subr.bf16.mxu0 0
      %522 = vmatpush2.bf16.msra.mxu0 0
      %523 = vmatprep.mubr.bf16.mxu0 0
      %524 = vmatmul.mubr.bf16.gmra.mxu0 %v489
      %v525 = vpop.f32.mrf.mxu0
      %v526 = vadd.f32 0.0, %v525
      %v527 = vpop.f32.mrf.mxu0
      %v528 = vpop.f32.mrf.mxu0
      %v529 = vadd.f32 0.0, %v528
      %v530 = vpop.f32.mrf.mxu0
      %531 = vdwg.mxu0
      %v532 = vadd.f32 %v479, %v526
      %v533 = vadd.f32 %v480, %v529
      %534 = vst [vmem:[#allocation4] sm:$0xff] %v532
      %535 = vst [vmem:[#allocation4 + $0x8] sm:$0xff] %v533
      %536 = vst.msk [vmem:[#allocation2] sm:$0xff] %vm464, %v428
      %537 = vst.msk [vmem:[#allocation2 + $0x8] sm:$0xff] %vm464, %v429
      // Predicated region
      $region41: #{toxi_reg_forward.7} parent=35 // pred_check
        %p538 = pneg %p342
      $region42: #{toxi_reg_forward.7} parent=35 // pred_check_branch
        %540 = sbr.rel (%p538) target = $region44
      $region43: #{toxi_reg_forward.7} parent=35 // pred_region
        %v541 = vld [vmem:[#allocation3] sm:$0xff]
        %v542 = vld [vmem:[#allocation3 + $0x8] sm:$0xff]
        %v543 = vrcp.pop %v541
        %v544 = vrcp.pop %v542
        %v545 = vld [vmem:[#allocation4] sm:$0xff]
        %v546 = vld [vmem:[#allocation4 + $0x8] sm:$0xff]
        %548 = vset.pattern.permute.xlu0 0
        %549 = vperm.xlu0 %548, %v543
        %v550 = vpop.permute.xlu0 %549
        %553 = vset.pattern.permute.xlu0 0
        %554 = vperm.xlu0 %553, %v544
        %v555 = vpop.permute.xlu0 %554
        %v557 = vmul.f32 %v545, %v550
        %v558 = vmul.f32 %v546, %v555
        %v559 = vpack.c.bf16 %v558, %v557
        %v561 = vunpack.c.l.b16 %v559
        %v562 = vunpack.c.h.b16 %v559
        %v563 = vpack.c.b16 %v561, %v561
        %v564 = vpack.c.b16 %v562, %v562
        %567 = vst [vmem:[%s339] sm:$0xf] %v563
        %568 = vst [vmem:[%s339 + $0x4] sm:$0xf] %v564
      $region44: #{toxi_reg_forward.7} parent=35 // pred_fallthru
        _
      %s569 = smul.u32 2, %s21
      %p570 = scmp.lt.s32.totalorder %s20, 1
      %s571 = scalar_select %p570, %s20, 1
      %p572 = scmp.lt.s32.totalorder %s569, 1
      %s573 = scalar_select %p572, %s569, 1
      %s574 = smul.addr %s571, 2
      %s575 = sadd.s32 %s573, %s574
      %s576 = smul.addr %s575, 4
      %s577 = scalar_lea.vmem %s4, %s576
      // Predicated region
      $region45: #{toxi_reg_forward.7} parent=35 // pred_check
        %p578 = pneg %p166
      $region46: #{toxi_reg_forward.7} parent=35 // pred_check_branch
        %580 = sbr.rel (%p578) target = $region48
      $region47: #{toxi_reg_forward.7} parent=35 // pred_region
        %s581 = smul.u32 2, %s21
      $region48: #{toxi_reg_forward.7} parent=35 // pred_fallthru
        _
    $region36: #{toxi_reg_forward.7} parent=5 // pred_fallthru
      _
    %p582 = scmp.le.s32.totalorder 2, %s10
    // Predicated region
    $region49: #{toxi_reg_forward.7} parent=5 // pred_check
      %p583 = pneg %p582
    $region50: #{toxi_reg_forward.7} parent=5 // pred_check_branch
      %585 = sbr.rel (%p583) target = $region52
    $region51: #{toxi_reg_forward.7} parent=5 // pred_region
      %s586 = ssub.s32 %s10, 2
      // Predicated region
      $region53: #{toxi_reg_forward.7} parent=51 // pred_check
        %p587 = pneg %p172
      $region54: #{toxi_reg_forward.7} parent=51 // pred_check_branch
        %589 = sbr.rel (%p587) target = $region56
      $region55: #{toxi_reg_forward.7} parent=51 // pred_region
        %s590 = smul.u32 2, %s24
        %p591 = scmp.lt.s32.totalorder %s23, 1
        %s592 = scalar_select %p591, %s23, 1
        %p593 = scmp.lt.s32.totalorder %s590, 1
        %s594 = scalar_select %p593, %s590, 1
        %s595 = smul.addr %s592, 2
        %s596 = sadd.s32 %s594, %s595
        %s597 = smul.addr %s596, 4
        %s598 = scalar_lea.vmem %s4, %s597
      $region56: #{toxi_reg_forward.7} parent=51 // pred_fallthru
        _
    $region52: #{toxi_reg_forward.7} parent=5 // pred_fallthru
      _
  $region6: #{toxi_reg_forward.7} parent=0 // loop_footer
    %s14 = sadd.s32 1, %s10
  $region7: #{toxi_reg_forward.7} parent=0 // loop_footer_branch
    %9 = sbr.rel target = $region3
  $region8: #{toxi_reg_forward.7} parent=0 // loop_exit
    _

// kernel: toxi_reg_forward.6
$region0: #{toxi_reg_forward.6}
  #allocation0 [shape = 'u32[]', space=smem, size = 0x4, offset = 0x4, fixed_abs, tag = 'smem constant byte address 0x4 - core index']
  #allocation1 [shape = 'u32[144,128]{1,0:T(1,128)}', space=vmem, size = 0x12000, scoped, tag = 'internal scratch']
  %s0 = inlined_call_operand.vmem [shape: bf16[32,128], index: 0, kind: input, shape index: {}]
  %s1 = inlined_call_operand.vmem [shape: bf16[1,128], index: 1, kind: input, shape index: {}]
  %s2 = inlined_call_operand.vmem [shape: bf16[1,128], index: 2, kind: input, shape index: {}]
  %s3 = inlined_call_operand.vmem [shape: bf16[128,128], index: 3, kind: input, shape index: {}]
  %s4 = inlined_call_operand.vmem [shape: bf16[128,128], index: 4, kind: input, shape index: {}]
  %s5 = inlined_call_operand.vmem [shape: bf16[128,128], index: 5, kind: input, shape index: {}]
  %s6 = inlined_call_operand.vmem [shape: bf16[1,128], index: 6, kind: input, shape index: {}]
  %s7 = inlined_call_operand.vmem [shape: bf16[1,128], index: 7, kind: input, shape index: {}]
  %s8 = inlined_call_operand.vmem [shape: bf16[1,128], index: 8, kind: input, shape index: {}]
  %s9 = inlined_call_operand.vmem [shape: bf16[32,128], index: 9, kind: output, shape index: {0}]
  %s10 = inlined_call_operand.vmem [shape: bf16[32,128], index: 10, kind: output, shape index: {1}]
  %s11 = inlined_call_operand.vmem [shape: bf16[32,128], index: 11, kind: output, shape index: {2}]
  %s12 = inlined_call_operand.vmem [shape: bf16[32,128], index: 12, kind: output, shape index: {3}]
  %13 = xla_tuple %s9, %s10, %s11, %s12
  %s14 = sld [smem:[#allocation0]]
  $region70: #{toxi_reg_forward.6} parent=0
    _
  %s16 = ssub.s32 1, %s14
  %s17 = scalar_select 0, %s16, %s14
  // Predicated region
  $region2: #{toxi_reg_forward.6} parent=0 // pred_check
    _
  $region3: #{toxi_reg_forward.6} parent=0 // pred_check_branch
    %19 = sbr.rel (0) target = $region5
  $region4: #{toxi_reg_forward.6} parent=0 // pred_region
    _
  $region5: #{toxi_reg_forward.6} parent=0 // pred_fallthru
    _
  // Predicated region
  $region6: #{toxi_reg_forward.6} parent=0 // pred_check
    _
  $region7: #{toxi_reg_forward.6} parent=0 // pred_check_branch
    %21 = sbr.rel (0) target = $region9
  $region8: #{toxi_reg_forward.6} parent=0 // pred_region
    _
  $region9: #{toxi_reg_forward.6} parent=0 // pred_fallthru
    _
  // Predicated region
  $region10: #{toxi_reg_forward.6} parent=0 // pred_check
    _
  $region11: #{toxi_reg_forward.6} parent=0 // pred_check_branch
    %23 = sbr.rel (0) target = $region13
  $region12: #{toxi_reg_forward.6} parent=0 // pred_region
    _
  $region13: #{toxi_reg_forward.6} parent=0 // pred_fallthru
    _
  // Predicated region
  $region14: #{toxi_reg_forward.6} parent=0 // pred_check
    _
  $region15: #{toxi_reg_forward.6} parent=0 // pred_check_branch
    %25 = sbr.rel (0) target = $region17
  $region16: #{toxi_reg_forward.6} parent=0 // pred_region
    _
  $region17: #{toxi_reg_forward.6} parent=0 // pred_fallthru
    _
  // Predicated region
  $region18: #{toxi_reg_forward.6} parent=0 // pred_check
    _
  $region19: #{toxi_reg_forward.6} parent=0 // pred_check_branch
    %27 = sbr.rel (0) target = $region21
  $region20: #{toxi_reg_forward.6} parent=0 // pred_region
    _
  $region21: #{toxi_reg_forward.6} parent=0 // pred_fallthru
    _
  // Predicated region
  $region22: #{toxi_reg_forward.6} parent=0 // pred_check
    _
  $region23: #{toxi_reg_forward.6} parent=0 // pred_check_branch
    %29 = sbr.rel (0) target = $region25
  $region24: #{toxi_reg_forward.6} parent=0 // pred_region
    _
  $region25: #{toxi_reg_forward.6} parent=0 // pred_fallthru
    _
  // Predicated region
  $region26: #{toxi_reg_forward.6} parent=0 // pred_check
    _
  $region27: #{toxi_reg_forward.6} parent=0 // pred_check_branch
    %31 = sbr.rel (0) target = $region29
  $region28: #{toxi_reg_forward.6} parent=0 // pred_region
    _
  $region29: #{toxi_reg_forward.6} parent=0 // pred_fallthru
    _
  // Predicated region
  $region30: #{toxi_reg_forward.6} parent=0 // pred_check
    _
  $region31: #{toxi_reg_forward.6} parent=0 // pred_check_branch
    %33 = sbr.rel (0) target = $region33
  $region32: #{toxi_reg_forward.6} parent=0 // pred_region
    _
  $region33: #{toxi_reg_forward.6} parent=0 // pred_fallthru
    _
  // Predicated region
  $region34: #{toxi_reg_forward.6} parent=0 // pred_check
    _
  $region35: #{toxi_reg_forward.6} parent=0 // pred_check_branch
    %35 = sbr.rel (0) target = $region37
  $region36: #{toxi_reg_forward.6} parent=0 // pred_region
    _
  $region37: #{toxi_reg_forward.6} parent=0 // pred_fallthru
    _
  %v37 = vld [vmem:[%s0] sm:$0xf]
  %v38 = vld [vmem:[%s0 + $0x4] sm:$0xf]
  %v39 = vld [vmem:[%s0 + $0x8] sm:$0xf]
  %v40 = vld [vmem:[%s0 + $0xc] sm:$0xf]
  %v41 = vunpack.c.l.bf16 %v37
  %v42 = vunpack.c.l.bf16 %v38
  %v43 = vunpack.c.l.bf16 %v39
  %v44 = vunpack.c.l.bf16 %v40
  %45 = vadd.xlane.f32.xlu0 %v41
  %v46 = vpop.xlane.xlu0 %45
  %47 = vadd.xlane.f32.xlu0 %v42
  %v48 = vpop.xlane.xlu0 %47
  %49 = vadd.xlane.f32.xlu0 %v43
  %v50 = vpop.xlane.xlu0 %49
  %51 = vadd.xlane.f32.xlu0 %v44
  %v52 = vpop.xlane.xlu0 %51
  %v53 = vrcp.pop 128.0
  %v54 = vmul.f32 %v46, %v53
  %v55 = vmul.f32 %v48, %v53
  %v56 = vmul.f32 %v50, %v53
  %v57 = vmul.f32 %v52, %v53
  %v58 = vsub.f32 %v41, %v54
  %v59 = vsub.f32 %v42, %v55
  %v60 = vsub.f32 %v43, %v56
  %v61 = vsub.f32 %v44, %v57
  %v62 = vmul.f32 %v58, %v58
  %v63 = vmul.f32 %v59, %v59
  %v64 = vmul.f32 %v60, %v60
  %v65 = vmul.f32 %v61, %v61
  %66 = vadd.xlane.f32.xlu0 %v62
  %v67 = vpop.xlane.xlu0 %66
  %68 = vadd.xlane.f32.xlu0 %v63
  %v69 = vpop.xlane.xlu0 %68
  %70 = vadd.xlane.f32.xlu0 %v64
  %v71 = vpop.xlane.xlu0 %70
  %72 = vadd.xlane.f32.xlu0 %v65
  %v73 = vpop.xlane.xlu0 %72
  %v74 = vmul.f32 %v67, %v53
  %v75 = vmul.f32 %v69, %v53
  %v76 = vmul.f32 %v71, %v53
  %v77 = vmul.f32 %v73, %v53
  %v78 = vadd.f32 %v74, 1e-12
  %v79 = vadd.f32 %v75, 1e-12
  %v80 = vadd.f32 %v76, 1e-12
  %v81 = vadd.f32 %v77, 1e-12
  %v82 = vrsqrt.pop %v78
  %v83 = vrsqrt.pop %v79
  %v84 = vrsqrt.pop %v80
  %v85 = vrsqrt.pop %v81
  %v86 = vmul.f32 %v58, %v82
  %v87 = vmul.f32 %v59, %v83
  %v88 = vmul.f32 %v60, %v84
  %v89 = vmul.f32 %v61, %v85
  %v90 = vld [vmem:[%s1] sm:$0x1]
  %v91 = vunpack.c.l.bf16 %v90
  %v92 = vlaneseq
  %v93 = vshrl.u32 %v92, 7
  %v94 = vsub.s32 0, %v93
  %v95 = vrot.slane %v91, %v94
  %v96 = vmul.f32 %v86, %v95
  %v97 = vmul.f32 %v87, %v95
  %v98 = vmul.f32 %v88, %v95
  %v99 = vmul.f32 %v89, %v95
  %v100 = vld [vmem:[%s2] sm:$0x1]
  %v101 = vunpack.c.l.bf16 %v100
  %v102 = vlaneseq
  %v103 = vshrl.u32 %v102, 7
  %v104 = vsub.s32 0, %v103
  %v105 = vrot.slane %v101, %v104
  %v106 = vadd.f32 %v96, %v105
  %v107 = vadd.f32 %v97, %v105
  %v108 = vadd.f32 %v98, %v105
  %v109 = vadd.f32 %v99, %v105
  %v110 = vpack.c.bf16 %v107, %v106
  %v111 = vpack.c.bf16 %v109, %v108
  %v114 = vunpack.c.l.b16 %v110
  %v115 = vunpack.c.h.b16 %v110
  %v116 = vunpack.c.l.b16 %v111
  %v117 = vunpack.c.h.b16 %v111
  %v118 = vpack.c.b16 %v114, %v114
  %v119 = vpack.c.b16 %v115, %v115
  %v120 = vpack.c.b16 %v116, %v116
  %v121 = vpack.c.b16 %v117, %v117
  %126 = vst [vmem:[%s9] sm:$0xf] %v118
  %127 = vst [vmem:[%s9 + $0x4] sm:$0xf] %v119
  %128 = vst [vmem:[%s9 + $0x8] sm:$0xf] %v120
  %129 = vst [vmem:[%s9 + $0xc] sm:$0xf] %v121
  %v130 = vld [vmem:[%s3] sm:$0xf]
  %v131 = vld [vmem:[%s3 + $0x4] sm:$0xf]
  %v132 = vld [vmem:[%s3 + $0x8] sm:$0xf]
  %v133 = vld [vmem:[%s3 + $0xc] sm:$0xf]
  %v134 = vld [vmem:[%s3 + $0x10] sm:$0xf]
  %v135 = vld [vmem:[%s3 + $0x14] sm:$0xf]
  %v136 = vld [vmem:[%s3 + $0x18] sm:$0xf]
  %v137 = vld [vmem:[%s3 + $0x1c] sm:$0xf]
  %v138 = vld [vmem:[%s3 + $0x20] sm:$0xf]
  %v139 = vld [vmem:[%s3 + $0x24] sm:$0xf]
  %v140 = vld [vmem:[%s3 + $0x28] sm:$0xf]
  %v141 = vld [vmem:[%s3 + $0x2c] sm:$0xf]
  %v142 = vld [vmem:[%s3 + $0x30] sm:$0xf]
  %v143 = vld [vmem:[%s3 + $0x34] sm:$0xf]
  %v144 = vld [vmem:[%s3 + $0x38] sm:$0xf]
  %v145 = vld [vmem:[%s3 + $0x3c] sm:$0xf]
  %v146 = vld [vmem:[%s6] sm:$0x1]
  %v147 = vunpack.c.l.bf16 %v146
  %v148 = vlaneseq
  %v149 = vshrl.u32 %v148, 7
  %v150 = vsub.s32 0, %v149
  %v151 = vrot.slane %v147, %v150
  %v168 = vunpack.c.l.b16 %v130
  %v169 = vunpack.c.l.b16 %v131
  %v170 = vunpack.c.l.b16 %v132
  %v171 = vunpack.c.l.b16 %v133
  %v172 = vunpack.c.l.b16 %v134
  %v173 = vunpack.c.l.b16 %v135
  %v174 = vunpack.c.l.b16 %v136
  %v175 = vunpack.c.l.b16 %v137
  %v176 = vunpack.c.l.b16 %v138
  %v177 = vunpack.c.l.b16 %v139
  %v178 = vunpack.c.l.b16 %v140
  %v179 = vunpack.c.l.b16 %v141
  %v180 = vunpack.c.l.b16 %v142
  %v181 = vunpack.c.l.b16 %v143
  %v182 = vunpack.c.l.b16 %v144
  %v183 = vunpack.c.l.b16 %v145
  %v184 = vpack.c.b16 %v169, %v168
  %v185 = vpack.c.b16 %v171, %v170
  %v186 = vpack.c.b16 %v173, %v172
  %v187 = vpack.c.b16 %v175, %v174
  %v188 = vpack.c.b16 %v177, %v176
  %v189 = vpack.c.b16 %v179, %v178
  %v190 = vpack.c.b16 %v181, %v180
  %v191 = vpack.c.b16 %v183, %v182
  %200 = vmatprep.subr.bf16.mxu0 0
  %201 = vmatpush1.bf16.msra.mxu0 %v191
  %202 = vmatprep.subr.bf16.mxu0 0
  %203 = vmatpush1.bf16.msra.mxu0 %v190
  %204 = vmatprep.subr.bf16.mxu0 0
  %205 = vmatpush1.bf16.msra.mxu0 %v189
  %206 = vmatprep.subr.bf16.mxu0 0
  %207 = vmatpush1.bf16.msra.mxu0 %v188
  %208 = vmatprep.subr.bf16.mxu0 0
  %209 = vmatpush1.bf16.msra.mxu0 %v187
  %210 = vmatprep.subr.bf16.mxu0 0
  %211 = vmatpush1.bf16.msra.mxu0 %v186
  %212 = vmatprep.subr.bf16.mxu0 0
  %213 = vmatpush1.bf16.msra.mxu0 %v185
  %214 = vmatprep.subr.bf16.mxu0 0
  %215 = vmatpush1.bf16.msra.mxu0 %v184
  %216 = vmatprep.subr.bf16.mxu0 0
  %217 = vmatpush2.bf16.msra.mxu0 0
  %218 = vmatprep.subr.bf16.mxu0 0
  %219 = vmatpush2.bf16.msra.mxu0 0
  %220 = vmatprep.subr.bf16.mxu0 0
  %221 = vmatpush2.bf16.msra.mxu0 0
  %222 = vmatprep.subr.bf16.mxu0 0
  %223 = vmatpush2.bf16.msra.mxu0 0
  %224 = vmatprep.subr.bf16.mxu0 0
  %225 = vmatpush2.bf16.msra.mxu0 0
  %226 = vmatprep.subr.bf16.mxu0 0
  %227 = vmatpush2.bf16.msra.mxu0 0
  %228 = vmatprep.subr.bf16.mxu0 0
  %229 = vmatpush2.bf16.msra.mxu0 0
  %230 = vmatprep.subr.bf16.mxu0 0
  %231 = vmatpush2.bf16.msra.mxu0 0
  %232 = vmatprep.mubr.bf16.mxu0 0
  %233 = vmatmul.mubr.bf16.gmra.mxu0 %v110
  %v234 = vpop.f32.mrf.mxu0
  %v235 = vadd.f32 %v151, %v234
  %v236 = vpop.f32.mrf.mxu0
  %v237 = vpop.f32.mrf.mxu0
  %v238 = vadd.f32 %v151, %v237
  %v239 = vpop.f32.mrf.mxu0
  %240 = vmatprep.mubr.bf16.mxu0 0
  %241 = vmatmul.mubr.bf16.gmra.mxu0 %v111
  %v242 = vpop.f32.mrf.mxu0
  %v243 = vadd.f32 %v151, %v242
  %v244 = vpop.f32.mrf.mxu0
  %v245 = vpop.f32.mrf.mxu0
  %v246 = vadd.f32 %v151, %v245
  %v247 = vpop.f32.mrf.mxu0
  %248 = vdwg.mxu0
  %v249 = vpack.c.bf16 %v238, %v235
  %v250 = vpack.c.bf16 %v246, %v243
  %v253 = vunpack.c.l.b16 %v249
  %v254 = vunpack.c.h.b16 %v249
  %v255 = vunpack.c.l.b16 %v250
  %v256 = vunpack.c.h.b16 %v250
  %v257 = vpack.c.b16 %v253, %v253
  %v258 = vpack.c.b16 %v254, %v254
  %v259 = vpack.c.b16 %v255, %v255
  %v260 = vpack.c.b16 %v256, %v256
  %265 = vst [vmem:[%s10] sm:$0xf] %v257
  %266 = vst [vmem:[%s10 + $0x4] sm:$0xf] %v258
  %267 = vst [vmem:[%s10 + $0x8] sm:$0xf] %v259
  %268 = vst [vmem:[%s10 + $0xc] sm:$0xf] %v260
  %v269 = vld [vmem:[%s4] sm:$0xf]
  %v270 = vld [vmem:[%s4 + $0x4] sm:$0xf]
  %v271 = vld [vmem:[%s4 + $0x8] sm:$0xf]
  %v272 = vld [vmem:[%s4 + $0xc] sm:$0xf]
  %v273 = vld [vmem:[%s4 + $0x10] sm:$0xf]
  %v274 = vld [vmem:[%s4 + $0x14] sm:$0xf]
  %v275 = vld [vmem:[%s4 + $0x18] sm:$0xf]
  %v276 = vld [vmem:[%s4 + $0x1c] sm:$0xf]
  %v277 = vld [vmem:[%s4 + $0x20] sm:$0xf]
  %v278 = vld [vmem:[%s4 + $0x24] sm:$0xf]
  %v279 = vld [vmem:[%s4 + $0x28] sm:$0xf]
  %v280 = vld [vmem:[%s4 + $0x2c] sm:$0xf]
  %v281 = vld [vmem:[%s4 + $0x30] sm:$0xf]
  %v282 = vld [vmem:[%s4 + $0x34] sm:$0xf]
  %v283 = vld [vmem:[%s4 + $0x38] sm:$0xf]
  %v284 = vld [vmem:[%s4 + $0x3c] sm:$0xf]
  %v285 = vld [vmem:[%s7] sm:$0x1]
  %v286 = vunpack.c.l.bf16 %v285
  %v287 = vlaneseq
  %v288 = vshrl.u32 %v287, 7
  %v289 = vsub.s32 0, %v288
  %v290 = vrot.slane %v286, %v289
  %v307 = vunpack.c.l.b16 %v269
  %v308 = vunpack.c.l.b16 %v270
  %v309 = vunpack.c.l.b16 %v271
  %v310 = vunpack.c.l.b16 %v272
  %v311 = vunpack.c.l.b16 %v273
  %v312 = vunpack.c.l.b16 %v274
  %v313 = vunpack.c.l.b16 %v275
  %v314 = vunpack.c.l.b16 %v276
  %v315 = vunpack.c.l.b16 %v277
  %v316 = vunpack.c.l.b16 %v278
  %v317 = vunpack.c.l.b16 %v279
  %v318 = vunpack.c.l.b16 %v280
  %v319 = vunpack.c.l.b16 %v281
  %v320 = vunpack.c.l.b16 %v282
  %v321 = vunpack.c.l.b16 %v283
  %v322 = vunpack.c.l.b16 %v284
  %v323 = vpack.c.b16 %v308, %v307
  %v324 = vpack.c.b16 %v310, %v309
  %v325 = vpack.c.b16 %v312, %v311
  %v326 = vpack.c.b16 %v314, %v313
  %v327 = vpack.c.b16 %v316, %v315
  %v328 = vpack.c.b16 %v318, %v317
  %v329 = vpack.c.b16 %v320, %v319
  %v330 = vpack.c.b16 %v322, %v321
  %339 = vmatprep.subr.bf16.mxu0 0
  %340 = vmatpush1.bf16.msra.mxu0 %v330
  %341 = vmatprep.subr.bf16.mxu0 0
  %342 = vmatpush1.bf16.msra.mxu0 %v329
  %343 = vmatprep.subr.bf16.mxu0 0
  %344 = vmatpush1.bf16.msra.mxu0 %v328
  %345 = vmatprep.subr.bf16.mxu0 0
  %346 = vmatpush1.bf16.msra.mxu0 %v327
  %347 = vmatprep.subr.bf16.mxu0 0
  %348 = vmatpush1.bf16.msra.mxu0 %v326
  %349 = vmatprep.subr.bf16.mxu0 0
  %350 = vmatpush1.bf16.msra.mxu0 %v325
  %351 = vmatprep.subr.bf16.mxu0 0
  %352 = vmatpush1.bf16.msra.mxu0 %v324
  %353 = vmatprep.subr.bf16.mxu0 0
  %354 = vmatpush1.bf16.msra.mxu0 %v323
  %355 = vmatprep.subr.bf16.mxu0 0
  %356 = vmatpush2.bf16.msra.mxu0 0
  %357 = vmatprep.subr.bf16.mxu0 0
  %358 = vmatpush2.bf16.msra.mxu0 0
  %359 = vmatprep.subr.bf16.mxu0 0
  %360 = vmatpush2.bf16.msra.mxu0 0
  %361 = vmatprep.subr.bf16.mxu0 0
  %362 = vmatpush2.bf16.msra.mxu0 0
  %363 = vmatprep.subr.bf16.mxu0 0
  %364 = vmatpush2.bf16.msra.mxu0 0
  %365 = vmatprep.subr.bf16.mxu0 0
  %366 = vmatpush2.bf16.msra.mxu0 0
  %367 = vmatprep.subr.bf16.mxu0 0
  %368 = vmatpush2.bf16.msra.mxu0 0
  %369 = vmatprep.subr.bf16.mxu0 0
  %370 = vmatpush2.bf16.msra.mxu0 0
  %371 = vmatprep.mubr.bf16.mxu0 0
  %372 = vmatmul.mubr.bf16.gmra.mxu0 %v110
  %v373 = vpop.f32.mrf.mxu0
  %v374 = vadd.f32 %v290, %v373
  %v375 = vpop.f32.mrf.mxu0
  %v376 = vpop.f32.mrf.mxu0
  %v377 = vadd.f32 %v290, %v376
  %v378 = vpop.f32.mrf.mxu0
  %379 = vmatprep.mubr.bf16.mxu0 0
  %380 = vmatmul.mubr.bf16.gmra.mxu0 %v111
  %v381 = vpop.f32.mrf.mxu0
  %v382 = vadd.f32 %v290, %v381
  %v383 = vpop.f32.mrf.mxu0
  %v384 = vpop.f32.mrf.mxu0
  %v385 = vadd.f32 %v290, %v384
  %v386 = vpop.f32.mrf.mxu0
  %387 = vdwg.mxu0
  %v388 = vpack.c.bf16 %v377, %v374
  %v389 = vpack.c.bf16 %v385, %v382
  %v392 = vunpack.c.l.b16 %v388
  %v393 = vunpack.c.h.b16 %v388
  %v394 = vunpack.c.l.b16 %v389
  %v395 = vunpack.c.h.b16 %v389
  %v396 = vpack.c.b16 %v392, %v392
  %v397 = vpack.c.b16 %v393, %v393
  %v398 = vpack.c.b16 %v394, %v394
  %v399 = vpack.c.b16 %v395, %v395
  %404 = vst [vmem:[%s11] sm:$0xf] %v396
  %405 = vst [vmem:[%s11 + $0x4] sm:$0xf] %v397
  %406 = vst [vmem:[%s11 + $0x8] sm:$0xf] %v398
  %407 = vst [vmem:[%s11 + $0xc] sm:$0xf] %v399
  %v408 = vld [vmem:[%s5] sm:$0xf]
  %v409 = vld [vmem:[%s5 + $0x4] sm:$0xf]
  %v410 = vld [vmem:[%s5 + $0x8] sm:$0xf]
  %v411 = vld [vmem:[%s5 + $0xc] sm:$0xf]
  %v412 = vld [vmem:[%s5 + $0x10] sm:$0xf]
  %v413 = vld [vmem:[%s5 + $0x14] sm:$0xf]
  %v414 = vld [vmem:[%s5 + $0x18] sm:$0xf]
  %v415 = vld [vmem:[%s5 + $0x1c] sm:$0xf]
  %v416 = vld [vmem:[%s5 + $0x20] sm:$0xf]
  %v417 = vld [vmem:[%s5 + $0x24] sm:$0xf]
  %v418 = vld [vmem:[%s5 + $0x28] sm:$0xf]
  %v419 = vld [vmem:[%s5 + $0x2c] sm:$0xf]
  %v420 = vld [vmem:[%s5 + $0x30] sm:$0xf]
  %v421 = vld [vmem:[%s5 + $0x34] sm:$0xf]
  %v422 = vld [vmem:[%s5 + $0x38] sm:$0xf]
  %v423 = vld [vmem:[%s5 + $0x3c] sm:$0xf]
  %v424 = vld [vmem:[%s8] sm:$0x1]
  %v425 = vunpack.c.l.bf16 %v424
  %v426 = vlaneseq
  %v427 = vshrl.u32 %v426, 7
  %v428 = vsub.s32 0, %v427
  %v429 = vrot.slane %v425, %v428
  %v446 = vunpack.c.l.b16 %v408
  %v447 = vunpack.c.l.b16 %v409
  %v448 = vunpack.c.l.b16 %v410
  %v449 = vunpack.c.l.b16 %v411
  %v450 = vunpack.c.l.b16 %v412
  %v451 = vunpack.c.l.b16 %v413
  %v452 = vunpack.c.l.b16 %v414
  %v453 = vunpack.c.l.b16 %v415
  %v454 = vunpack.c.l.b16 %v416
  %v455 = vunpack.c.l.b16 %v417
  %v456 = vunpack.c.l.b16 %v418
  %v457 = vunpack.c.l.b16 %v419
  %v458 = vunpack.c.l.b16 %v420
  %v459 = vunpack.c.l.b16 %v421
  %v460 = vunpack.c.l.b16 %v422
  %v461 = vunpack.c.l.b16 %v423
  %v462 = vpack.c.b16 %v447, %v446
  %v463 = vpack.c.b16 %v449, %v448
  %v464 = vpack.c.b16 %v451, %v450
  %v465 = vpack.c.b16 %v453, %v452
  %v466 = vpack.c.b16 %v455, %v454
  %v467 = vpack.c.b16 %v457, %v456
  %v468 = vpack.c.b16 %v459, %v458
  %v469 = vpack.c.b16 %v461, %v460
  %478 = vmatprep.subr.bf16.mxu0 0
  %479 = vmatpush1.bf16.msra.mxu0 %v469
  %480 = vmatprep.subr.bf16.mxu0 0
  %481 = vmatpush1.bf16.msra.mxu0 %v468
  %482 = vmatprep.subr.bf16.mxu0 0
  %483 = vmatpush1.bf16.msra.mxu0 %v467
  %484 = vmatprep.subr.bf16.mxu0 0
  %485 = vmatpush1.bf16.msra.mxu0 %v466
  %486 = vmatprep.subr.bf16.mxu0 0
  %487 = vmatpush1.bf16.msra.mxu0 %v465
  %488 = vmatprep.subr.bf16.mxu0 0
  %489 = vmatpush1.bf16.msra.mxu0 %v464
  %490 = vmatprep.subr.bf16.mxu0 0
  %491 = vmatpush1.bf16.msra.mxu0 %v463
  %492 = vmatprep.subr.bf16.mxu0 0
  %493 = vmatpush1.bf16.msra.mxu0 %v462
  %494 = vmatprep.subr.bf16.mxu0 0
  %495 = vmatpush2.bf16.msra.mxu0 0
  %496 = vmatprep.subr.bf16.mxu0 0
  %497 = vmatpush2.bf16.msra.mxu0 0
  %498 = vmatprep.subr.bf16.mxu0 0
  %499 = vmatpush2.bf16.msra.mxu0 0
  %500 = vmatprep.subr.bf16.mxu0 0
  %501 = vmatpush2.bf16.msra.mxu0 0
  %502 = vmatprep.subr.bf16.mxu0 0
  %503 = vmatpush2.bf16.msra.mxu0 0
  %504 = vmatprep.subr.bf16.mxu0 0
  %505 = vmatpush2.bf16.msra.mxu0 0
  %506 = vmatprep.subr.bf16.mxu0 0
  %507 = vmatpush2.bf16.msra.mxu0 0
  %508 = vmatprep.subr.bf16.mxu0 0
  %509 = vmatpush2.bf16.msra.mxu0 0
  %510 = vmatprep.mubr.bf16.mxu0 0
  %511 = vmatmul.mubr.bf16.gmra.mxu0 %v110
  %v512 = vpop.f32.mrf.mxu0
  %v513 = vadd.f32 %v429, %v512
  %v514 = vpop.f32.mrf.mxu0
  %v515 = vpop.f32.mrf.mxu0
  %v516 = vadd.f32 %v429, %v515
  %v517 = vpop.f32.mrf.mxu0
  %518 = vmatprep.mubr.bf16.mxu0 0
  %519 = vmatmul.mubr.bf16.gmra.mxu0 %v111
  %v520 = vpop.f32.mrf.mxu0
  %v521 = vadd.f32 %v429, %v520
  %v522 = vpop.f32.mrf.mxu0
  %v523 = vpop.f32.mrf.mxu0
  %v524 = vadd.f32 %v429, %v523
  %v525 = vpop.f32.mrf.mxu0
  %526 = vdwg.mxu0
  %v527 = vpack.c.bf16 %v516, %v513
  %v528 = vpack.c.bf16 %v524, %v521
  %v531 = vunpack.c.l.b16 %v527
  %v532 = vunpack.c.h.b16 %v527
  %v533 = vunpack.c.l.b16 %v528
  %v534 = vunpack.c.h.b16 %v528
  %v535 = vpack.c.b16 %v531, %v531
  %v536 = vpack.c.b16 %v532, %v532
  %v537 = vpack.c.b16 %v533, %v533
  %v538 = vpack.c.b16 %v534, %v534
  %543 = vst [vmem:[%s12] sm:$0xf] %v535
  %544 = vst [vmem:[%s12 + $0x4] sm:$0xf] %v536
  %545 = vst [vmem:[%s12 + $0x8] sm:$0xf] %v537
  %546 = vst [vmem:[%s12 + $0xc] sm:$0xf] %v538
  // Predicated region
  $region38: #{toxi_reg_forward.6} parent=0 // pred_check
    _
  $region39: #{toxi_reg_forward.6} parent=0 // pred_check_branch
    %548 = sbr.rel (0) target = $region41
  $region40: #{toxi_reg_forward.6} parent=0 // pred_region
    _
  $region41: #{toxi_reg_forward.6} parent=0 // pred_fallthru
    _
  // Predicated region
  $region42: #{toxi_reg_forward.6} parent=0 // pred_check
    _
  $region43: #{toxi_reg_forward.6} parent=0 // pred_check_branch
    %550 = sbr.rel (0) target = $region45
  $region44: #{toxi_reg_forward.6} parent=0 // pred_region
    _
  $region45: #{toxi_reg_forward.6} parent=0 // pred_fallthru
    _
  // Predicated region
  $region46: #{toxi_reg_forward.6} parent=0 // pred_check
    _
  $region47: #{toxi_reg_forward.6} parent=0 // pred_check_branch
    %552 = sbr.rel (0) target = $region49
  $region48: #{toxi_reg_forward.6} parent=0 // pred_region
    _
  $region49: #{toxi_reg_forward.6} parent=0 // pred_fallthru
    _
  // Predicated region
  $region50: #{toxi_reg_forward.6} parent=0 // pred_check
    _
  $region51: #{toxi_reg_forward.6} parent=0 // pred_check_branch
    %554 = sbr.rel (0) target = $region53
  $region52: #{toxi_reg_forward.6} parent=0 // pred_region
    _
  $region53: #{toxi_reg_forward.6} parent=0 // pred_fallthru
    _
  // Predicated region
  $region54: #{toxi_reg_forward.6} parent=0 // pred_check
    _
  $region55: #{toxi_reg_forward.6} parent=0 // pred_check_branch
    %556 = sbr.rel (0) target = $region57
  $region56: #{toxi_reg_forward.6} parent=0 // pred_region
    _
  $region57: #{toxi_reg_forward.6} parent=0 // pred_fallthru
    _
  // Predicated region
  $region58: #{toxi_reg_forward.6} parent=0 // pred_check
    _
  $region59: #{toxi_reg_forward.6} parent=0 // pred_check_branch
    %558 = sbr.rel (0) target = $region61
  $region60: #{toxi_reg_forward.6} parent=0 // pred_region
    _
  $region61: #{toxi_reg_forward.6} parent=0 // pred_fallthru
    _
  // Predicated region
  $region62: #{toxi_reg_forward.6} parent=0 // pred_check
    _
  $region63: #{toxi_reg_forward.6} parent=0 // pred_check_branch
    %560 = sbr.rel (0) target = $region65
  $region64: #{toxi_reg_forward.6} parent=0 // pred_region
    _
  $region65: #{toxi_reg_forward.6} parent=0 // pred_fallthru
    _
  // Predicated region
  $region66: #{toxi_reg_forward.6} parent=0 // pred_check
    _
  $region67: #{toxi_reg_forward.6} parent=0 // pred_check_branch
    %562 = sbr.rel (0) target = $region69
  $region68: #{toxi_reg_forward.6} parent=0 // pred_region
    _
  $region69: #{toxi_reg_forward.6} parent=0 // pred_fallthru
    _

// kernel: toxi_reg_forward.10
$region0: #{toxi_reg_forward.10}
  #allocation0 [shape = 'u32[]', space=smem, size = 0x4, offset = 0x4, fixed_abs, tag = 'smem constant byte address 0x4 - core index']
  #allocation1 [shape = 'u32[144,128]{1,0:T(1,128)}', space=vmem, size = 0x12000, scoped, tag = 'internal scratch']
  #allocation2 [shape = 'f32[32,128]{1,0:T(8,128)}', space=vmem, size = 0x4000, scoped, tag = 'scratch operand']
  %s0 = inlined_call_operand.vmem [shape: bf16[32,512], index: 0, kind: input, shape index: {}]
  %s1 = inlined_call_operand.vmem [shape: bf16[512,128], index: 1, kind: input, shape index: {}]
  %s2 = inlined_call_operand.vmem [shape: bf16[1,128], index: 2, kind: input, shape index: {}]
  %s3 = inlined_call_operand.vmem [shape: bf16[32,128], index: 3, kind: input, shape index: {}]
  %s4 = inlined_call_operand.vmem [shape: bf16[1,128], index: 4, kind: input, shape index: {}]
  %s5 = inlined_call_operand.vmem [shape: bf16[1,128], index: 5, kind: input, shape index: {}]
  %s6 = inlined_call_operand.vmem [shape: bf16[32,128], index: 6, kind: output, shape index: {}]
  %s7 = sld [smem:[#allocation0]]
  $region42: #{toxi_reg_forward.10} parent=0
    _
  %s9 = ssub.s32 1, %s7
  %s10 = scalar_select 0, %s9, %s7
  // Predicated region
  $region2: #{toxi_reg_forward.10} parent=0 // pred_check
    _
  $region3: #{toxi_reg_forward.10} parent=0 // pred_check_branch
    %12 = sbr.rel (0) target = $region5
  $region4: #{toxi_reg_forward.10} parent=0 // pred_region
    _
  $region5: #{toxi_reg_forward.10} parent=0 // pred_fallthru
    _
  // Predicated region
  $region6: #{toxi_reg_forward.10} parent=0 // pred_check
    _
  $region7: #{toxi_reg_forward.10} parent=0 // pred_check_branch
    %14 = sbr.rel (0) target = $region9
  $region8: #{toxi_reg_forward.10} parent=0 // pred_region
    _
  $region9: #{toxi_reg_forward.10} parent=0 // pred_fallthru
    _
  // Predicated region
  $region10: #{toxi_reg_forward.10} parent=0 // pred_check
    _
  $region11: #{toxi_reg_forward.10} parent=0 // pred_check_branch
    %16 = sbr.rel (0) target = $region13
  $region12: #{toxi_reg_forward.10} parent=0 // pred_region
    _
  $region13: #{toxi_reg_forward.10} parent=0 // pred_fallthru
    _
  // Predicated region
  $region14: #{toxi_reg_forward.10} parent=0 // pred_check
    _
  $region15: #{toxi_reg_forward.10} parent=0 // pred_check_branch
    %18 = sbr.rel (0) target = $region17
  $region16: #{toxi_reg_forward.10} parent=0 // pred_region
    _
  $region17: #{toxi_reg_forward.10} parent=0 // pred_fallthru
    _
  // Predicated region
  $region18: #{toxi_reg_forward.10} parent=0 // pred_check
    _
  $region19: #{toxi_reg_forward.10} parent=0 // pred_check_branch
    %20 = sbr.rel (0) target = $region21
  $region20: #{toxi_reg_forward.10} parent=0 // pred_region
    _
  $region21: #{toxi_reg_forward.10} parent=0 // pred_fallthru
    _
  // Predicated region
  $region22: #{toxi_reg_forward.10} parent=0 // pred_check
    _
  $region23: #{toxi_reg_forward.10} parent=0 // pred_check_branch
    %22 = sbr.rel (0) target = $region25
  $region24: #{toxi_reg_forward.10} parent=0 // pred_region
    _
  $region25: #{toxi_reg_forward.10} parent=0 // pred_fallthru
    _
  %p24 = scmp.eq.s32.totalorder 0, 0
  // Predicated region
  $region26: #{toxi_reg_forward.10} parent=0 // pred_check
    %p25 = pneg %p24
  $region27: #{toxi_reg_forward.10} parent=0 // pred_check_branch
    %27 = sbr.rel (%p25) target = $region29
  $region28: #{toxi_reg_forward.10} parent=0 // pred_region
    %28 = vst [vmem:[#allocation2] sm:$0xff] 0.0
    %29 = vst [vmem:[#allocation2 + $0x8] sm:$0xff] 0.0
    %30 = vst [vmem:[#allocation2 + $0x10] sm:$0xff] 0.0
    %31 = vst [vmem:[#allocation2 + $0x18] sm:$0xff] 0.0
  $region29: #{toxi_reg_forward.10} parent=0 // pred_fallthru
    _
  %v32 = vld [vmem:[#allocation2] sm:$0xff]
  %v33 = vld [vmem:[#allocation2 + $0x8] sm:$0xff]
  %v34 = vld [vmem:[#allocation2 + $0x10] sm:$0xff]
  %v35 = vld [vmem:[#allocation2 + $0x18] sm:$0xff]
  %v36 = vld [vmem:[%s0] sm:$0xff]
  %v37 = vld [vmem:[%s0 + $0x8] sm:$0xff]
  %v38 = vld [vmem:[%s0 + $0x10] sm:$0xff]
  %v39 = vld [vmem:[%s0 + $0x18] sm:$0xff]
  %v40 = vld [vmem:[%s0 + $0x20] sm:$0xff]
  %v41 = vld [vmem:[%s0 + $0x28] sm:$0xff]
  %v42 = vld [vmem:[%s0 + $0x30] sm:$0xff]
  %v43 = vld [vmem:[%s0 + $0x38] sm:$0xff]
  %v44 = vld [vmem:[%s1] sm:$0xf]
  %v45 = vld [vmem:[%s1 + $0x4] sm:$0xf]
  %v46 = vld [vmem:[%s1 + $0x8] sm:$0xf]
  %v47 = vld [vmem:[%s1 + $0xc] sm:$0xf]
  %v48 = vld [vmem:[%s1 + $0x10] sm:$0xf]
  %v49 = vld [vmem:[%s1 + $0x14] sm:$0xf]
  %v50 = vld [vmem:[%s1 + $0x18] sm:$0xf]
  %v51 = vld [vmem:[%s1 + $0x1c] sm:$0xf]
  %v52 = vld [vmem:[%s1 + $0x20] sm:$0xf]
  %v53 = vld [vmem:[%s1 + $0x24] sm:$0xf]
  %v54 = vld [vmem:[%s1 + $0x28] sm:$0xf]
  %v55 = vld [vmem:[%s1 + $0x2c] sm:$0xf]
  %v56 = vld [vmem:[%s1 + $0x30] sm:$0xf]
  %v57 = vld [vmem:[%s1 + $0x34] sm:$0xf]
  %v58 = vld [vmem:[%s1 + $0x38] sm:$0xf]
  %v59 = vld [vmem:[%s1 + $0x3c] sm:$0xf]
  %v60 = vld [vmem:[%s1 + $0x40] sm:$0xf]
  %v61 = vld [vmem:[%s1 + $0x44] sm:$0xf]
  %v62 = vld [vmem:[%s1 + $0x48] sm:$0xf]
  %v63 = vld [vmem:[%s1 + $0x4c] sm:$0xf]
  %v64 = vld [vmem:[%s1 + $0x50] sm:$0xf]
  %v65 = vld [vmem:[%s1 + $0x54] sm:$0xf]
  %v66 = vld [vmem:[%s1 + $0x58] sm:$0xf]
  %v67 = vld [vmem:[%s1 + $0x5c] sm:$0xf]
  %v68 = vld [vmem:[%s1 + $0x60] sm:$0xf]
  %v69 = vld [vmem:[%s1 + $0x64] sm:$0xf]
  %v70 = vld [vmem:[%s1 + $0x68] sm:$0xf]
  %v71 = vld [vmem:[%s1 + $0x6c] sm:$0xf]
  %v72 = vld [vmem:[%s1 + $0x70] sm:$0xf]
  %v73 = vld [vmem:[%s1 + $0x74] sm:$0xf]
  %v74 = vld [vmem:[%s1 + $0x78] sm:$0xf]
  %v75 = vld [vmem:[%s1 + $0x7c] sm:$0xf]
  %v76 = vld [vmem:[%s1 + $0x80] sm:$0xf]
  %v77 = vld [vmem:[%s1 + $0x84] sm:$0xf]
  %v78 = vld [vmem:[%s1 + $0x88] sm:$0xf]
  %v79 = vld [vmem:[%s1 + $0x8c] sm:$0xf]
  %v80 = vld [vmem:[%s1 + $0x90] sm:$0xf]
  %v81 = vld [vmem:[%s1 + $0x94] sm:$0xf]
  %v82 = vld [vmem:[%s1 + $0x98] sm:$0xf]
  %v83 = vld [vmem:[%s1 + $0x9c] sm:$0xf]
  %v84 = vld [vmem:[%s1 + $0xa0] sm:$0xf]
  %v85 = vld [vmem:[%s1 + $0xa4] sm:$0xf]
  %v86 = vld [vmem:[%s1 + $0xa8] sm:$0xf]
  %v87 = vld [vmem:[%s1 + $0xac] sm:$0xf]
  %v88 = vld [vmem:[%s1 + $0xb0] sm:$0xf]
  %v89 = vld [vmem:[%s1 + $0xb4] sm:$0xf]
  %v90 = vld [vmem:[%s1 + $0xb8] sm:$0xf]
  %v91 = vld [vmem:[%s1 + $0xbc] sm:$0xf]
  %v92 = vld [vmem:[%s1 + $0xc0] sm:$0xf]
  %v93 = vld [vmem:[%s1 + $0xc4] sm:$0xf]
  %v94 = vld [vmem:[%s1 + $0xc8] sm:$0xf]
  %v95 = vld [vmem:[%s1 + $0xcc] sm:$0xf]
  %v96 = vld [vmem:[%s1 + $0xd0] sm:$0xf]
  %v97 = vld [vmem:[%s1 + $0xd4] sm:$0xf]
  %v98 = vld [vmem:[%s1 + $0xd8] sm:$0xf]
  %v99 = vld [vmem:[%s1 + $0xdc] sm:$0xf]
  %v100 = vld [vmem:[%s1 + $0xe0] sm:$0xf]
  %v101 = vld [vmem:[%s1 + $0xe4] sm:$0xf]
  %v102 = vld [vmem:[%s1 + $0xe8] sm:$0xf]
  %v103 = vld [vmem:[%s1 + $0xec] sm:$0xf]
  %v104 = vld [vmem:[%s1 + $0xf0] sm:$0xf]
  %v105 = vld [vmem:[%s1 + $0xf4] sm:$0xf]
  %v106 = vld [vmem:[%s1 + $0xf8] sm:$0xf]
  %v107 = vld [vmem:[%s1 + $0xfc] sm:$0xf]
  %v116 = vunpack.c.l.b16 %v36
  %v117 = vunpack.c.h.b16 %v36
  %v118 = vunpack.c.l.b16 %v37
  %v119 = vunpack.c.h.b16 %v37
  %v120 = vunpack.c.l.b16 %v38
  %v121 = vunpack.c.h.b16 %v38
  %v122 = vunpack.c.l.b16 %v39
  %v123 = vunpack.c.h.b16 %v39
  %v124 = vunpack.c.l.b16 %v40
  %v125 = vunpack.c.h.b16 %v40
  %v126 = vunpack.c.l.b16 %v41
  %v127 = vunpack.c.h.b16 %v41
  %v128 = vunpack.c.l.b16 %v42
  %v129 = vunpack.c.h.b16 %v42
  %v130 = vunpack.c.l.b16 %v43
  %v131 = vunpack.c.h.b16 %v43
  %v132 = vpack.c.b16 %v120, %v116
  %v133 = vpack.c.b16 %v121, %v117
  %v134 = vpack.c.b16 %v122, %v118
  %v135 = vpack.c.b16 %v123, %v119
  %v136 = vpack.c.b16 %v128, %v124
  %v137 = vpack.c.b16 %v129, %v125
  %v138 = vpack.c.b16 %v130, %v126
  %v139 = vpack.c.b16 %v131, %v127
  %v212 = vunpack.c.l.b16 %v44
  %v213 = vunpack.c.l.b16 %v45
  %v214 = vunpack.c.l.b16 %v46
  %v215 = vunpack.c.l.b16 %v47
  %v216 = vunpack.c.l.b16 %v48
  %v217 = vunpack.c.l.b16 %v49
  %v218 = vunpack.c.l.b16 %v50
  %v219 = vunpack.c.l.b16 %v51
  %v220 = vunpack.c.l.b16 %v52
  %v221 = vunpack.c.l.b16 %v53
  %v222 = vunpack.c.l.b16 %v54
  %v223 = vunpack.c.l.b16 %v55
  %v224 = vunpack.c.l.b16 %v56
  %v225 = vunpack.c.l.b16 %v57
  %v226 = vunpack.c.l.b16 %v58
  %v227 = vunpack.c.l.b16 %v59
  %v228 = vunpack.c.l.b16 %v60
  %v229 = vunpack.c.l.b16 %v61
  %v230 = vunpack.c.l.b16 %v62
  %v231 = vunpack.c.l.b16 %v63
  %v232 = vunpack.c.l.b16 %v64
  %v233 = vunpack.c.l.b16 %v65
  %v234 = vunpack.c.l.b16 %v66
  %v235 = vunpack.c.l.b16 %v67
  %v236 = vunpack.c.l.b16 %v68
  %v237 = vunpack.c.l.b16 %v69
  %v238 = vunpack.c.l.b16 %v70
  %v239 = vunpack.c.l.b16 %v71
  %v240 = vunpack.c.l.b16 %v72
  %v241 = vunpack.c.l.b16 %v73
  %v242 = vunpack.c.l.b16 %v74
  %v243 = vunpack.c.l.b16 %v75
  %v244 = vunpack.c.l.b16 %v76
  %v245 = vunpack.c.l.b16 %v77
  %v246 = vunpack.c.l.b16 %v78
  %v247 = vunpack.c.l.b16 %v79
  %v248 = vunpack.c.l.b16 %v80
  %v249 = vunpack.c.l.b16 %v81
  %v250 = vunpack.c.l.b16 %v82
  %v251 = vunpack.c.l.b16 %v83
  %v252 = vunpack.c.l.b16 %v84
  %v253 = vunpack.c.l.b16 %v85
  %v254 = vunpack.c.l.b16 %v86
  %v255 = vunpack.c.l.b16 %v87
  %v256 = vunpack.c.l.b16 %v88
  %v257 = vunpack.c.l.b16 %v89
  %v258 = vunpack.c.l.b16 %v90
  %v259 = vunpack.c.l.b16 %v91
  %v260 = vunpack.c.l.b16 %v92
  %v261 = vunpack.c.l.b16 %v93
  %v262 = vunpack.c.l.b16 %v94
  %v263 = vunpack.c.l.b16 %v95
  %v264 = vunpack.c.l.b16 %v96
  %v265 = vunpack.c.l.b16 %v97
  %v266 = vunpack.c.l.b16 %v98
  %v267 = vunpack.c.l.b16 %v99
  %v268 = vunpack.c.l.b16 %v100
  %v269 = vunpack.c.l.b16 %v101
  %v270 = vunpack.c.l.b16 %v102
  %v271 = vunpack.c.l.b16 %v103
  %v272 = vunpack.c.l.b16 %v104
  %v273 = vunpack.c.l.b16 %v105
  %v274 = vunpack.c.l.b16 %v106
  %v275 = vunpack.c.l.b16 %v107
  %v276 = vpack.c.b16 %v213, %v212
  %v277 = vpack.c.b16 %v215, %v214
  %v278 = vpack.c.b16 %v217, %v216
  %v279 = vpack.c.b16 %v219, %v218
  %v280 = vpack.c.b16 %v221, %v220
  %v281 = vpack.c.b16 %v223, %v222
  %v282 = vpack.c.b16 %v225, %v224
  %v283 = vpack.c.b16 %v227, %v226
  %v284 = vpack.c.b16 %v229, %v228
  %v285 = vpack.c.b16 %v231, %v230
  %v286 = vpack.c.b16 %v233, %v232
  %v287 = vpack.c.b16 %v235, %v234
  %v288 = vpack.c.b16 %v237, %v236
  %v289 = vpack.c.b16 %v239, %v238
  %v290 = vpack.c.b16 %v241, %v240
  %v291 = vpack.c.b16 %v243, %v242
  %v292 = vpack.c.b16 %v245, %v244
  %v293 = vpack.c.b16 %v247, %v246
  %v294 = vpack.c.b16 %v249, %v248
  %v295 = vpack.c.b16 %v251, %v250
  %v296 = vpack.c.b16 %v253, %v252
  %v297 = vpack.c.b16 %v255, %v254
  %v298 = vpack.c.b16 %v257, %v256
  %v299 = vpack.c.b16 %v259, %v258
  %v300 = vpack.c.b16 %v261, %v260
  %v301 = vpack.c.b16 %v263, %v262
  %v302 = vpack.c.b16 %v265, %v264
  %v303 = vpack.c.b16 %v267, %v266
  %v304 = vpack.c.b16 %v269, %v268
  %v305 = vpack.c.b16 %v271, %v270
  %v306 = vpack.c.b16 %v273, %v272
  %v307 = vpack.c.b16 %v275, %v274
  %340 = vmatprep.subr.bf16.mxu0 0
  %341 = vmatpush1.bf16.msra.mxu0 %v283
  %342 = vmatprep.subr.bf16.mxu0 0
  %343 = vmatpush1.bf16.msra.mxu0 %v282
  %344 = vmatprep.subr.bf16.mxu0 0
  %345 = vmatpush1.bf16.msra.mxu0 %v281
  %346 = vmatprep.subr.bf16.mxu0 0
  %347 = vmatpush1.bf16.msra.mxu0 %v280
  %348 = vmatprep.subr.bf16.mxu0 0
  %349 = vmatpush1.bf16.msra.mxu0 %v279
  %350 = vmatprep.subr.bf16.mxu0 0
  %351 = vmatpush1.bf16.msra.mxu0 %v278
  %352 = vmatprep.subr.bf16.mxu0 0
  %353 = vmatpush1.bf16.msra.mxu0 %v277
  %354 = vmatprep.subr.bf16.mxu0 0
  %355 = vmatpush1.bf16.msra.mxu0 %v276
  %356 = vmatprep.subr.bf16.mxu0 0
  %357 = vmatpush2.bf16.msra.mxu0 %v291
  %358 = vmatprep.subr.bf16.mxu0 0
  %359 = vmatpush2.bf16.msra.mxu0 %v290
  %360 = vmatprep.subr.bf16.mxu0 0
  %361 = vmatpush2.bf16.msra.mxu0 %v289
  %362 = vmatprep.subr.bf16.mxu0 0
  %363 = vmatpush2.bf16.msra.mxu0 %v288
  %364 = vmatprep.subr.bf16.mxu0 0
  %365 = vmatpush2.bf16.msra.mxu0 %v287
  %366 = vmatprep.subr.bf16.mxu0 0
  %367 = vmatpush2.bf16.msra.mxu0 %v286
  %368 = vmatprep.subr.bf16.mxu0 0
  %369 = vmatpush2.bf16.msra.mxu0 %v285
  %370 = vmatprep.subr.bf16.mxu0 0
  %371 = vmatpush2.bf16.msra.mxu0 %v284
  %372 = vmatprep.mubr.bf16.mxu0 %v133
  %373 = vmatmul.mubr.bf16.gmra.mxu0 %v132
  %v374 = vpop.f32.mrf.mxu0
  %v375 = vadd.f32 0.0, %v374
  %v376 = vpop.f32.mrf.mxu0
  %v377 = vpop.f32.mrf.mxu0
  %v378 = vadd.f32 0.0, %v377
  %v379 = vpop.f32.mrf.mxu0
  %380 = vmatprep.mubr.bf16.mxu0 %v137
  %381 = vmatmul.mubr.bf16.gmra.mxu0 %v136
  %v382 = vpop.f32.mrf.mxu0
  %v383 = vadd.f32 0.0, %v382
  %v384 = vpop.f32.mrf.mxu0
  %v385 = vpop.f32.mrf.mxu0
  %v386 = vadd.f32 0.0, %v385
  %v387 = vpop.f32.mrf.mxu0
  %388 = vdwg.mxu0
  %389 = vmatprep.subr.bf16.mxu0 0
  %390 = vmatpush1.bf16.msra.mxu0 %v299
  %391 = vmatprep.subr.bf16.mxu0 0
  %392 = vmatpush1.bf16.msra.mxu0 %v298
  %393 = vmatprep.subr.bf16.mxu0 0
  %394 = vmatpush1.bf16.msra.mxu0 %v297
  %395 = vmatprep.subr.bf16.mxu0 0
  %396 = vmatpush1.bf16.msra.mxu0 %v296
  %397 = vmatprep.subr.bf16.mxu0 0
  %398 = vmatpush1.bf16.msra.mxu0 %v295
  %399 = vmatprep.subr.bf16.mxu0 0
  %400 = vmatpush1.bf16.msra.mxu0 %v294
  %401 = vmatprep.subr.bf16.mxu0 0
  %402 = vmatpush1.bf16.msra.mxu0 %v293
  %403 = vmatprep.subr.bf16.mxu0 0
  %404 = vmatpush1.bf16.msra.mxu0 %v292
  %405 = vmatprep.subr.bf16.mxu0 0
  %406 = vmatpush2.bf16.msra.mxu0 %v307
  %407 = vmatprep.subr.bf16.mxu0 0
  %408 = vmatpush2.bf16.msra.mxu0 %v306
  %409 = vmatprep.subr.bf16.mxu0 0
  %410 = vmatpush2.bf16.msra.mxu0 %v305
  %411 = vmatprep.subr.bf16.mxu0 0
  %412 = vmatpush2.bf16.msra.mxu0 %v304
  %413 = vmatprep.subr.bf16.mxu0 0
  %414 = vmatpush2.bf16.msra.mxu0 %v303
  %415 = vmatprep.subr.bf16.mxu0 0
  %416 = vmatpush2.bf16.msra.mxu0 %v302
  %417 = vmatprep.subr.bf16.mxu0 0
  %418 = vmatpush2.bf16.msra.mxu0 %v301
  %419 = vmatprep.subr.bf16.mxu0 0
  %420 = vmatpush2.bf16.msra.mxu0 %v300
  %421 = vmatprep.mubr.bf16.mxu0 %v135
  %422 = vmatmul.mubr.bf16.gmra.mxu0 %v134
  %v423 = vpop.f32.mrf.mxu0
  %v424 = vadd.f32 %v375, %v423
  %v425 = vpop.f32.mrf.mxu0
  %v426 = vpop.f32.mrf.mxu0
  %v427 = vadd.f32 %v378, %v426
  %v428 = vpop.f32.mrf.mxu0
  %429 = vmatprep.mubr.bf16.mxu0 %v139
  %430 = vmatmul.mubr.bf16.gmra.mxu0 %v138
  %v431 = vpop.f32.mrf.mxu0
  %v432 = vadd.f32 %v383, %v431
  %v433 = vpop.f32.mrf.mxu0
  %v434 = vpop.f32.mrf.mxu0
  %v435 = vadd.f32 %v386, %v434
  %v436 = vpop.f32.mrf.mxu0
  %437 = vdwg.mxu0
  %v438 = vadd.f32 %v32, %v424
  %v439 = vadd.f32 %v33, %v427
  %v440 = vadd.f32 %v34, %v432
  %v441 = vadd.f32 %v35, %v435
  %442 = vst [vmem:[#allocation2] sm:$0xff] %v438
  %443 = vst [vmem:[#allocation2 + $0x8] sm:$0xff] %v439
  %444 = vst [vmem:[#allocation2 + $0x10] sm:$0xff] %v440
  %445 = vst [vmem:[#allocation2 + $0x18] sm:$0xff] %v441
  // Predicated region
  $region30: #{toxi_reg_forward.10} parent=0 // pred_check
    %p446 = pneg %p24
  $region31: #{toxi_reg_forward.10} parent=0 // pred_check_branch
    %448 = sbr.rel (%p446) target = $region33
  $region32: #{toxi_reg_forward.10} parent=0 // pred_region
    %v449 = vld [vmem:[#allocation2] sm:$0xff]
    %v450 = vld [vmem:[#allocation2 + $0x8] sm:$0xff]
    %v451 = vld [vmem:[#allocation2 + $0x10] sm:$0xff]
    %v452 = vld [vmem:[#allocation2 + $0x18] sm:$0xff]
    %v453 = vld [vmem:[%s2] sm:$0x1]
    %v454 = vunpack.c.l.bf16 %v453
    %v455 = vlaneseq
    %v456 = vshrl.u32 %v455, 7
    %v457 = vsub.s32 0, %v456
    %v458 = vrot.slane %v454, %v457
    %v459 = vadd.f32 %v449, %v458
    %v460 = vadd.f32 %v450, %v458
    %v461 = vadd.f32 %v451, %v458
    %v462 = vadd.f32 %v452, %v458
    %v463 = vld [vmem:[%s3] sm:$0xf]
    %v464 = vld [vmem:[%s3 + $0x4] sm:$0xf]
    %v465 = vld [vmem:[%s3 + $0x8] sm:$0xf]
    %v466 = vld [vmem:[%s3 + $0xc] sm:$0xf]
    %v467 = vunpack.c.l.bf16 %v463
    %v468 = vunpack.c.l.bf16 %v464
    %v469 = vunpack.c.l.bf16 %v465
    %v470 = vunpack.c.l.bf16 %v466
    %v471 = vadd.f32 %v459, %v467
    %v472 = vadd.f32 %v460, %v468
    %v473 = vadd.f32 %v461, %v469
    %v474 = vadd.f32 %v462, %v470
    %475 = vadd.xlane.f32.xlu0 %v471
    %v476 = vpop.xlane.xlu0 %475
    %477 = vadd.xlane.f32.xlu0 %v472
    %v478 = vpop.xlane.xlu0 %477
    %479 = vadd.xlane.f32.xlu0 %v473
    %v480 = vpop.xlane.xlu0 %479
    %481 = vadd.xlane.f32.xlu0 %v474
    %v482 = vpop.xlane.xlu0 %481
    %v483 = vrcp.pop 128.0
    %v484 = vmul.f32 %v476, %v483
    %v485 = vmul.f32 %v478, %v483
    %v486 = vmul.f32 %v480, %v483
    %v487 = vmul.f32 %v482, %v483
    %v488 = vsub.f32 %v471, %v484
    %v489 = vsub.f32 %v472, %v485
    %v490 = vsub.f32 %v473, %v486
    %v491 = vsub.f32 %v474, %v487
    %v492 = vmul.f32 %v488, %v488
    %v493 = vmul.f32 %v489, %v489
    %v494 = vmul.f32 %v490, %v490
    %v495 = vmul.f32 %v491, %v491
    %496 = vadd.xlane.f32.xlu0 %v492
    %v497 = vpop.xlane.xlu0 %496
    %498 = vadd.xlane.f32.xlu0 %v493
    %v499 = vpop.xlane.xlu0 %498
    %500 = vadd.xlane.f32.xlu0 %v494
    %v501 = vpop.xlane.xlu0 %500
    %502 = vadd.xlane.f32.xlu0 %v495
    %v503 = vpop.xlane.xlu0 %502
    %v504 = vmul.f32 %v497, %v483
    %v505 = vmul.f32 %v499, %v483
    %v506 = vmul.f32 %v501, %v483
    %v507 = vmul.f32 %v503, %v483
    %v508 = vadd.f32 %v504, 1e-12
    %v509 = vadd.f32 %v505, 1e-12
    %v510 = vadd.f32 %v506, 1e-12
    %v511 = vadd.f32 %v507, 1e-12
    %v512 = vrsqrt.pop %v508
    %v513 = vrsqrt.pop %v509
    %v514 = vrsqrt.pop %v510
    %v515 = vrsqrt.pop %v511
    %v516 = vmul.f32 %v488, %v512
    %v517 = vmul.f32 %v489, %v513
    %v518 = vmul.f32 %v490, %v514
    %v519 = vmul.f32 %v491, %v515
    %v520 = vld [vmem:[%s4] sm:$0x1]
    %v521 = vunpack.c.l.bf16 %v520
    %v522 = vlaneseq
    %v523 = vshrl.u32 %v522, 7
    %v524 = vsub.s32 0, %v523
    %v525 = vrot.slane %v521, %v524
    %v526 = vmul.f32 %v516, %v525
    %v527 = vmul.f32 %v517, %v525
    %v528 = vmul.f32 %v518, %v525
    %v529 = vmul.f32 %v519, %v525
    %v530 = vld [vmem:[%s5] sm:$0x1]
    %v531 = vunpack.c.l.bf16 %v530
    %v532 = vlaneseq
    %v533 = vshrl.u32 %v532, 7
    %v534 = vsub.s32 0, %v533
    %v535 = vrot.slane %v531, %v534
    %v536 = vadd.f32 %v526, %v535
    %v537 = vadd.f32 %v527, %v535
    %v538 = vadd.f32 %v528, %v535
    %v539 = vadd.f32 %v529, %v535
    %v540 = vpack.c.bf16 %v537, %v536
    %v541 = vpack.c.bf16 %v539, %v538
    %v544 = vunpack.c.l.b16 %v540
    %v545 = vunpack.c.h.b16 %v540
    %v546 = vunpack.c.l.b16 %v541
    %v547 = vunpack.c.h.b16 %v541
    %v548 = vpack.c.b16 %v544, %v544
    %v549 = vpack.c.b16 %v545, %v545
    %v550 = vpack.c.b16 %v546, %v546
    %v551 = vpack.c.b16 %v547, %v547
    %556 = vst [vmem:[%s6] sm:$0xf] %v548
    %557 = vst [vmem:[%s6 + $0x4] sm:$0xf] %v549
    %558 = vst [vmem:[%s6 + $0x8] sm:$0xf] %v550
    %559 = vst [vmem:[%s6 + $0xc] sm:$0xf] %v551
  $region33: #{toxi_reg_forward.10} parent=0 // pred_fallthru
    _
  // Predicated region
  $region34: #{toxi_reg_forward.10} parent=0 // pred_check
    _
  $region35: #{toxi_reg_forward.10} parent=0 // pred_check_branch
    %561 = sbr.rel (0) target = $region37
  $region36: #{toxi_reg_forward.10} parent=0 // pred_region
    _
  $region37: #{toxi_reg_forward.10} parent=0 // pred_fallthru
    _
  // Predicated region
  $region38: #{toxi_reg_forward.10} parent=0 // pred_check
    _
  $region39: #{toxi_reg_forward.10} parent=0 // pred_check_branch
    %563 = sbr.rel (0) target = $region41
  $region40: #{toxi_reg_forward.10} parent=0 // pred_region
    _
  $region41: #{toxi_reg_forward.10} parent=0 // pred_fallthru
    _

// kernel: toxi_reg_forward.11
$region0: #{toxi_reg_forward.11}
  #allocation0 [shape = 'u32[]', space=smem, size = 0x4, offset = 0x4, fixed_abs, tag = 'smem constant byte address 0x4 - core index']
  #allocation1 [shape = 'u32[144,128]{1,0:T(1,128)}', space=vmem, size = 0x12000, scoped, tag = 'internal scratch']
  #allocation2 [shape = 'f32[8,128]{1,0:T(8,128)}', space=vmem, size = 0x1000, scoped, tag = 'scratch operand']
  %s0 = inlined_call_operand.vmem [shape: bf16[8,256], index: 0, kind: input, shape index: {}]
  %s1 = inlined_call_operand.vmem [shape: bf16[256,128], index: 1, kind: input, shape index: {}]
  %s2 = inlined_call_operand.vmem [shape: bf16[1,128], index: 2, kind: input, shape index: {}]
  %s3 = inlined_call_operand.vmem [shape: bf16[8,128], index: 3, kind: output, shape index: {}]
  %s4 = sld [smem:[#allocation0]]
  $region30: #{toxi_reg_forward.11} parent=0
    _
  %s6 = ssub.s32 1, %s4
  %s7 = scalar_select 0, %s6, %s4
  // Predicated region
  $region2: #{toxi_reg_forward.11} parent=0 // pred_check
    _
  $region3: #{toxi_reg_forward.11} parent=0 // pred_check_branch
    %9 = sbr.rel (0) target = $region5
  $region4: #{toxi_reg_forward.11} parent=0 // pred_region
    _
  $region5: #{toxi_reg_forward.11} parent=0 // pred_fallthru
    _
  // Predicated region
  $region6: #{toxi_reg_forward.11} parent=0 // pred_check
    _
  $region7: #{toxi_reg_forward.11} parent=0 // pred_check_branch
    %11 = sbr.rel (0) target = $region9
  $region8: #{toxi_reg_forward.11} parent=0 // pred_region
    _
  $region9: #{toxi_reg_forward.11} parent=0 // pred_fallthru
    _
  // Predicated region
  $region10: #{toxi_reg_forward.11} parent=0 // pred_check
    _
  $region11: #{toxi_reg_forward.11} parent=0 // pred_check_branch
    %13 = sbr.rel (0) target = $region13
  $region12: #{toxi_reg_forward.11} parent=0 // pred_region
    _
  $region13: #{toxi_reg_forward.11} parent=0 // pred_fallthru
    _
  %p15 = scmp.eq.s32.totalorder 0, 0
  // Predicated region
  $region14: #{toxi_reg_forward.11} parent=0 // pred_check
    %p16 = pneg %p15
  $region15: #{toxi_reg_forward.11} parent=0 // pred_check_branch
    %18 = sbr.rel (%p16) target = $region17
  $region16: #{toxi_reg_forward.11} parent=0 // pred_region
    %19 = vst [vmem:[#allocation2] sm:$0xff] 0.0
  $region17: #{toxi_reg_forward.11} parent=0 // pred_fallthru
    _
  %v20 = vld [vmem:[#allocation2] sm:$0xff]
  %v21 = vld [vmem:[%s0] sm:$0xff]
  %v22 = vld [vmem:[%s1] sm:$0xf]
  %v23 = vld [vmem:[%s1 + $0x4] sm:$0xf]
  %v24 = vld [vmem:[%s1 + $0x8] sm:$0xf]
  %v25 = vld [vmem:[%s1 + $0xc] sm:$0xf]
  %v26 = vld [vmem:[%s1 + $0x10] sm:$0xf]
  %v27 = vld [vmem:[%s1 + $0x14] sm:$0xf]
  %v28 = vld [vmem:[%s1 + $0x18] sm:$0xf]
  %v29 = vld [vmem:[%s1 + $0x1c] sm:$0xf]
  %v30 = vld [vmem:[%s1 + $0x20] sm:$0xf]
  %v31 = vld [vmem:[%s1 + $0x24] sm:$0xf]
  %v32 = vld [vmem:[%s1 + $0x28] sm:$0xf]
  %v33 = vld [vmem:[%s1 + $0x2c] sm:$0xf]
  %v34 = vld [vmem:[%s1 + $0x30] sm:$0xf]
  %v35 = vld [vmem:[%s1 + $0x34] sm:$0xf]
  %v36 = vld [vmem:[%s1 + $0x38] sm:$0xf]
  %v37 = vld [vmem:[%s1 + $0x3c] sm:$0xf]
  %v38 = vld [vmem:[%s1 + $0x40] sm:$0xf]
  %v39 = vld [vmem:[%s1 + $0x44] sm:$0xf]
  %v40 = vld [vmem:[%s1 + $0x48] sm:$0xf]
  %v41 = vld [vmem:[%s1 + $0x4c] sm:$0xf]
  %v42 = vld [vmem:[%s1 + $0x50] sm:$0xf]
  %v43 = vld [vmem:[%s1 + $0x54] sm:$0xf]
  %v44 = vld [vmem:[%s1 + $0x58] sm:$0xf]
  %v45 = vld [vmem:[%s1 + $0x5c] sm:$0xf]
  %v46 = vld [vmem:[%s1 + $0x60] sm:$0xf]
  %v47 = vld [vmem:[%s1 + $0x64] sm:$0xf]
  %v48 = vld [vmem:[%s1 + $0x68] sm:$0xf]
  %v49 = vld [vmem:[%s1 + $0x6c] sm:$0xf]
  %v50 = vld [vmem:[%s1 + $0x70] sm:$0xf]
  %v51 = vld [vmem:[%s1 + $0x74] sm:$0xf]
  %v52 = vld [vmem:[%s1 + $0x78] sm:$0xf]
  %v53 = vld [vmem:[%s1 + $0x7c] sm:$0xf]
  %v55 = vunpack.c.l.b16 %v21
  %v56 = vunpack.c.h.b16 %v21
  %v57 = vpack.c.b16 %v55, %v55
  %v58 = vpack.c.b16 %v56, %v56
  %v93 = vunpack.c.l.b16 %v22
  %v94 = vunpack.c.l.b16 %v23
  %v95 = vunpack.c.l.b16 %v24
  %v96 = vunpack.c.l.b16 %v25
  %v97 = vunpack.c.l.b16 %v26
  %v98 = vunpack.c.l.b16 %v27
  %v99 = vunpack.c.l.b16 %v28
  %v100 = vunpack.c.l.b16 %v29
  %v101 = vunpack.c.l.b16 %v30
  %v102 = vunpack.c.l.b16 %v31
  %v103 = vunpack.c.l.b16 %v32
  %v104 = vunpack.c.l.b16 %v33
  %v105 = vunpack.c.l.b16 %v34
  %v106 = vunpack.c.l.b16 %v35
  %v107 = vunpack.c.l.b16 %v36
  %v108 = vunpack.c.l.b16 %v37
  %v109 = vunpack.c.l.b16 %v38
  %v110 = vunpack.c.l.b16 %v39
  %v111 = vunpack.c.l.b16 %v40
  %v112 = vunpack.c.l.b16 %v41
  %v113 = vunpack.c.l.b16 %v42
  %v114 = vunpack.c.l.b16 %v43
  %v115 = vunpack.c.l.b16 %v44
  %v116 = vunpack.c.l.b16 %v45
  %v117 = vunpack.c.l.b16 %v46
  %v118 = vunpack.c.l.b16 %v47
  %v119 = vunpack.c.l.b16 %v48
  %v120 = vunpack.c.l.b16 %v49
  %v121 = vunpack.c.l.b16 %v50
  %v122 = vunpack.c.l.b16 %v51
  %v123 = vunpack.c.l.b16 %v52
  %v124 = vunpack.c.l.b16 %v53
  %v125 = vpack.c.b16 %v94, %v93
  %v126 = vpack.c.b16 %v96, %v95
  %v127 = vpack.c.b16 %v98, %v97
  %v128 = vpack.c.b16 %v100, %v99
  %v129 = vpack.c.b16 %v102, %v101
  %v130 = vpack.c.b16 %v104, %v103
  %v131 = vpack.c.b16 %v106, %v105
  %v132 = vpack.c.b16 %v108, %v107
  %v133 = vpack.c.b16 %v110, %v109
  %v134 = vpack.c.b16 %v112, %v111
  %v135 = vpack.c.b16 %v114, %v113
  %v136 = vpack.c.b16 %v116, %v115
  %v137 = vpack.c.b16 %v118, %v117
  %v138 = vpack.c.b16 %v120, %v119
  %v139 = vpack.c.b16 %v122, %v121
  %v140 = vpack.c.b16 %v124, %v123
  %157 = vmatprep.subr.bf16.mxu0 0
  %158 = vmatpush1.bf16.msra.mxu0 %v132
  %159 = vmatprep.subr.bf16.mxu0 0
  %160 = vmatpush1.bf16.msra.mxu0 %v131
  %161 = vmatprep.subr.bf16.mxu0 0
  %162 = vmatpush1.bf16.msra.mxu0 %v130
  %163 = vmatprep.subr.bf16.mxu0 0
  %164 = vmatpush1.bf16.msra.mxu0 %v129
  %165 = vmatprep.subr.bf16.mxu0 0
  %166 = vmatpush1.bf16.msra.mxu0 %v128
  %167 = vmatprep.subr.bf16.mxu0 0
  %168 = vmatpush1.bf16.msra.mxu0 %v127
  %169 = vmatprep.subr.bf16.mxu0 0
  %170 = vmatpush1.bf16.msra.mxu0 %v126
  %171 = vmatprep.subr.bf16.mxu0 0
  %172 = vmatpush1.bf16.msra.mxu0 %v125
  %173 = vmatprep.subr.bf16.mxu0 0
  %174 = vmatpush2.bf16.msra.mxu0 %v140
  %175 = vmatprep.subr.bf16.mxu0 0
  %176 = vmatpush2.bf16.msra.mxu0 %v139
  %177 = vmatprep.subr.bf16.mxu0 0
  %178 = vmatpush2.bf16.msra.mxu0 %v138
  %179 = vmatprep.subr.bf16.mxu0 0
  %180 = vmatpush2.bf16.msra.mxu0 %v137
  %181 = vmatprep.subr.bf16.mxu0 0
  %182 = vmatpush2.bf16.msra.mxu0 %v136
  %183 = vmatprep.subr.bf16.mxu0 0
  %184 = vmatpush2.bf16.msra.mxu0 %v135
  %185 = vmatprep.subr.bf16.mxu0 0
  %186 = vmatpush2.bf16.msra.mxu0 %v134
  %187 = vmatprep.subr.bf16.mxu0 0
  %188 = vmatpush2.bf16.msra.mxu0 %v133
  %189 = vmatprep.mubr.bf16.mxu0 %v58
  %190 = vmatmul.mubr.bf16.gmra.mxu0 %v57
  %v191 = vpop.f32.mrf.mxu0
  %v192 = vadd.f32 0.0, %v191
  %v193 = vpop.f32.mrf.mxu0
  %v194 = vpop.f32.mrf.mxu0
  %v195 = vpop.f32.mrf.mxu0
  %196 = vdwg.mxu0
  %v197 = vadd.f32 %v20, %v192
  %198 = vst [vmem:[#allocation2] sm:$0xff] %v197
  // Predicated region
  $region18: #{toxi_reg_forward.11} parent=0 // pred_check
    %p199 = pneg %p15
  $region19: #{toxi_reg_forward.11} parent=0 // pred_check_branch
    %201 = sbr.rel (%p199) target = $region21
  $region20: #{toxi_reg_forward.11} parent=0 // pred_region
    %v202 = vld [vmem:[#allocation2] sm:$0xff]
    %v203 = vld [vmem:[%s2] sm:$0x1]
    %v204 = vunpack.c.l.bf16 %v203
    %v205 = vlaneseq
    %v206 = vshrl.u32 %v205, 7
    %v207 = vsub.s32 0, %v206
    %v208 = vrot.slane %v204, %v207
    %v209 = vadd.f32 %v202, %v208
    %v210 = vmax.f32 %v209, 0.0
    %v211 = vpack.c.bf16 %v210, %v210
    %212 = vst [vmem:[%s3] sm:$0xf] %v211
  $region21: #{toxi_reg_forward.11} parent=0 // pred_fallthru
    _
  // Predicated region
  $region22: #{toxi_reg_forward.11} parent=0 // pred_check
    _
  $region23: #{toxi_reg_forward.11} parent=0 // pred_check_branch
    %214 = sbr.rel (0) target = $region25
  $region24: #{toxi_reg_forward.11} parent=0 // pred_region
    _
  $region25: #{toxi_reg_forward.11} parent=0 // pred_fallthru
    _
  // Predicated region
  $region26: #{toxi_reg_forward.11} parent=0 // pred_check
    _
  $region27: #{toxi_reg_forward.11} parent=0 // pred_check_branch
    %216 = sbr.rel (0) target = $region29
  $region28: #{toxi_reg_forward.11} parent=0 // pred_region
    _
  $region29: #{toxi_reg_forward.11} parent=0 // pred_fallthru
    _

</llo_original>
